<compile_context>
chip_gen: v7x
topology: tpu7x:2x2x1
jax: 0.10.0
libtpu: 0.0.40
codegen_flags: <defaults>
</compile_context>

<pallas_src>
import functools

import jax
import jax.numpy as jnp
from jax.experimental import pallas as pl
from jax.experimental.pallas import tpu as pltpu

LANE = 128


def _round_up(n, m):
    return ((n + m - 1) // m) * m


# ------------------------------------------------------------- conv3x3 + ReLU (+pool)
def conv3x3_kernel(x_ref, w_ref, b_ref, o_ref, xp_ref, *, pool):
    # x_ref : (1, H, W, C)      bf16 (one batch element, channels padded to 128 lanes)
    # w_ref : (3, 3, C, Cout)   bf16
    # b_ref : (1, Cout)         f32
    # o_ref : (1, Ho, Wo, Cout) bf16  (Ho,Wo = H//2,W//2 if pool else H,W)
    # xp_ref: VMEM scratch (H+2, W+2, C) bf16 -- spatially zero-padded copy of x
    H, W, C = x_ref.shape[1], x_ref.shape[2], x_ref.shape[3]
    Cout = o_ref.shape[3]

    # In-kernel zero padding (avoids an extra HBM pass from jnp.pad in the wrapper).
    xp_ref[...] = jnp.zeros_like(xp_ref)
    xp_ref[1:H + 1, 1:W + 1, :] = x_ref[0]

    acc = jnp.zeros((H * W, Cout), jnp.float32)
    for kh in range(3):
        for kw in range(3):
            patch = xp_ref[kh:kh + H, kw:kw + W, :]        # (H, W, C)
            patch2d = patch.reshape(H * W, C)              # lane dim (128) unchanged
            acc = acc + jnp.dot(patch2d, w_ref[kh, kw],
                                preferred_element_type=jnp.float32)

    acc = jnp.maximum(acc + b_ref[...], 0.0)               # bias + fused ReLU (f32)

    if pool:
        # Fused 2x2 max-pool epilogue: cheap VPU maxima on data already in registers.
        a = acc.reshape(H // 2, 2, W // 2, 2, Cout)
        a = jnp.maximum(a[:, 0], a[:, 1])                  # pool over H pairs
        a = jnp.maximum(a[:, :, 0], a[:, :, 1])            # pool over W pairs
        o_ref[0] = a.astype(o_ref.dtype)                   # (H//2, W//2, Cout)
    else:
        o_ref[0] = acc.reshape(H, W, Cout).astype(o_ref.dtype)


def conv3x3_relu_pool(x, w, b, pool):
    """3x3 conv (stride 1, pad 1) + ReLU, optionally fused 2x2 max-pool.

    x: (B, H, W, C) bf16, w: (3, 3, C, Cout) bf16, b: (1, Cout) f32.
    Returns (B, Ho, Wo, Cout) bf16.
    """
    B, H, W, C = x.shape
    Cout = w.shape[-1]
    Ho, Wo = (H // 2, W // 2) if pool else (H, W)
    return pl.pallas_call(
        functools.partial(conv3x3_kernel, pool=pool),
        out_shape=jax.ShapeDtypeStruct((B, Ho, Wo, Cout), jnp.bfloat16),
        grid=(B,),
        in_specs=[
            pl.BlockSpec((1, H, W, C), lambda i: (i, 0, 0, 0)),
            pl.BlockSpec((3, 3, C, Cout), lambda i: (0, 0, 0, 0)),
            pl.BlockSpec((1, Cout), lambda i: (0, 0)),
        ],
        out_specs=pl.BlockSpec((1, Ho, Wo, Cout), lambda i: (i, 0, 0, 0)),
        scratch_shapes=[pltpu.VMEM((H + 2, W + 2, C), jnp.bfloat16)],
        compiler_params=pltpu.CompilerParams(dimension_semantics=("parallel",)),
    )(x, w, b)


# ------------------------------------------------------------------ linear (+ReLU)
def linear_kernel(x_ref, w_ref, b_ref, o_ref, *, apply_relu):
    y = jnp.dot(x_ref[...], w_ref[...], preferred_element_type=jnp.float32)
    y = y + b_ref[...]
    if apply_relu:
        y = jnp.maximum(y, 0.0)
    o_ref[...] = y.astype(o_ref.dtype)


def linear(x, w, b, apply_relu, out_dtype):
    """y = x @ w + b (optionally fused ReLU), tiled over 128-wide output columns."""
    B, Din = x.shape
    Dout = w.shape[1]
    TN = LANE                                 # Dout is padded to a multiple of 128
    return pl.pallas_call(
        functools.partial(linear_kernel, apply_relu=apply_relu),
        out_shape=jax.ShapeDtypeStruct((B, Dout), out_dtype),
        grid=(Dout // TN,),
        in_specs=[
            pl.BlockSpec((B, Din), lambda j: (0, 0)),
            pl.BlockSpec((Din, TN), lambda j: (0, j)),
            pl.BlockSpec((1, TN), lambda j: (0, j)),
        ],
        out_specs=pl.BlockSpec((B, TN), lambda j: (0, j)),
        compiler_params=pltpu.CompilerParams(dimension_semantics=("parallel",)),
    )(x, w, b)


# ------------------------------------------------------------------ model
class ConvClassifierPallas:
    def __init__(self, in_size, out_classes, filters, pool_every, hidden_dims, key):
        self.in_size = tuple(in_size)
        self.out_classes = out_classes
        self.filters = list(filters)
        self.pool_every = pool_every
        self.hidden_dims = list(hidden_dims)

        in_channels, in_h, in_w = self.in_size

        # Replicate the pool-placement logic of the PyTorch feature extractor exactly.
        pools_after = []
        pool = 0
        for _ in range(len(self.filters) - 1):
            if pool == pool_every - 1:
                pools_after.append(True)
                pool = 0
            else:
                pools_after.append(False)
                pool += 1
        pools_after.append(pool == pool_every - 1)
        self.pools_after = pools_after

        # Channel sizes, padded to 128 lanes. Padded in/out channels have zero weights
        # and zero bias, so they stay exactly zero through conv/ReLU/pool.
        c_real = [in_channels] + self.filters
        c_pad = [_round_up(c, LANE) for c in c_real]
        self.cin_pad = c_pad[0]

        self.conv_params = []
        for i in range(len(self.filters)):
            key, kw_, kb_ = jax.random.split(key, 3)
            fan_in = 9.0 * c_real[i]
            w = jax.random.normal(kw_, (3, 3, c_real[i], c_real[i + 1]),
                                  jnp.float32) / jnp.sqrt(fan_in)
            b = 0.01 * jax.random.normal(kb_, (1, c_real[i + 1]), jnp.float32)
            w_p = jnp.zeros((3, 3, c_pad[i], c_pad[i + 1]), jnp.float32)
            w_p = w_p.at[:, :, :c_real[i], :c_real[i + 1]].set(w)
            b_p = jnp.zeros((1, c_pad[i + 1]), jnp.float32).at[:, :c_real[i + 1]].set(b)
            self.conv_params.append((w_p.astype(jnp.bfloat16), b_p))

        # Classifier dims (same formula as the PyTorch module; assumes
        # len(filters) % pool_every == 0, like the reference).
        dim_h, dim_w = in_h, in_w
        for _ in range(len(self.filters) // pool_every):
            dim_h //= 2
            dim_w //= 2
        c_last_real, c_last_pad = c_real[-1], c_pad[-1]
        flat_real = dim_h * dim_w * c_last_real
        dims_real = [flat_real] + self.hidden_dims + [out_classes]
        dims_pad = ([dim_h * dim_w * c_last_pad]
                    + [_round_up(d, LANE) for d in self.hidden_dims]
                    + [_round_up(out_classes, LANE)])

        self.fc_params = []
        for i in range(len(dims_real) - 1):
            key, kw_, kb_ = jax.random.split(key, 3)
            w = jax.random.normal(kw_, (dims_real[i], dims_real[i + 1]),
                                  jnp.float32) / jnp.sqrt(float(dims_real[i]))
            b = 0.01 * jax.random.normal(kb_, (1, dims_real[i + 1]), jnp.float32)
            if i == 0:
                # Fold the NCHW flatten into the weight: reorder rows from PyTorch's
                # (C, H, W) view order to the conv output's natural (H, W, Cpad) order
                # and zero-fill rows for the padded channels.  One-time init cost,
                # identical numerics, no runtime transpose.
                w = w.reshape(c_last_real, dim_h, dim_w, dims_real[i + 1])
                w = jnp.transpose(w, (1, 2, 0, 3))
                w = jnp.pad(w, ((0, 0), (0, 0), (0, c_last_pad - c_last_real), (0, 0)))
                w = w.reshape(dim_h * dim_w * c_last_pad, dims_real[i + 1])
            else:
                w = jnp.pad(w, ((0, dims_pad[i] - dims_real[i]), (0, 0)))
            w = jnp.pad(w, ((0, 0), (0, dims_pad[i + 1] - dims_real[i + 1])))
            b = jnp.pad(b, ((0, 0), (0, dims_pad[i + 1] - dims_real[i + 1])))
            self.fc_params.append((w.astype(jnp.bfloat16), b))

    def __call__(self, x_nchw):
        B = x_nchw.shape[0]
        # NCHW (PyTorch) -> NHWC, zero-pad channels to 128 lanes, cast to bf16.
        x = jnp.transpose(x_nchw, (0, 2, 3, 1)).astype(jnp.bfloat16)
        cin = x.shape[-1]
        if cin < self.cin_pad:
            x = jnp.pad(x, ((0, 0), (0, 0), (0, 0), (0, self.cin_pad - cin)))

        for i, (w, b) in enumerate(self.conv_params):
            x = conv3x3_relu_pool(x, w, b, pool=self.pools_after[i])

        # Flatten in (H, W, Cpad) order -- FC0 weight rows were pre-permuted to match.
        h = x.reshape(B, -1)
        n_fc = len(self.fc_params)
        for i, (w, b) in enumerate(self.fc_params):
            last = (i == n_fc - 1)
            h = linear(h, w, b, apply_relu=not last,
                       out_dtype=jnp.float32 if last else jnp.bfloat16)
        return h[:, :self.out_classes]


# ------------------------------------------------------------------ main
if __name__ == "__main__":
    key = jax.random.PRNGKey(0)
    key_params, key_x = jax.random.split(key)

    in_size = (4, 16, 16)        # (C, H, W)
    model = ConvClassifierPallas(
        in_size=in_size,
        out_classes=10,
        filters=[8, 8],
        pool_every=2,
        hidden_dims=[32],
        key=key_params,
    )

    x = jax.random.normal(key_x, (2,) + in_size, jnp.float32)   # NCHW input
    out = model(x)
    out = jax.block_until_ready(out)
    assert out.shape == (2, 10), out.shape
    assert jnp.all(jnp.isfinite(out))
    print("KERNEL_OK")
</pallas_src>

<mosaic_0001>
module attributes {stable_mosaic.version = 11 : i64} {
  func.func @conv3x3_kernel(%arg0: i32, %arg1: memref<1x16x16x128xbf16, #tpu.memory_space<vmem>>, %arg2: memref<3x3x128x128xbf16, #tpu.memory_space<vmem>>, %arg3: memref<1x128xf32, #tpu.memory_space<vmem>>, %arg4: memref<1x16x16x128xbf16, #tpu.memory_space<vmem>>, %arg5: memref<18x18x128xbf16, #tpu.memory_space<vmem>>) attributes {dimension_semantics = [#tpu.dimension_semantics<parallel>], iteration_bounds = array<i64: 2>, scalar_prefetch = 0 : i64, scratch_operands = 1 : i64, tpu.core_type = #tpu.core_type<tc>, window_params = [{transform_indices = @transform_0, window_bounds = array<i64: 1, 16, 16, 128>}, {pipeline_mode = #tpu.pipeline_mode<synchronous>, transform_indices = @transform_1, window_bounds = array<i64: 3, 3, 128, 128>}, {pipeline_mode = #tpu.pipeline_mode<synchronous>, transform_indices = @transform_2, window_bounds = array<i64: 1, 128>}, {transform_indices = @transform_3, window_bounds = array<i64: 1, 16, 16, 128>}]} {
    %cst = arith.constant 0.000000e+00 : bf16
    %0 = vector.broadcast %cst : bf16 to vector<18x18x128xbf16>
    %c0 = arith.constant 0 : index
    %c0_0 = arith.constant 0 : index
    %c0_1 = arith.constant 0 : index
    %1 = vector.load %arg5[%c0, %c0_0, %c0_1] : memref<18x18x128xbf16, #tpu.memory_space<vmem>>, vector<18x18x128xbf16>
    tpu.vector_store %arg5[%c0, %c0_0, %c0_1], %0 {strides = array<i32>} : memref<18x18x128xbf16, #tpu.memory_space<vmem>>, vector<18x18x128xbf16>,
    %c0_2 = arith.constant 0 : index
    %c0_3 = arith.constant 0 : index
    %c0_4 = arith.constant 0 : index
    %c0_5 = arith.constant 0 : index
    %2 = vector.load %arg1[%c0_2, %c0_3, %c0_4, %c0_5] : memref<1x16x16x128xbf16, #tpu.memory_space<vmem>>, vector<1x16x16x128xbf16>
    %3 = vector.shape_cast %2 : vector<1x16x16x128xbf16> to vector<16x16x128xbf16>
    %c1 = arith.constant 1 : index
    %c1_6 = arith.constant 1 : index
    %c0_7 = arith.constant 0 : index
    %4 = vector.load %arg5[%c1, %c1_6, %c0_7] : memref<18x18x128xbf16, #tpu.memory_space<vmem>>, vector<16x16x128xbf16>
    tpu.vector_store %arg5[%c1, %c1_6, %c0_7], %3 {strides = array<i32>} : memref<18x18x128xbf16, #tpu.memory_space<vmem>>, vector<16x16x128xbf16>,
    %cst_8 = arith.constant 0.000000e+00 : f32
    %5 = vector.broadcast %cst_8 : f32 to vector<256x128xf32>
    %c0_9 = arith.constant 0 : index
    %c0_10 = arith.constant 0 : index
    %c0_11 = arith.constant 0 : index
    %6 = vector.load %arg5[%c0_9, %c0_10, %c0_11] : memref<18x18x128xbf16, #tpu.memory_space<vmem>>, vector<16x16x128xbf16>
    %7 = vector.shape_cast %6 : vector<16x16x128xbf16> to vector<256x128xbf16>
    %c0_12 = arith.constant 0 : index
    %c0_13 = arith.constant 0 : index
    %c0_14 = arith.constant 0 : index
    %c0_15 = arith.constant 0 : index
    %8 = vector.load %arg2[%c0_12, %c0_13, %c0_14, %c0_15] : memref<3x3x128x128xbf16, #tpu.memory_space<vmem>>, vector<1x1x128x128xbf16>
    %9 = vector.shape_cast %8 : vector<1x1x128x128xbf16> to vector<128x128xbf16>
    %cst_16 = arith.constant dense<0.000000e+00> : vector<256x128xf32>
    %10 = tpu.matmul %7, %9, %cst_16 {dimension_numbers = #tpu.dot_dimension_numbers<[1], [0], [0], [1], [0, 0, 1, 1], [], []>} : vector<256x128xbf16>, vector<128x128xbf16>, vector<256x128xf32> -> vector<256x128xf32>
    %11 = arith.addf %5, %10 : vector<256x128xf32>
    %c0_17 = arith.constant 0 : index
    %c1_18 = arith.constant 1 : index
    %c0_19 = arith.constant 0 : index
    %12 = vector.load %arg5[%c0_17, %c1_18, %c0_19] : memref<18x18x128xbf16, #tpu.memory_space<vmem>>, vector<16x16x128xbf16>
    %13 = vector.shape_cast %12 : vector<16x16x128xbf16> to vector<256x128xbf16>
    %c0_20 = arith.constant 0 : index
    %c1_21 = arith.constant 1 : index
    %c0_22 = arith.constant 0 : index
    %c0_23 = arith.constant 0 : index
    %14 = vector.load %arg2[%c0_20, %c1_21, %c0_22, %c0_23] : memref<3x3x128x128xbf16, #tpu.memory_space<vmem>>, vector<1x1x128x128xbf16>
    %15 = vector.shape_cast %14 : vector<1x1x128x128xbf16> to vector<128x128xbf16>
    %cst_24 = arith.constant dense<0.000000e+00> : vector<256x128xf32>
    %16 = tpu.matmul %13, %15, %cst_24 {dimension_numbers = #tpu.dot_dimension_numbers<[1], [0], [0], [1], [0, 0, 1, 1], [], []>} : vector<256x128xbf16>, vector<128x128xbf16>, vector<256x128xf32> -> vector<256x128xf32>
    %17 = arith.addf %11, %16 : vector<256x128xf32>
    %c0_25 = arith.constant 0 : index
    %c2 = arith.constant 2 : index
    %c0_26 = arith.constant 0 : index
    %18 = vector.load %arg5[%c0_25, %c2, %c0_26] : memref<18x18x128xbf16, #tpu.memory_space<vmem>>, vector<16x16x128xbf16>
    %19 = vector.shape_cast %18 : vector<16x16x128xbf16> to vector<256x128xbf16>
    %c0_27 = arith.constant 0 : index
    %c2_28 = arith.constant 2 : index
    %c0_29 = arith.constant 0 : index
    %c0_30 = arith.constant 0 : index
    %20 = vector.load %arg2[%c0_27, %c2_28, %c0_29, %c0_30] : memref<3x3x128x128xbf16, #tpu.memory_space<vmem>>, vector<1x1x128x128xbf16>
    %21 = vector.shape_cast %20 : vector<1x1x128x128xbf16> to vector<128x128xbf16>
    %cst_31 = arith.constant dense<0.000000e+00> : vector<256x128xf32>
    %22 = tpu.matmul %19, %21, %cst_31 {dimension_numbers = #tpu.dot_dimension_numbers<[1], [0], [0], [1], [0, 0, 1, 1], [], []>} : vector<256x128xbf16>, vector<128x128xbf16>, vector<256x128xf32> -> vector<256x128xf32>
    %23 = arith.addf %17, %22 : vector<256x128xf32>
    %c1_32 = arith.constant 1 : index
    %c0_33 = arith.constant 0 : index
    %c0_34 = arith.constant 0 : index
    %24 = vector.load %arg5[%c1_32, %c0_33, %c0_34] : memref<18x18x128xbf16, #tpu.memory_space<vmem>>, vector<16x16x128xbf16>
    %25 = vector.shape_cast %24 : vector<16x16x128xbf16> to vector<256x128xbf16>
    %c1_35 = arith.constant 1 : index
    %c0_36 = arith.constant 0 : index
    %c0_37 = arith.constant 0 : index
    %c0_38 = arith.constant 0 : index
    %26 = vector.load %arg2[%c1_35, %c0_36, %c0_37, %c0_38] : memref<3x3x128x128xbf16, #tpu.memory_space<vmem>>, vector<1x1x128x128xbf16>
    %27 = vector.shape_cast %26 : vector<1x1x128x128xbf16> to vector<128x128xbf16>
    %cst_39 = arith.constant dense<0.000000e+00> : vector<256x128xf32>
    %28 = tpu.matmul %25, %27, %cst_39 {dimension_numbers = #tpu.dot_dimension_numbers<[1], [0], [0], [1], [0, 0, 1, 1], [], []>} : vector<256x128xbf16>, vector<128x128xbf16>, vector<256x128xf32> -> vector<256x128xf32>
    %29 = arith.addf %23, %28 : vector<256x128xf32>
    %c1_40 = arith.constant 1 : index
    %c1_41 = arith.constant 1 : index
    %c0_42 = arith.constant 0 : index
    %30 = vector.load %arg5[%c1_40, %c1_41, %c0_42] : memref<18x18x128xbf16, #tpu.memory_space<vmem>>, vector<16x16x128xbf16>
    %31 = vector.shape_cast %30 : vector<16x16x128xbf16> to vector<256x128xbf16>
    %c1_43 = arith.constant 1 : index
    %c1_44 = arith.constant 1 : index
    %c0_45 = arith.constant 0 : index
    %c0_46 = arith.constant 0 : index
    %32 = vector.load %arg2[%c1_43, %c1_44, %c0_45, %c0_46] : memref<3x3x128x128xbf16, #tpu.memory_space<vmem>>, vector<1x1x128x128xbf16>
    %33 = vector.shape_cast %32 : vector<1x1x128x128xbf16> to vector<128x128xbf16>
    %cst_47 = arith.constant dense<0.000000e+00> : vector<256x128xf32>
    %34 = tpu.matmul %31, %33, %cst_47 {dimension_numbers = #tpu.dot_dimension_numbers<[1], [0], [0], [1], [0, 0, 1, 1], [], []>} : vector<256x128xbf16>, vector<128x128xbf16>, vector<256x128xf32> -> vector<256x128xf32>
    %35 = arith.addf %29, %34 : vector<256x128xf32>
    %c1_48 = arith.constant 1 : index
    %c2_49 = arith.constant 2 : index
    %c0_50 = arith.constant 0 : index
    %36 = vector.load %arg5[%c1_48, %c2_49, %c0_50] : memref<18x18x128xbf16, #tpu.memory_space<vmem>>, vector<16x16x128xbf16>
    %37 = vector.shape_cast %36 : vector<16x16x128xbf16> to vector<256x128xbf16>
    %c1_51 = arith.constant 1 : index
    %c2_52 = arith.constant 2 : index
    %c0_53 = arith.constant 0 : index
    %c0_54 = arith.constant 0 : index
    %38 = vector.load %arg2[%c1_51, %c2_52, %c0_53, %c0_54] : memref<3x3x128x128xbf16, #tpu.memory_space<vmem>>, vector<1x1x128x128xbf16>
    %39 = vector.shape_cast %38 : vector<1x1x128x128xbf16> to vector<128x128xbf16>
    %cst_55 = arith.constant dense<0.000000e+00> : vector<256x128xf32>
    %40 = tpu.matmul %37, %39, %cst_55 {dimension_numbers = #tpu.dot_dimension_numbers<[1], [0], [0], [1], [0, 0, 1, 1], [], []>} : vector<256x128xbf16>, vector<128x128xbf16>, vector<256x128xf32> -> vector<256x128xf32>
    %41 = arith.addf %35, %40 : vector<256x128xf32>
    %c2_56 = arith.constant 2 : index
    %c0_57 = arith.constant 0 : index
    %c0_58 = arith.constant 0 : index
    %42 = vector.load %arg5[%c2_56, %c0_57, %c0_58] : memref<18x18x128xbf16, #tpu.memory_space<vmem>>, vector<16x16x128xbf16>
    %43 = vector.shape_cast %42 : vector<16x16x128xbf16> to vector<256x128xbf16>
    %c2_59 = arith.constant 2 : index
    %c0_60 = arith.constant 0 : index
    %c0_61 = arith.constant 0 : index
    %c0_62 = arith.constant 0 : index
    %44 = vector.load %arg2[%c2_59, %c0_60, %c0_61, %c0_62] : memref<3x3x128x128xbf16, #tpu.memory_space<vmem>>, vector<1x1x128x128xbf16>
    %45 = vector.shape_cast %44 : vector<1x1x128x128xbf16> to vector<128x128xbf16>
    %cst_63 = arith.constant dense<0.000000e+00> : vector<256x128xf32>
    %46 = tpu.matmul %43, %45, %cst_63 {dimension_numbers = #tpu.dot_dimension_numbers<[1], [0], [0], [1], [0, 0, 1, 1], [], []>} : vector<256x128xbf16>, vector<128x128xbf16>, vector<256x128xf32> -> vector<256x128xf32>
    %47 = arith.addf %41, %46 : vector<256x128xf32>
    %c2_64 = arith.constant 2 : index
    %c1_65 = arith.constant 1 : index
    %c0_66 = arith.constant 0 : index
    %48 = vector.load %arg5[%c2_64, %c1_65, %c0_66] : memref<18x18x128xbf16, #tpu.memory_space<vmem>>, vector<16x16x128xbf16>
    %49 = vector.shape_cast %48 : vector<16x16x128xbf16> to vector<256x128xbf16>
    %c2_67 = arith.constant 2 : index
    %c1_68 = arith.constant 1 : index
    %c0_69 = arith.constant 0 : index
    %c0_70 = arith.constant 0 : index
    %50 = vector.load %arg2[%c2_67, %c1_68, %c0_69, %c0_70] : memref<3x3x128x128xbf16, #tpu.memory_space<vmem>>, vector<1x1x128x128xbf16>
    %51 = vector.shape_cast %50 : vector<1x1x128x128xbf16> to vector<128x128xbf16>
    %cst_71 = arith.constant dense<0.000000e+00> : vector<256x128xf32>
    %52 = tpu.matmul %49, %51, %cst_71 {dimension_numbers = #tpu.dot_dimension_numbers<[1], [0], [0], [1], [0, 0, 1, 1], [], []>} : vector<256x128xbf16>, vector<128x128xbf16>, vector<256x128xf32> -> vector<256x128xf32>
    %53 = arith.addf %47, %52 : vector<256x128xf32>
    %c2_72 = arith.constant 2 : index
    %c2_73 = arith.constant 2 : index
    %c0_74 = arith.constant 0 : index
    %54 = vector.load %arg5[%c2_72, %c2_73, %c0_74] : memref<18x18x128xbf16, #tpu.memory_space<vmem>>, vector<16x16x128xbf16>
    %55 = vector.shape_cast %54 : vector<16x16x128xbf16> to vector<256x128xbf16>
    %c2_75 = arith.constant 2 : index
    %c2_76 = arith.constant 2 : index
    %c0_77 = arith.constant 0 : index
    %c0_78 = arith.constant 0 : index
    %56 = vector.load %arg2[%c2_75, %c2_76, %c0_77, %c0_78] : memref<3x3x128x128xbf16, #tpu.memory_space<vmem>>, vector<1x1x128x128xbf16>
    %57 = vector.shape_cast %56 : vector<1x1x128x128xbf16> to vector<128x128xbf16>
    %cst_79 = arith.constant dense<0.000000e+00> : vector<256x128xf32>
    %58 = tpu.matmul %55, %57, %cst_79 {dimension_numbers = #tpu.dot_dimension_numbers<[1], [0], [0], [1], [0, 0, 1, 1], [], []>} : vector<256x128xbf16>, vector<128x128xbf16>, vector<256x128xf32> -> vector<256x128xf32>
    %59 = arith.addf %53, %58 : vector<256x128xf32>
    %c0_80 = arith.constant 0 : index
    %c0_81 = arith.constant 0 : index
    %60 = vector.load %arg3[%c0_80, %c0_81] : memref<1x128xf32, #tpu.memory_space<vmem>>, vector<1x128xf32>
    %61 = vector.broadcast %60 : vector<1x128xf32> to vector<256x128xf32>
    %62 = arith.addf %59, %61 : vector<256x128xf32>
    %cst_82 = arith.constant 0.000000e+00 : f32
    %63 = vector.broadcast %cst_82 : f32 to vector<256x128xf32>
    %64 = arith.maximumf %62, %63 : vector<256x128xf32>
    %65 = vector.shape_cast %64 : vector<256x128xf32> to vector<16x16x128xf32>
    %66 = arith.truncf %65 : vector<16x16x128xf32> to vector<16x16x128xbf16>
    %c0_83 = arith.constant 0 : index
    %c0_84 = arith.constant 0 : index
    %c0_85 = arith.constant 0 : index
    %c0_86 = arith.constant 0 : index
    %67 = vector.load %arg4[%c0_83, %c0_84, %c0_85, %c0_86] : memref<1x16x16x128xbf16, #tpu.memory_space<vmem>>, vector<1x16x16x128xbf16>
    %68 = vector.shape_cast %67 : vector<1x16x16x128xbf16> to vector<16x16x128xbf16>
    %69 = vector.shape_cast %66 : vector<16x16x128xbf16> to vector<1x16x16x128xbf16>
    tpu.vector_store %arg4[%c0_83, %c0_84, %c0_85, %c0_86], %69 {strides = array<i32>} : memref<1x16x16x128xbf16, #tpu.memory_space<vmem>>, vector<1x16x16x128xbf16>,
    return
  }
  func.func @transform_0(%arg0: i32) -> (i32, i32, i32, i32) {
    %c0_i32 = arith.constant 0 : i32
    %c0_i32_0 = arith.constant 0 : i32
    %c0_i32_1 = arith.constant 0 : i32
    %c0_i32_2 = arith.constant 0 : i32
    return %arg0, %c0_i32, %c0_i32_0, %c0_i32_1 : i32, i32, i32, i32
  }
  func.func @transform_1(%arg0: i32) -> (i32, i32, i32, i32) {
    %c0_i32 = arith.constant 0 : i32
    %c0_i32_0 = arith.constant 0 : i32
    %c0_i32_1 = arith.constant 0 : i32
    %c0_i32_2 = arith.constant 0 : i32
    %c0_i32_3 = arith.constant 0 : i32
    return %c0_i32, %c0_i32_0, %c0_i32_1, %c0_i32_2 : i32, i32, i32, i32
  }
  func.func @transform_2(%arg0: i32) -> (i32, i32) {
    %c0_i32 = arith.constant 0 : i32
    %c0_i32_0 = arith.constant 0 : i32
    %c0_i32_1 = arith.constant 0 : i32
    return %c0_i32, %c0_i32_0 : i32, i32
  }
  func.func @transform_3(%arg0: i32) -> (i32, i32, i32, i32) {
    %c0_i32 = arith.constant 0 : i32
    %c0_i32_0 = arith.constant 0 : i32
    %c0_i32_1 = arith.constant 0 : i32
    %c0_i32_2 = arith.constant 0 : i32
    return %arg0, %c0_i32, %c0_i32_0, %c0_i32_1 : i32, i32, i32, i32
  }
}

</mosaic_0001>

<llo_original>
// kernel: tpu_custom_call.1
$region0: #{tpu_custom_call.1}
  #allocation0 [shape = 'u32[]', space=smem, size = 0x4, offset = 0x4, fixed_abs, tag = 'smem constant byte address 0x4 - core index']
  #allocation1 [shape = 'u32[144,128]{1,0:T(1,128)}', space=vmem, size = 0x12000, scoped, tag = 'internal scratch']
  #allocation2 [shape = 'bf16[18,18,128]{2,1,0:T(8,128)(2,1)}', space=vmem, size = 0x1b000, scoped, tag = 'scratch operand']
  %s0 = inlined_call_operand.hbm [shape: bf16[2,16,16,128], index: 0, kind: input, shape index: {}]
  %s1 = inlined_call_operand.hbm [shape: bf16[3,3,128,128], index: 1, kind: input, shape index: {}]
  %s2 = inlined_call_operand.vmem [shape: f32[1,128], index: 2, kind: input, shape index: {}]
  %s3 = inlined_call_operand.hbm [shape: bf16[2,16,16,128], index: 3, kind: output, shape index: {}]
  %s4 = sld [smem:[#allocation0]]
  $region53: #{tpu_custom_call.1} parent=0
    _
  %s6 = ssub.s32 1, %s4
  %s7 = scalar_select 0, %s6, %s4
  $region1: #{tpu_custom_call.1} parent=0
    #allocation3 [shape = 'u8[131072]{0}', space=vmem, size = 0x20000, scoped, tag = 'input window, operand 0']
    #allocation4 [shape = 's32[2]{0}', space=sflag, size = 0x8, scoped, tag = 'scoped memory for tpu_custom_call.1']
    #allocation5 [shape = 's32[2]{0}', space=sflag, size = 0x8, scoped, tag = 'scoped memory for tpu_custom_call.1']
    #allocation6 [shape = 'u8[294912]{0}', space=vmem, size = 0x48000, scoped, tag = 'input window, operand 1, single buffered']
    #allocation7 [shape = 's32[1]{0}', space=sflag, size = 0x4, scoped, tag = 'scoped memory for tpu_custom_call.1']
    #allocation8 [shape = 'u8[131072]{0}', space=vmem, size = 0x20000, scoped, tag = 'output window, operand 0']
    %8 = vsyncpa [#allocation4], 0
    %s9 = scalar_lea.sflag [#allocation4], 1
    %10 = vsyncpa %s9, 0
    %11 = vsyncpa [#allocation7], 0
    %12 = vsyncpa [#allocation5], 0
    %s13 = scalar_lea.sflag [#allocation5], 1
    %14 = vsyncpa %s13, 0
    loop: start=0, step=1, limit=4
    $region2: #{tpu_custom_call.1} parent=1 // loop_pre_header
      _
    $region3: #{tpu_custom_call.1} parent=1 // loop_header
      %s16 = sphi 0, %s20
      %p17 = scmp.ge.s32.totalorder %s16, 4
      %s26 = sphi 0, %s28
      %s29 = sphi 0, %s26
      %s30 = sphi 0, %s29
      %s46 = sphi 0, %s30
      %s50 = sphi 0, %s50
      %s52 = sphi 0, %s50
      %s53 = sphi 0, %s52
      %s67 = sphi 0, %s53
      %s71 = sphi 0, %s71
      %s73 = sphi 0, %s71
      %s74 = sphi 0, %s73
      %s88 = sphi 0, %s74
      %s94 = sphi 0, %s96
      %s97 = sphi 0, %s94
      %s98 = sphi 0, %s97
      %s114 = sphi 0, %s98
    $region4: #{tpu_custom_call.1} parent=1 // loop_header_branch
      %19 = sbr.rel (%p17) target = $region8
    $region5: #{tpu_custom_call.1} parent=1 // loop_body
      %s21 = ssub.s32 %s16, 1
      %s22 = ssub.s32 %s16, 2
      %s23 = sadd.s32 %s16, 1
      %s24 = ssub.s32 %s16, %s23
      %p25 = scmp.eq.s32.totalorder %s24, 0
      %s27 = sadd.s32 %s26, 1
      %s28 = scalar_select %p25, %s26, %s27
      %p31 = pneg %p25
      %p32 = scmp.eq.s32.totalorder %s16, 1
      %p33 = por %p31, %p32
      %p34 = scmp.ne.s32.totalorder %s26, %s29
      %p35 = scmp.eq.s32.totalorder %s16, 0
      %p36 = por %p34, %p35
      %p37 = scmp.ne.s32.totalorder %s26, %s29
      %p38 = scmp.eq.s32.totalorder %s21, 1
      %p39 = por %p37, %p38
      %p40 = scmp.ne.s32.totalorder %s29, %s30
      %p41 = scmp.eq.s32.totalorder %s21, 0
      %p42 = por %p40, %p41
      %p43 = scmp.ne.s32.totalorder %s29, %s30
      %p44 = scmp.eq.s32.totalorder %s22, 1
      %p45 = por %p43, %p44
      %p47 = scmp.ne.s32.totalorder %s30, %s46
      %p48 = scmp.eq.s32.totalorder %s22, 0
      %p49 = por %p47, %p48
      %s51 = sadd.s32 %s50, 1
      %p54 = scmp.eq.s32.totalorder %s16, 1
      %p55 = scmp.ne.s32.totalorder %s50, %s52
      %p56 = scmp.eq.s32.totalorder %s16, 0
      %p57 = por %p55, %p56
      %p58 = scmp.ne.s32.totalorder %s50, %s52
      %p59 = scmp.eq.s32.totalorder %s21, 1
      %p60 = por %p58, %p59
      %p61 = scmp.ne.s32.totalorder %s52, %s53
      %p62 = scmp.eq.s32.totalorder %s21, 0
      %p63 = por %p61, %p62
      %p64 = scmp.ne.s32.totalorder %s52, %s53
      %p65 = scmp.eq.s32.totalorder %s22, 1
      %p66 = por %p64, %p65
      %p68 = scmp.ne.s32.totalorder %s53, %s67
      %p69 = scmp.eq.s32.totalorder %s22, 0
      %p70 = por %p68, %p69
      %s72 = sadd.s32 %s71, 1
      %p75 = scmp.eq.s32.totalorder %s16, 1
      %p76 = scmp.ne.s32.totalorder %s71, %s73
      %p77 = scmp.eq.s32.totalorder %s16, 0
      %p78 = por %p76, %p77
      %p79 = scmp.ne.s32.totalorder %s71, %s73
      %p80 = scmp.eq.s32.totalorder %s21, 1
      %p81 = por %p79, %p80
      %p82 = scmp.ne.s32.totalorder %s73, %s74
      %p83 = scmp.eq.s32.totalorder %s21, 0
      %p84 = por %p82, %p83
      %p85 = scmp.ne.s32.totalorder %s73, %s74
      %p86 = scmp.eq.s32.totalorder %s22, 1
      %p87 = por %p85, %p86
      %p89 = scmp.ne.s32.totalorder %s74, %s88
      %p90 = scmp.eq.s32.totalorder %s22, 0
      %p91 = por %p89, %p90
      %s92 = ssub.s32 %s16, %s23
      %p93 = scmp.eq.s32.totalorder %s92, 0
      %s95 = sadd.s32 %s94, 1
      %s96 = scalar_select %p93, %s94, %s95
      %p99 = pneg %p93
      %p100 = scmp.eq.s32.totalorder %s16, 1
      %p101 = por %p99, %p100
      %p102 = scmp.ne.s32.totalorder %s94, %s97
      %p103 = scmp.eq.s32.totalorder %s16, 0
      %p104 = por %p102, %p103
      %p105 = scmp.ne.s32.totalorder %s94, %s97
      %p106 = scmp.eq.s32.totalorder %s21, 1
      %p107 = por %p105, %p106
      %p108 = scmp.ne.s32.totalorder %s97, %s98
      %p109 = scmp.eq.s32.totalorder %s21, 0
      %p110 = por %p108, %p109
      %p111 = scmp.ne.s32.totalorder %s97, %s98
      %p112 = scmp.eq.s32.totalorder %s22, 1
      %p113 = por %p111, %p112
      %p115 = scmp.ne.s32.totalorder %s98, %s114
      %p116 = scmp.eq.s32.totalorder %s22, 0
      %p117 = por %p115, %p116
      %p118 = scmp.le.s32.totalorder 1, %s16
      %p119 = scmp.lt.s32.totalorder %s16, 3
      %p120 = pnand %p118, %p119
      %p121 = pneg %p120
      // Predicated region
      $region9: #{tpu_custom_call.1} parent=5 // pred_check
        _
      $region10: #{tpu_custom_call.1} parent=5 // pred_check_branch
        %123 = sbr.rel (%p120) target = $region12
      $region11: #{tpu_custom_call.1} parent=5 // pred_region
        %s124 = ssub.s32 %s16, 1
        // Predicated region
        $region13: #{tpu_custom_call.1} parent=11 // pred_check
          %p125 = pneg %p63
        $region14: #{tpu_custom_call.1} parent=11 // pred_check_branch
          %127 = sbr.rel (%p125) target = $region16
        $region15: #{tpu_custom_call.1} parent=11 // pred_region
          %s129 = ssub.s32 9216, 9216
          %130 = vsyncadd [#allocation7], %s129
          %s131 = sshll.u32 [#allocation6], 4
          %s132 = int_to_ptr.vmem [resolvable:$true] %s131
          %137 = dma.hbm_to_vmem [thread:$0]  %s1, 9216, %s132, [#allocation7], 64, 64, 4
        $region16: #{tpu_custom_call.1} parent=11 // pred_fallthru
          _
        // Predicated region
        $region17: #{tpu_custom_call.1} parent=11 // pred_check
          %p138 = pneg %p84
        $region18: #{tpu_custom_call.1} parent=11 // pred_check_branch
          %140 = sbr.rel (%p138) target = $region20
        $region19: #{tpu_custom_call.1} parent=11 // pred_region
          _
        $region20: #{tpu_custom_call.1} parent=11 // pred_fallthru
          _
      $region12: #{tpu_custom_call.1} parent=5 // pred_fallthru
        _
      %p141 = scmp.lt.s32.totalorder %s16, 2
      // Predicated region
      $region21: #{tpu_custom_call.1} parent=5 // pred_check
        %p142 = pneg %p141
      $region22: #{tpu_custom_call.1} parent=5 // pred_check_branch
        %144 = sbr.rel (%p142) target = $region24
      $region23: #{tpu_custom_call.1} parent=5 // pred_region
        // Predicated region
        $region25: #{tpu_custom_call.1} parent=23 // pred_check
          %p145 = pneg %p36
        $region26: #{tpu_custom_call.1} parent=23 // pred_check_branch
          %147 = sbr.rel (%p145) target = $region28
        $region27: #{tpu_custom_call.1} parent=23 // pred_region
          %s148 = sand.u32 %s26, 1
          %s149 = scalar_lea.sflag [#allocation4], %s148
          %s150 = sand.u32 %s26, 1
          %s151 = smul.addr %s150, 128
          %s152 = scalar_lea.vmem [#allocation3], %s151
          %s154 = ssub.s32 2048, 2048
          %155 = vsyncadd %s149, %s154
          %s156 = smul.addr %s16, 32
          %s157 = smul.addr %s156, 64
          %s158 = scalar_lea.hbm %s0, %s157
          %s159 = sshll.u32 %s152, 4
          %s160 = int_to_ptr.vmem [resolvable:$true] %s159
          %165 = dma.hbm_to_vmem [thread:$0]  %s158, 2048, %s160, %s149, 64, 64, 4
        $region28: #{tpu_custom_call.1} parent=23 // pred_fallthru
          _
      $region24: #{tpu_custom_call.1} parent=5 // pred_fallthru
        _
      %p166 = scmp.le.s32.totalorder 1, %s16
      %p167 = scmp.lt.s32.totalorder %s16, 3
      %p168 = pnand %p166, %p167
      %p169 = pneg %p168
      // Predicated region
      $region29: #{tpu_custom_call.1} parent=5 // pred_check
        _
      $region30: #{tpu_custom_call.1} parent=5 // pred_check_branch
        %171 = sbr.rel (%p168) target = $region32
      $region31: #{tpu_custom_call.1} parent=5 // pred_region
        %s172 = ssub.s32 %s16, 1
        %s173 = sand.u32 %s29, 1
        %s174 = scalar_lea.sflag [#allocation4], %s173
        %s175 = sand.u32 %s29, 1
        %s176 = smul.addr %s175, 128
        %s177 = scalar_lea.vmem [#allocation3], %s176
        // Predicated region
        $region33: #{tpu_custom_call.1} parent=31 // pred_check
          %p178 = pneg %p42
        $region34: #{tpu_custom_call.1} parent=31 // pred_check_branch
          %180 = sbr.rel (%p178) target = $region36
        $region35: #{tpu_custom_call.1} parent=31 // pred_region
          %181 = dma.done %s174, 2048
        $region36: #{tpu_custom_call.1} parent=31 // pred_fallthru
          _
        // Predicated region
        $region37: #{tpu_custom_call.1} parent=31 // pred_check
          %p182 = pneg %p63
        $region38: #{tpu_custom_call.1} parent=31 // pred_check_branch
          %184 = sbr.rel (%p182) target = $region40
        $region39: #{tpu_custom_call.1} parent=31 // pred_region
          %185 = dma.done [#allocation7], 9216
        $region40: #{tpu_custom_call.1} parent=31 // pred_fallthru
          _
        %s186 = sand.u32 %s29, 1
        %s187 = scalar_lea.sflag [#allocation4], %s186
        %s188 = sand.u32 %s29, 1
        %s189 = smul.addr %s188, 128
        %s190 = scalar_lea.vmem [#allocation3], %s189
        %p191 = pneg %p42
        %p192 = pneg %p39
        %p193 = pneg %p63
        %p194 = pneg %p60
        %p195 = pneg %p84
        %p196 = pneg %p81
        %p197 = pneg %p110
        %p198 = pneg %p107
        %s199 = sand.u32 %s97, 1
        %s200 = scalar_lea.sflag [#allocation5], %s199
        %s201 = sand.u32 %s97, 1
        %s202 = smul.addr %s201, 128
        %s203 = scalar_lea.vmem [#allocation8], %s202
        %205 = vst [vmem:[#allocation2] sm:$0xf] 0
        %206 = vst [vmem:[#allocation2 + $0x4] sm:$0xf] 0
        %207 = vst [vmem:[#allocation2 + $0x8] sm:$0x1] 0
        %208 = vst [vmem:[#allocation2 + $0xc] sm:$0xf] 0
        %209 = vst [vmem:[#allocation2 + $0x10] sm:$0xf] 0
        %210 = vst [vmem:[#allocation2 + $0x14] sm:$0x1] 0
        %211 = vst [vmem:[#allocation2 + $0x18] sm:$0xf] 0
        %212 = vst [vmem:[#allocation2 + $0x1c] sm:$0xf] 0
        %213 = vst [vmem:[#allocation2 + $0x20] sm:$0x1] 0
        %214 = vst [vmem:[#allocation2 + $0x24] sm:$0xf] 0
        %215 = vst [vmem:[#allocation2 + $0x28] sm:$0xf] 0
        %216 = vst [vmem:[#allocation2 + $0x2c] sm:$0x1] 0
        %217 = vst [vmem:[#allocation2 + $0x30] sm:$0xf] 0
        %218 = vst [vmem:[#allocation2 + $0x34] sm:$0xf] 0
        %219 = vst [vmem:[#allocation2 + $0x38] sm:$0x1] 0
        %220 = vst [vmem:[#allocation2 + $0x3c] sm:$0xf] 0
        %221 = vst [vmem:[#allocation2 + $0x40] sm:$0xf] 0
        %222 = vst [vmem:[#allocation2 + $0x44] sm:$0x1] 0
        %223 = vst [vmem:[#allocation2 + $0x48] sm:$0xf] 0
        %224 = vst [vmem:[#allocation2 + $0x4c] sm:$0xf] 0
        %225 = vst [vmem:[#allocation2 + $0x50] sm:$0x1] 0
        %226 = vst [vmem:[#allocation2 + $0x54] sm:$0xf] 0
        %227 = vst [vmem:[#allocation2 + $0x58] sm:$0xf] 0
        %228 = vst [vmem:[#allocation2 + $0x5c] sm:$0x1] 0
        %229 = vst [vmem:[#allocation2 + $0x60] sm:$0xf] 0
        %230 = vst [vmem:[#allocation2 + $0x64] sm:$0xf] 0
        %231 = vst [vmem:[#allocation2 + $0x68] sm:$0x1] 0
        %232 = vst [vmem:[#allocation2 + $0x6c] sm:$0xf] 0
        %233 = vst [vmem:[#allocation2 + $0x70] sm:$0xf] 0
        %234 = vst [vmem:[#allocation2 + $0x74] sm:$0x1] 0
        %235 = vst [vmem:[#allocation2 + $0x78] sm:$0xf] 0
        %236 = vst [vmem:[#allocation2 + $0x7c] sm:$0xf] 0
        %237 = vst [vmem:[#allocation2 + $0x80] sm:$0x1] 0
        %238 = vst [vmem:[#allocation2 + $0x84] sm:$0xf] 0
        %239 = vst [vmem:[#allocation2 + $0x88] sm:$0xf] 0
        %240 = vst [vmem:[#allocation2 + $0x8c] sm:$0x1] 0
        %241 = vst [vmem:[#allocation2 + $0x90] sm:$0xf] 0
        %242 = vst [vmem:[#allocation2 + $0x94] sm:$0xf] 0
        %243 = vst [vmem:[#allocation2 + $0x98] sm:$0x1] 0
        %244 = vst [vmem:[#allocation2 + $0x9c] sm:$0xf] 0
        %245 = vst [vmem:[#allocation2 + $0xa0] sm:$0xf] 0
        %246 = vst [vmem:[#allocation2 + $0xa4] sm:$0x1] 0
        %247 = vst [vmem:[#allocation2 + $0xa8] sm:$0xf] 0
        %248 = vst [vmem:[#allocation2 + $0xac] sm:$0xf] 0
        %249 = vst [vmem:[#allocation2 + $0xb0] sm:$0x1] 0
        %250 = vst [vmem:[#allocation2 + $0xb4] sm:$0xf] 0
        %251 = vst [vmem:[#allocation2 + $0xb8] sm:$0xf] 0
        %252 = vst [vmem:[#allocation2 + $0xbc] sm:$0x1] 0
        %253 = vst [vmem:[#allocation2 + $0xc0] sm:$0xf] 0
        %254 = vst [vmem:[#allocation2 + $0xc4] sm:$0xf] 0
        %255 = vst [vmem:[#allocation2 + $0xc8] sm:$0x1] 0
        %256 = vst [vmem:[#allocation2 + $0xcc] sm:$0xf] 0
        %257 = vst [vmem:[#allocation2 + $0xd0] sm:$0xf] 0
        %258 = vst [vmem:[#allocation2 + $0xd4] sm:$0x1] 0
        %v259 = vld [vmem:[%s177] sm:$0xf]
        %v260 = vld [vmem:[%s177 + $0x4] sm:$0xf]
        %v261 = vld [vmem:[%s177 + $0x8] sm:$0xf]
        %v262 = vld [vmem:[%s177 + $0xc] sm:$0xf]
        %v263 = vld [vmem:[%s177 + $0x10] sm:$0xf]
        %v264 = vld [vmem:[%s177 + $0x14] sm:$0xf]
        %v265 = vld [vmem:[%s177 + $0x18] sm:$0xf]
        %v266 = vld [vmem:[%s177 + $0x1c] sm:$0xf]
        %v267 = vld [vmem:[%s177 + $0x20] sm:$0xf]
        %v268 = vld [vmem:[%s177 + $0x24] sm:$0xf]
        %v269 = vld [vmem:[%s177 + $0x28] sm:$0xf]
        %v270 = vld [vmem:[%s177 + $0x2c] sm:$0xf]
        %v271 = vld [vmem:[%s177 + $0x30] sm:$0xf]
        %v272 = vld [vmem:[%s177 + $0x34] sm:$0xf]
        %v273 = vld [vmem:[%s177 + $0x38] sm:$0xf]
        %v274 = vld [vmem:[%s177 + $0x3c] sm:$0xf]
        %v275 = vld [vmem:[%s177 + $0x40] sm:$0xf]
        %v276 = vld [vmem:[%s177 + $0x44] sm:$0xf]
        %v277 = vld [vmem:[%s177 + $0x48] sm:$0xf]
        %v278 = vld [vmem:[%s177 + $0x4c] sm:$0xf]
        %v279 = vld [vmem:[%s177 + $0x50] sm:$0xf]
        %v280 = vld [vmem:[%s177 + $0x54] sm:$0xf]
        %v281 = vld [vmem:[%s177 + $0x58] sm:$0xf]
        %v282 = vld [vmem:[%s177 + $0x5c] sm:$0xf]
        %v283 = vld [vmem:[%s177 + $0x60] sm:$0xf]
        %v284 = vld [vmem:[%s177 + $0x64] sm:$0xf]
        %v285 = vld [vmem:[%s177 + $0x68] sm:$0xf]
        %v286 = vld [vmem:[%s177 + $0x6c] sm:$0xf]
        %v287 = vld [vmem:[%s177 + $0x70] sm:$0xf]
        %v288 = vld [vmem:[%s177 + $0x74] sm:$0xf]
        %v289 = vld [vmem:[%s177 + $0x78] sm:$0xf]
        %v290 = vld [vmem:[%s177 + $0x7c] sm:$0xf]
        %vm291 = vsmask.f32 256
        %vm292 = vsmask.f32 4368
        %vm293 = vmor %vm291, %vm292
        %v295 = vshrl.u32 %v259, 16
        %v297 = vrot.slane %v295, 7
        %v298 = vshll.u32 %v259, 16
        %v300 = vor.u32 %v297, %v298
        %v301 = vrot.slane %v297, 4
        %v303 = vshrl.u32 %v260, 16
        %v305 = vrot.slane %v303, 7
        %v306 = vshll.u32 %v260, 16
        %v308 = vor.u32 %v305, %v306
        %v309 = vsel %vm293, %v301, %v308
        %v310 = vrot.slane %v305, 4
        %v312 = vshrl.u32 %v261, 16
        %v314 = vrot.slane %v312, 7
        %v315 = vshll.u32 %v261, 16
        %v317 = vor.u32 %v314, %v315
        %v318 = vrot.slane %v314, 4
        %v320 = vshrl.u32 %v262, 16
        %v322 = vrot.slane %v320, 7
        %v323 = vshll.u32 %v262, 16
        %v325 = vor.u32 %v322, %v323
        %v326 = vsel %vm293, %v318, %v325
        %v327 = vrot.slane %v322, 4
        %v329 = vshrl.u32 %v263, 16
        %v331 = vrot.slane %v329, 7
        %v332 = vshll.u32 %v263, 16
        %v334 = vor.u32 %v331, %v332
        %v335 = vrot.slane %v331, 4
        %v337 = vshrl.u32 %v264, 16
        %v339 = vrot.slane %v337, 7
        %v340 = vshll.u32 %v264, 16
        %v342 = vor.u32 %v339, %v340
        %v343 = vsel %vm293, %v335, %v342
        %v344 = vrot.slane %v339, 4
        %v346 = vshrl.u32 %v265, 16
        %v348 = vrot.slane %v346, 7
        %v349 = vshll.u32 %v265, 16
        %v351 = vor.u32 %v348, %v349
        %v352 = vrot.slane %v348, 4
        %v354 = vshrl.u32 %v266, 16
        %v356 = vrot.slane %v354, 7
        %v357 = vshll.u32 %v266, 16
        %v359 = vor.u32 %v356, %v357
        %v360 = vsel %vm293, %v352, %v359
        %v361 = vrot.slane %v356, 4
        %v363 = vshrl.u32 %v267, 16
        %v365 = vrot.slane %v363, 7
        %v366 = vshll.u32 %v267, 16
        %v368 = vor.u32 %v365, %v366
        %v369 = vrot.slane %v365, 4
        %v371 = vshrl.u32 %v268, 16
        %v373 = vrot.slane %v371, 7
        %v374 = vshll.u32 %v268, 16
        %v376 = vor.u32 %v373, %v374
        %v377 = vsel %vm293, %v369, %v376
        %v378 = vrot.slane %v373, 4
        %v380 = vshrl.u32 %v269, 16
        %v382 = vrot.slane %v380, 7
        %v383 = vshll.u32 %v269, 16
        %v385 = vor.u32 %v382, %v383
        %v386 = vrot.slane %v382, 4
        %v388 = vshrl.u32 %v270, 16
        %v390 = vrot.slane %v388, 7
        %v391 = vshll.u32 %v270, 16
        %v393 = vor.u32 %v390, %v391
        %v394 = vsel %vm293, %v386, %v393
        %v395 = vrot.slane %v390, 4
        %v397 = vshrl.u32 %v271, 16
        %v399 = vrot.slane %v397, 7
        %v400 = vshll.u32 %v271, 16
        %v402 = vor.u32 %v399, %v400
        %v403 = vrot.slane %v399, 4
        %v405 = vshrl.u32 %v272, 16
        %v407 = vrot.slane %v405, 7
        %v408 = vshll.u32 %v272, 16
        %v410 = vor.u32 %v407, %v408
        %v411 = vsel %vm293, %v403, %v410
        %v412 = vrot.slane %v407, 4
        %v414 = vshrl.u32 %v273, 16
        %v416 = vrot.slane %v414, 7
        %v417 = vshll.u32 %v273, 16
        %v419 = vor.u32 %v416, %v417
        %v420 = vrot.slane %v416, 4
        %v422 = vshrl.u32 %v274, 16
        %v424 = vrot.slane %v422, 7
        %v425 = vshll.u32 %v274, 16
        %v427 = vor.u32 %v424, %v425
        %v428 = vsel %vm293, %v420, %v427
        %v429 = vrot.slane %v424, 4
        %v431 = vshrl.u32 %v275, 16
        %v433 = vrot.slane %v431, 7
        %v434 = vshll.u32 %v275, 16
        %v436 = vor.u32 %v433, %v434
        %v437 = vrot.slane %v433, 4
        %v439 = vshrl.u32 %v276, 16
        %v441 = vrot.slane %v439, 7
        %v442 = vshll.u32 %v276, 16
        %v444 = vor.u32 %v441, %v442
        %v445 = vsel %vm293, %v437, %v444
        %v446 = vrot.slane %v441, 4
        %v448 = vshrl.u32 %v277, 16
        %v450 = vrot.slane %v448, 7
        %v451 = vshll.u32 %v277, 16
        %v453 = vor.u32 %v450, %v451
        %v454 = vrot.slane %v450, 4
        %v456 = vshrl.u32 %v278, 16
        %v458 = vrot.slane %v456, 7
        %v459 = vshll.u32 %v278, 16
        %v461 = vor.u32 %v458, %v459
        %v462 = vsel %vm293, %v454, %v461
        %v463 = vrot.slane %v458, 4
        %v465 = vshrl.u32 %v279, 16
        %v467 = vrot.slane %v465, 7
        %v468 = vshll.u32 %v279, 16
        %v470 = vor.u32 %v467, %v468
        %v471 = vrot.slane %v467, 4
        %v473 = vshrl.u32 %v280, 16
        %v475 = vrot.slane %v473, 7
        %v476 = vshll.u32 %v280, 16
        %v478 = vor.u32 %v475, %v476
        %v479 = vsel %vm293, %v471, %v478
        %v480 = vrot.slane %v475, 4
        %v482 = vshrl.u32 %v281, 16
        %v484 = vrot.slane %v482, 7
        %v485 = vshll.u32 %v281, 16
        %v487 = vor.u32 %v484, %v485
        %v488 = vrot.slane %v484, 4
        %v490 = vshrl.u32 %v282, 16
        %v492 = vrot.slane %v490, 7
        %v493 = vshll.u32 %v282, 16
        %v495 = vor.u32 %v492, %v493
        %v496 = vsel %vm293, %v488, %v495
        %v497 = vrot.slane %v492, 4
        %v499 = vshrl.u32 %v283, 16
        %v501 = vrot.slane %v499, 7
        %v502 = vshll.u32 %v283, 16
        %v504 = vor.u32 %v501, %v502
        %v505 = vrot.slane %v501, 4
        %v507 = vshrl.u32 %v284, 16
        %v509 = vrot.slane %v507, 7
        %v510 = vshll.u32 %v284, 16
        %v512 = vor.u32 %v509, %v510
        %v513 = vsel %vm293, %v505, %v512
        %v514 = vrot.slane %v509, 4
        %v516 = vshrl.u32 %v285, 16
        %v518 = vrot.slane %v516, 7
        %v519 = vshll.u32 %v285, 16
        %v521 = vor.u32 %v518, %v519
        %v522 = vrot.slane %v518, 4
        %v524 = vshrl.u32 %v286, 16
        %v526 = vrot.slane %v524, 7
        %v527 = vshll.u32 %v286, 16
        %v529 = vor.u32 %v526, %v527
        %v530 = vsel %vm293, %v522, %v529
        %v531 = vrot.slane %v526, 4
        %v533 = vshrl.u32 %v287, 16
        %v535 = vrot.slane %v533, 7
        %v536 = vshll.u32 %v287, 16
        %v538 = vor.u32 %v535, %v536
        %v539 = vrot.slane %v535, 4
        %v541 = vshrl.u32 %v288, 16
        %v543 = vrot.slane %v541, 7
        %v544 = vshll.u32 %v288, 16
        %v546 = vor.u32 %v543, %v544
        %v547 = vsel %vm293, %v539, %v546
        %v548 = vrot.slane %v543, 4
        %v550 = vshrl.u32 %v289, 16
        %v552 = vrot.slane %v550, 7
        %v553 = vshll.u32 %v289, 16
        %v555 = vor.u32 %v552, %v553
        %v556 = vrot.slane %v552, 4
        %v558 = vshrl.u32 %v290, 16
        %v560 = vrot.slane %v558, 7
        %v561 = vshll.u32 %v290, 16
        %v563 = vor.u32 %v560, %v561
        %v564 = vsel %vm293, %v556, %v563
        %v565 = vrot.slane %v560, 4
        %s614 = scalar_lea.vmem [#allocation2], 12
        %vm615 = vcmask 1043456
        %vm616 = vsmask.f32 7938
        %vm617 = vmand %vm615, %vm616
        %v618 = vld [vmem:[%s614] sm:$0xf]
        %v619 = vsel %vm617, %v300, %v618
        %620 = vst [vmem:[%s614] sm:$0xf] %v619
        %621 = vst [vmem:[%s614 + $0x4] sm:$0xf] %v309
        %vm622 = vcmask 1040384
        %vm623 = vmand %vm622, %vm291
        %v624 = vld [vmem:[%s614 + $0x8] sm:$0x1]
        %v625 = vsel %vm623, %v310, %v624
        %626 = vst [vmem:[%s614 + $0x8] sm:$0x1] %v625
        %v627 = vld [vmem:[%s614 + $0xc] sm:$0xf]
        %v628 = vsel %vm617, %v317, %v627
        %629 = vst [vmem:[%s614 + $0xc] sm:$0xf] %v628
        %630 = vst [vmem:[%s614 + $0x10] sm:$0xf] %v326
        %v631 = vld [vmem:[%s614 + $0x14] sm:$0x1]
        %v632 = vsel %vm623, %v327, %v631
        %633 = vst [vmem:[%s614 + $0x14] sm:$0x1] %v632
        %v634 = vld [vmem:[%s614 + $0x18] sm:$0xf]
        %v635 = vsel %vm617, %v334, %v634
        %636 = vst [vmem:[%s614 + $0x18] sm:$0xf] %v635
        %637 = vst [vmem:[%s614 + $0x1c] sm:$0xf] %v343
        %v638 = vld [vmem:[%s614 + $0x20] sm:$0x1]
        %v639 = vsel %vm623, %v344, %v638
        %640 = vst [vmem:[%s614 + $0x20] sm:$0x1] %v639
        %v641 = vld [vmem:[%s614 + $0x24] sm:$0xf]
        %v642 = vsel %vm617, %v351, %v641
        %643 = vst [vmem:[%s614 + $0x24] sm:$0xf] %v642
        %644 = vst [vmem:[%s614 + $0x28] sm:$0xf] %v360
        %v645 = vld [vmem:[%s614 + $0x2c] sm:$0x1]
        %v646 = vsel %vm623, %v361, %v645
        %647 = vst [vmem:[%s614 + $0x2c] sm:$0x1] %v646
        %v648 = vld [vmem:[%s614 + $0x30] sm:$0xf]
        %v649 = vsel %vm617, %v368, %v648
        %650 = vst [vmem:[%s614 + $0x30] sm:$0xf] %v649
        %651 = vst [vmem:[%s614 + $0x34] sm:$0xf] %v377
        %v652 = vld [vmem:[%s614 + $0x38] sm:$0x1]
        %v653 = vsel %vm623, %v378, %v652
        %654 = vst [vmem:[%s614 + $0x38] sm:$0x1] %v653
        %v655 = vld [vmem:[%s614 + $0x3c] sm:$0xf]
        %v656 = vsel %vm617, %v385, %v655
        %657 = vst [vmem:[%s614 + $0x3c] sm:$0xf] %v656
        %658 = vst [vmem:[%s614 + $0x40] sm:$0xf] %v394
        %v659 = vld [vmem:[%s614 + $0x44] sm:$0x1]
        %v660 = vsel %vm623, %v395, %v659
        %661 = vst [vmem:[%s614 + $0x44] sm:$0x1] %v660
        %v662 = vld [vmem:[%s614 + $0x48] sm:$0xf]
        %v663 = vsel %vm617, %v402, %v662
        %664 = vst [vmem:[%s614 + $0x48] sm:$0xf] %v663
        %665 = vst [vmem:[%s614 + $0x4c] sm:$0xf] %v411
        %v666 = vld [vmem:[%s614 + $0x50] sm:$0x1]
        %v667 = vsel %vm623, %v412, %v666
        %668 = vst [vmem:[%s614 + $0x50] sm:$0x1] %v667
        %v669 = vld [vmem:[%s614 + $0x54] sm:$0xf]
        %v670 = vsel %vm617, %v419, %v669
        %671 = vst [vmem:[%s614 + $0x54] sm:$0xf] %v670
        %672 = vst [vmem:[%s614 + $0x58] sm:$0xf] %v428
        %v673 = vld [vmem:[%s614 + $0x5c] sm:$0x1]
        %v674 = vsel %vm623, %v429, %v673
        %675 = vst [vmem:[%s614 + $0x5c] sm:$0x1] %v674
        %v676 = vld [vmem:[%s614 + $0x60] sm:$0xf]
        %v677 = vsel %vm617, %v436, %v676
        %678 = vst [vmem:[%s614 + $0x60] sm:$0xf] %v677
        %679 = vst [vmem:[%s614 + $0x64] sm:$0xf] %v445
        %v680 = vld [vmem:[%s614 + $0x68] sm:$0x1]
        %v681 = vsel %vm623, %v446, %v680
        %682 = vst [vmem:[%s614 + $0x68] sm:$0x1] %v681
        %v683 = vld [vmem:[%s614 + $0x6c] sm:$0xf]
        %v684 = vsel %vm617, %v453, %v683
        %685 = vst [vmem:[%s614 + $0x6c] sm:$0xf] %v684
        %686 = vst [vmem:[%s614 + $0x70] sm:$0xf] %v462
        %v687 = vld [vmem:[%s614 + $0x74] sm:$0x1]
        %v688 = vsel %vm623, %v463, %v687
        %689 = vst [vmem:[%s614 + $0x74] sm:$0x1] %v688
        %v690 = vld [vmem:[%s614 + $0x78] sm:$0xf]
        %v691 = vsel %vm617, %v470, %v690
        %692 = vst [vmem:[%s614 + $0x78] sm:$0xf] %v691
        %693 = vst [vmem:[%s614 + $0x7c] sm:$0xf] %v479
        %v694 = vld [vmem:[%s614 + $0x80] sm:$0x1]
        %v695 = vsel %vm623, %v480, %v694
        %696 = vst [vmem:[%s614 + $0x80] sm:$0x1] %v695
        %v697 = vld [vmem:[%s614 + $0x84] sm:$0xf]
        %v698 = vsel %vm617, %v487, %v697
        %699 = vst [vmem:[%s614 + $0x84] sm:$0xf] %v698
        %700 = vst [vmem:[%s614 + $0x88] sm:$0xf] %v496
        %v701 = vld [vmem:[%s614 + $0x8c] sm:$0x1]
        %v702 = vsel %vm623, %v497, %v701
        %703 = vst [vmem:[%s614 + $0x8c] sm:$0x1] %v702
        %v704 = vld [vmem:[%s614 + $0x90] sm:$0xf]
        %v705 = vsel %vm617, %v504, %v704
        %706 = vst [vmem:[%s614 + $0x90] sm:$0xf] %v705
        %707 = vst [vmem:[%s614 + $0x94] sm:$0xf] %v513
        %v708 = vld [vmem:[%s614 + $0x98] sm:$0x1]
        %v709 = vsel %vm623, %v514, %v708
        %710 = vst [vmem:[%s614 + $0x98] sm:$0x1] %v709
        %v711 = vld [vmem:[%s614 + $0x9c] sm:$0xf]
        %v712 = vsel %vm617, %v521, %v711
        %713 = vst [vmem:[%s614 + $0x9c] sm:$0xf] %v712
        %714 = vst [vmem:[%s614 + $0xa0] sm:$0xf] %v530
        %v715 = vld [vmem:[%s614 + $0xa4] sm:$0x1]
        %v716 = vsel %vm623, %v531, %v715
        %717 = vst [vmem:[%s614 + $0xa4] sm:$0x1] %v716
        %v718 = vld [vmem:[%s614 + $0xa8] sm:$0xf]
        %v719 = vsel %vm617, %v538, %v718
        %720 = vst [vmem:[%s614 + $0xa8] sm:$0xf] %v719
        %721 = vst [vmem:[%s614 + $0xac] sm:$0xf] %v547
        %v722 = vld [vmem:[%s614 + $0xb0] sm:$0x1]
        %v723 = vsel %vm623, %v548, %v722
        %724 = vst [vmem:[%s614 + $0xb0] sm:$0x1] %v723
        %v725 = vld [vmem:[%s614 + $0xb4] sm:$0xf]
        %v726 = vsel %vm617, %v555, %v725
        %727 = vst [vmem:[%s614 + $0xb4] sm:$0xf] %v726
        %728 = vst [vmem:[%s614 + $0xb8] sm:$0xf] %v564
        %v729 = vld [vmem:[%s614 + $0xbc] sm:$0x1]
        %v730 = vsel %vm623, %v565, %v729
        %731 = vst [vmem:[%s614 + $0xbc] sm:$0x1] %v730
        %v732 = vld [vmem:[#allocation2] sm:$0xf]
        %v733 = vld [vmem:[#allocation2 + $0x4] sm:$0xf]
        %v734 = vld [vmem:[#allocation2 + $0xc] sm:$0xf]
        %v735 = vld [vmem:[#allocation2 + $0x10] sm:$0xf]
        %v736 = vld [vmem:[#allocation2 + $0x18] sm:$0xf]
        %v737 = vld [vmem:[#allocation2 + $0x1c] sm:$0xf]
        %v738 = vld [vmem:[#allocation2 + $0x24] sm:$0xf]
        %v739 = vld [vmem:[#allocation2 + $0x28] sm:$0xf]
        %v740 = vld [vmem:[#allocation2 + $0x30] sm:$0xf]
        %v741 = vld [vmem:[#allocation2 + $0x34] sm:$0xf]
        %v742 = vld [vmem:[#allocation2 + $0x3c] sm:$0xf]
        %v743 = vld [vmem:[#allocation2 + $0x40] sm:$0xf]
        %v744 = vld [vmem:[#allocation2 + $0x48] sm:$0xf]
        %v745 = vld [vmem:[#allocation2 + $0x4c] sm:$0xf]
        %v746 = vld [vmem:[#allocation2 + $0x54] sm:$0xf]
        %v747 = vld [vmem:[#allocation2 + $0x58] sm:$0xf]
        %v748 = vld [vmem:[#allocation2 + $0x60] sm:$0xf]
        %v749 = vld [vmem:[#allocation2 + $0x64] sm:$0xf]
        %v750 = vld [vmem:[#allocation2 + $0x6c] sm:$0xf]
        %v751 = vld [vmem:[#allocation2 + $0x70] sm:$0xf]
        %v752 = vld [vmem:[#allocation2 + $0x78] sm:$0xf]
        %v753 = vld [vmem:[#allocation2 + $0x7c] sm:$0xf]
        %v754 = vld [vmem:[#allocation2 + $0x84] sm:$0xf]
        %v755 = vld [vmem:[#allocation2 + $0x88] sm:$0xf]
        %v756 = vld [vmem:[#allocation2 + $0x90] sm:$0xf]
        %v757 = vld [vmem:[#allocation2 + $0x94] sm:$0xf]
        %v758 = vld [vmem:[#allocation2 + $0x9c] sm:$0xf]
        %v759 = vld [vmem:[#allocation2 + $0xa0] sm:$0xf]
        %v760 = vld [vmem:[#allocation2 + $0xa8] sm:$0xf]
        %v761 = vld [vmem:[#allocation2 + $0xac] sm:$0xf]
        %v762 = vld [vmem:[#allocation2 + $0xb4] sm:$0xf]
        %v763 = vld [vmem:[#allocation2 + $0xb8] sm:$0xf]
        %v764 = vld [vmem:[#allocation6] sm:$0xf]
        %v765 = vld [vmem:[#allocation6 + $0x4] sm:$0xf]
        %v766 = vld [vmem:[#allocation6 + $0x8] sm:$0xf]
        %v767 = vld [vmem:[#allocation6 + $0xc] sm:$0xf]
        %v768 = vld [vmem:[#allocation6 + $0x10] sm:$0xf]
        %v769 = vld [vmem:[#allocation6 + $0x14] sm:$0xf]
        %v770 = vld [vmem:[#allocation6 + $0x18] sm:$0xf]
        %v771 = vld [vmem:[#allocation6 + $0x1c] sm:$0xf]
        %v772 = vld [vmem:[#allocation6 + $0x20] sm:$0xf]
        %v773 = vld [vmem:[#allocation6 + $0x24] sm:$0xf]
        %v774 = vld [vmem:[#allocation6 + $0x28] sm:$0xf]
        %v775 = vld [vmem:[#allocation6 + $0x2c] sm:$0xf]
        %v776 = vld [vmem:[#allocation6 + $0x30] sm:$0xf]
        %v777 = vld [vmem:[#allocation6 + $0x34] sm:$0xf]
        %v778 = vld [vmem:[#allocation6 + $0x38] sm:$0xf]
        %v779 = vld [vmem:[#allocation6 + $0x3c] sm:$0xf]
        %v780 = vld [vmem:[#allocation2 + $0x8] sm:$0x1]
        %v781 = vld [vmem:[#allocation2 + $0x14] sm:$0x1]
        %v782 = vld [vmem:[#allocation2 + $0x20] sm:$0x1]
        %v783 = vld [vmem:[#allocation2 + $0x2c] sm:$0x1]
        %v784 = vld [vmem:[#allocation2 + $0x38] sm:$0x1]
        %v785 = vld [vmem:[#allocation2 + $0x44] sm:$0x1]
        %v786 = vld [vmem:[#allocation2 + $0x50] sm:$0x1]
        %v787 = vld [vmem:[#allocation2 + $0x5c] sm:$0x1]
        %v788 = vld [vmem:[#allocation2 + $0x68] sm:$0x1]
        %v789 = vld [vmem:[#allocation2 + $0x74] sm:$0x1]
        %v790 = vld [vmem:[#allocation2 + $0x80] sm:$0x1]
        %v791 = vld [vmem:[#allocation2 + $0x8c] sm:$0x1]
        %v792 = vld [vmem:[#allocation2 + $0x98] sm:$0x1]
        %v793 = vld [vmem:[#allocation2 + $0xa4] sm:$0x1]
        %v794 = vld [vmem:[#allocation2 + $0xb0] sm:$0x1]
        %v795 = vld [vmem:[#allocation2 + $0xbc] sm:$0x1]
        %vm796 = vsmask.f32 3328
        %vm797 = vsmask.f32 7440
        %vm798 = vmor %vm796, %vm797
        %v800 = vshrl.u32 %v732, 16
        %v802 = vrot.slane %v800, 4
        %v803 = vshll.u32 %v732, 16
        %v805 = vrot.slane %v803, 5
        %v806 = vor.u32 %v802, %v805
        %v807 = vrot.slane %v806, 4
        %v809 = vshll.u32 %v733, 16
        %v811 = vrot.slane %v809, 5
        %v812 = vsel %vm798, %v807, %v811
        %v813 = vshrl.u32 %v733, 16
        %v815 = vrot.slane %v813, 4
        %v816 = vor.u32 %v815, %v811
        %v817 = vrot.slane %v816, 4
        %v819 = vshll.u32 %v780, 16
        %v821 = vrot.slane %v819, 5
        %v822 = vsel %vm798, %v817, %v821
        %v824 = vshrl.u32 %v734, 16
        %v826 = vrot.slane %v824, 4
        %v827 = vshll.u32 %v734, 16
        %v829 = vrot.slane %v827, 5
        %v830 = vor.u32 %v826, %v829
        %v831 = vrot.slane %v830, 4
        %v833 = vshll.u32 %v735, 16
        %v835 = vrot.slane %v833, 5
        %v836 = vsel %vm798, %v831, %v835
        %v837 = vshrl.u32 %v735, 16
        %v839 = vrot.slane %v837, 4
        %v840 = vor.u32 %v839, %v835
        %v841 = vrot.slane %v840, 4
        %v843 = vshll.u32 %v781, 16
        %v845 = vrot.slane %v843, 5
        %v846 = vsel %vm798, %v841, %v845
        %v848 = vshrl.u32 %v736, 16
        %v850 = vrot.slane %v848, 4
        %v851 = vshll.u32 %v736, 16
        %v853 = vrot.slane %v851, 5
        %v854 = vor.u32 %v850, %v853
        %v855 = vrot.slane %v854, 4
        %v857 = vshll.u32 %v737, 16
        %v859 = vrot.slane %v857, 5
        %v860 = vsel %vm798, %v855, %v859
        %v861 = vshrl.u32 %v737, 16
        %v863 = vrot.slane %v861, 4
        %v864 = vor.u32 %v863, %v859
        %v865 = vrot.slane %v864, 4
        %v867 = vshll.u32 %v782, 16
        %v869 = vrot.slane %v867, 5
        %v870 = vsel %vm798, %v865, %v869
        %v872 = vshrl.u32 %v738, 16
        %v874 = vrot.slane %v872, 4
        %v875 = vshll.u32 %v738, 16
        %v877 = vrot.slane %v875, 5
        %v878 = vor.u32 %v874, %v877
        %v879 = vrot.slane %v878, 4
        %v881 = vshll.u32 %v739, 16
        %v883 = vrot.slane %v881, 5
        %v884 = vsel %vm798, %v879, %v883
        %v885 = vshrl.u32 %v739, 16
        %v887 = vrot.slane %v885, 4
        %v888 = vor.u32 %v887, %v883
        %v889 = vrot.slane %v888, 4
        %v891 = vshll.u32 %v783, 16
        %v893 = vrot.slane %v891, 5
        %v894 = vsel %vm798, %v889, %v893
        %v896 = vshrl.u32 %v740, 16
        %v898 = vrot.slane %v896, 4
        %v899 = vshll.u32 %v740, 16
        %v901 = vrot.slane %v899, 5
        %v902 = vor.u32 %v898, %v901
        %v903 = vrot.slane %v902, 4
        %v905 = vshll.u32 %v741, 16
        %v907 = vrot.slane %v905, 5
        %v908 = vsel %vm798, %v903, %v907
        %v909 = vshrl.u32 %v741, 16
        %v911 = vrot.slane %v909, 4
        %v912 = vor.u32 %v911, %v907
        %v913 = vrot.slane %v912, 4
        %v915 = vshll.u32 %v784, 16
        %v917 = vrot.slane %v915, 5
        %v918 = vsel %vm798, %v913, %v917
        %v920 = vshrl.u32 %v742, 16
        %v922 = vrot.slane %v920, 4
        %v923 = vshll.u32 %v742, 16
        %v925 = vrot.slane %v923, 5
        %v926 = vor.u32 %v922, %v925
        %v927 = vrot.slane %v926, 4
        %v929 = vshll.u32 %v743, 16
        %v931 = vrot.slane %v929, 5
        %v932 = vsel %vm798, %v927, %v931
        %v933 = vshrl.u32 %v743, 16
        %v935 = vrot.slane %v933, 4
        %v936 = vor.u32 %v935, %v931
        %v937 = vrot.slane %v936, 4
        %v939 = vshll.u32 %v785, 16
        %v941 = vrot.slane %v939, 5
        %v942 = vsel %vm798, %v937, %v941
        %v944 = vshrl.u32 %v744, 16
        %v946 = vrot.slane %v944, 4
        %v947 = vshll.u32 %v744, 16
        %v949 = vrot.slane %v947, 5
        %v950 = vor.u32 %v946, %v949
        %v951 = vrot.slane %v950, 4
        %v953 = vshll.u32 %v745, 16
        %v955 = vrot.slane %v953, 5
        %v956 = vsel %vm798, %v951, %v955
        %v957 = vshrl.u32 %v745, 16
        %v959 = vrot.slane %v957, 4
        %v960 = vor.u32 %v959, %v955
        %v961 = vrot.slane %v960, 4
        %v963 = vshll.u32 %v786, 16
        %v965 = vrot.slane %v963, 5
        %v966 = vsel %vm798, %v961, %v965
        %v968 = vshrl.u32 %v746, 16
        %v970 = vrot.slane %v968, 4
        %v971 = vshll.u32 %v746, 16
        %v973 = vrot.slane %v971, 5
        %v974 = vor.u32 %v970, %v973
        %v975 = vrot.slane %v974, 4
        %v977 = vshll.u32 %v747, 16
        %v979 = vrot.slane %v977, 5
        %v980 = vsel %vm798, %v975, %v979
        %v981 = vshrl.u32 %v747, 16
        %v983 = vrot.slane %v981, 4
        %v984 = vor.u32 %v983, %v979
        %v985 = vrot.slane %v984, 4
        %v987 = vshll.u32 %v787, 16
        %v989 = vrot.slane %v987, 5
        %v990 = vsel %vm798, %v985, %v989
        %v992 = vshrl.u32 %v748, 16
        %v994 = vrot.slane %v992, 4
        %v995 = vshll.u32 %v748, 16
        %v997 = vrot.slane %v995, 5
        %v998 = vor.u32 %v994, %v997
        %v999 = vrot.slane %v998, 4
        %v1001 = vshll.u32 %v749, 16
        %v1003 = vrot.slane %v1001, 5
        %v1004 = vsel %vm798, %v999, %v1003
        %v1005 = vshrl.u32 %v749, 16
        %v1007 = vrot.slane %v1005, 4
        %v1008 = vor.u32 %v1007, %v1003
        %v1009 = vrot.slane %v1008, 4
        %v1011 = vshll.u32 %v788, 16
        %v1013 = vrot.slane %v1011, 5
        %v1014 = vsel %vm798, %v1009, %v1013
        %v1016 = vshrl.u32 %v750, 16
        %v1018 = vrot.slane %v1016, 4
        %v1019 = vshll.u32 %v750, 16
        %v1021 = vrot.slane %v1019, 5
        %v1022 = vor.u32 %v1018, %v1021
        %v1023 = vrot.slane %v1022, 4
        %v1025 = vshll.u32 %v751, 16
        %v1027 = vrot.slane %v1025, 5
        %v1028 = vsel %vm798, %v1023, %v1027
        %v1029 = vshrl.u32 %v751, 16
        %v1031 = vrot.slane %v1029, 4
        %v1032 = vor.u32 %v1031, %v1027
        %v1033 = vrot.slane %v1032, 4
        %v1035 = vshll.u32 %v789, 16
        %v1037 = vrot.slane %v1035, 5
        %v1038 = vsel %vm798, %v1033, %v1037
        %v1040 = vshrl.u32 %v752, 16
        %v1042 = vrot.slane %v1040, 4
        %v1043 = vshll.u32 %v752, 16
        %v1045 = vrot.slane %v1043, 5
        %v1046 = vor.u32 %v1042, %v1045
        %v1047 = vrot.slane %v1046, 4
        %v1049 = vshll.u32 %v753, 16
        %v1051 = vrot.slane %v1049, 5
        %v1052 = vsel %vm798, %v1047, %v1051
        %v1053 = vshrl.u32 %v753, 16
        %v1055 = vrot.slane %v1053, 4
        %v1056 = vor.u32 %v1055, %v1051
        %v1057 = vrot.slane %v1056, 4
        %v1059 = vshll.u32 %v790, 16
        %v1061 = vrot.slane %v1059, 5
        %v1062 = vsel %vm798, %v1057, %v1061
        %v1064 = vshrl.u32 %v754, 16
        %v1066 = vrot.slane %v1064, 4
        %v1067 = vshll.u32 %v754, 16
        %v1069 = vrot.slane %v1067, 5
        %v1070 = vor.u32 %v1066, %v1069
        %v1071 = vrot.slane %v1070, 4
        %v1073 = vshll.u32 %v755, 16
        %v1075 = vrot.slane %v1073, 5
        %v1076 = vsel %vm798, %v1071, %v1075
        %v1077 = vshrl.u32 %v755, 16
        %v1079 = vrot.slane %v1077, 4
        %v1080 = vor.u32 %v1079, %v1075
        %v1081 = vrot.slane %v1080, 4
        %v1083 = vshll.u32 %v791, 16
        %v1085 = vrot.slane %v1083, 5
        %v1086 = vsel %vm798, %v1081, %v1085
        %v1088 = vshrl.u32 %v756, 16
        %v1090 = vrot.slane %v1088, 4
        %v1091 = vshll.u32 %v756, 16
        %v1093 = vrot.slane %v1091, 5
        %v1094 = vor.u32 %v1090, %v1093
        %v1095 = vrot.slane %v1094, 4
        %v1097 = vshll.u32 %v757, 16
        %v1099 = vrot.slane %v1097, 5
        %v1100 = vsel %vm798, %v1095, %v1099
        %v1101 = vshrl.u32 %v757, 16
        %v1103 = vrot.slane %v1101, 4
        %v1104 = vor.u32 %v1103, %v1099
        %v1105 = vrot.slane %v1104, 4
        %v1107 = vshll.u32 %v792, 16
        %v1109 = vrot.slane %v1107, 5
        %v1110 = vsel %vm798, %v1105, %v1109
        %v1112 = vshrl.u32 %v758, 16
        %v1114 = vrot.slane %v1112, 4
        %v1115 = vshll.u32 %v758, 16
        %v1117 = vrot.slane %v1115, 5
        %v1118 = vor.u32 %v1114, %v1117
        %v1119 = vrot.slane %v1118, 4
        %v1121 = vshll.u32 %v759, 16
        %v1123 = vrot.slane %v1121, 5
        %v1124 = vsel %vm798, %v1119, %v1123
        %v1125 = vshrl.u32 %v759, 16
        %v1127 = vrot.slane %v1125, 4
        %v1128 = vor.u32 %v1127, %v1123
        %v1129 = vrot.slane %v1128, 4
        %v1131 = vshll.u32 %v793, 16
        %v1133 = vrot.slane %v1131, 5
        %v1134 = vsel %vm798, %v1129, %v1133
        %v1136 = vshrl.u32 %v760, 16
        %v1138 = vrot.slane %v1136, 4
        %v1139 = vshll.u32 %v760, 16
        %v1141 = vrot.slane %v1139, 5
        %v1142 = vor.u32 %v1138, %v1141
        %v1143 = vrot.slane %v1142, 4
        %v1145 = vshll.u32 %v761, 16
        %v1147 = vrot.slane %v1145, 5
        %v1148 = vsel %vm798, %v1143, %v1147
        %v1149 = vshrl.u32 %v761, 16
        %v1151 = vrot.slane %v1149, 4
        %v1152 = vor.u32 %v1151, %v1147
        %v1153 = vrot.slane %v1152, 4
        %v1155 = vshll.u32 %v794, 16
        %v1157 = vrot.slane %v1155, 5
        %v1158 = vsel %vm798, %v1153, %v1157
        %v1160 = vshrl.u32 %v762, 16
        %v1162 = vrot.slane %v1160, 4
        %v1163 = vshll.u32 %v762, 16
        %v1165 = vrot.slane %v1163, 5
        %v1166 = vor.u32 %v1162, %v1165
        %v1167 = vrot.slane %v1166, 4
        %v1169 = vshll.u32 %v763, 16
        %v1171 = vrot.slane %v1169, 5
        %v1172 = vsel %vm798, %v1167, %v1171
        %v1173 = vshrl.u32 %v763, 16
        %v1175 = vrot.slane %v1173, 4
        %v1176 = vor.u32 %v1175, %v1171
        %v1177 = vrot.slane %v1176, 4
        %v1179 = vshll.u32 %v795, 16
        %v1181 = vrot.slane %v1179, 5
        %v1182 = vsel %vm798, %v1177, %v1181
        %s1183 = scalar_lea.vmem [#allocation6], 64
        %v1184 = vld [vmem:[%s1183] sm:$0xf]
        %v1185 = vld [vmem:[%s1183 + $0x4] sm:$0xf]
        %v1186 = vld [vmem:[%s1183 + $0x8] sm:$0xf]
        %v1187 = vld [vmem:[%s1183 + $0xc] sm:$0xf]
        %v1188 = vld [vmem:[%s1183 + $0x10] sm:$0xf]
        %v1189 = vld [vmem:[%s1183 + $0x14] sm:$0xf]
        %v1190 = vld [vmem:[%s1183 + $0x18] sm:$0xf]
        %v1191 = vld [vmem:[%s1183 + $0x1c] sm:$0xf]
        %v1192 = vld [vmem:[%s1183 + $0x20] sm:$0xf]
        %v1193 = vld [vmem:[%s1183 + $0x24] sm:$0xf]
        %v1194 = vld [vmem:[%s1183 + $0x28] sm:$0xf]
        %v1195 = vld [vmem:[%s1183 + $0x2c] sm:$0xf]
        %v1196 = vld [vmem:[%s1183 + $0x30] sm:$0xf]
        %v1197 = vld [vmem:[%s1183 + $0x34] sm:$0xf]
        %v1198 = vld [vmem:[%s1183 + $0x38] sm:$0xf]
        %v1199 = vld [vmem:[%s1183 + $0x3c] sm:$0xf]
        %v1200 = vunpack.c.l.b16 %v812
        %v1201 = vunpack.c.l.b16 %v822
        %v1202 = vunpack.c.l.b16 %v836
        %v1203 = vunpack.c.l.b16 %v846
        %v1204 = vunpack.c.l.b16 %v860
        %v1205 = vunpack.c.l.b16 %v870
        %v1206 = vunpack.c.l.b16 %v884
        %v1207 = vunpack.c.l.b16 %v894
        %v1208 = vunpack.c.l.b16 %v908
        %v1209 = vunpack.c.l.b16 %v918
        %v1210 = vunpack.c.l.b16 %v932
        %v1211 = vunpack.c.l.b16 %v942
        %v1212 = vunpack.c.l.b16 %v956
        %v1213 = vunpack.c.l.b16 %v966
        %v1214 = vunpack.c.l.b16 %v980
        %v1215 = vunpack.c.l.b16 %v990
        %v1216 = vunpack.c.l.b16 %v1004
        %v1217 = vunpack.c.l.b16 %v1014
        %v1218 = vunpack.c.l.b16 %v1028
        %v1219 = vunpack.c.l.b16 %v1038
        %v1220 = vunpack.c.l.b16 %v1052
        %v1221 = vunpack.c.l.b16 %v1062
        %v1222 = vunpack.c.l.b16 %v1076
        %v1223 = vunpack.c.l.b16 %v1086
        %v1224 = vunpack.c.l.b16 %v1100
        %v1225 = vunpack.c.l.b16 %v1110
        %v1226 = vunpack.c.l.b16 %v1124
        %v1227 = vunpack.c.l.b16 %v1134
        %v1228 = vunpack.c.l.b16 %v1148
        %v1229 = vunpack.c.l.b16 %v1158
        %v1230 = vunpack.c.l.b16 %v1172
        %v1231 = vunpack.c.l.b16 %v1182
        %v1232 = vpack.c.b16 %v1201, %v1200
        %v1233 = vpack.c.b16 %v1203, %v1202
        %v1234 = vpack.c.b16 %v1205, %v1204
        %v1235 = vpack.c.b16 %v1207, %v1206
        %v1236 = vpack.c.b16 %v1209, %v1208
        %v1237 = vpack.c.b16 %v1211, %v1210
        %v1238 = vpack.c.b16 %v1213, %v1212
        %v1239 = vpack.c.b16 %v1215, %v1214
        %v1240 = vpack.c.b16 %v1217, %v1216
        %v1241 = vpack.c.b16 %v1219, %v1218
        %v1242 = vpack.c.b16 %v1221, %v1220
        %v1243 = vpack.c.b16 %v1223, %v1222
        %v1244 = vpack.c.b16 %v1225, %v1224
        %v1245 = vpack.c.b16 %v1227, %v1226
        %v1246 = vpack.c.b16 %v1229, %v1228
        %v1247 = vpack.c.b16 %v1231, %v1230
        %v1280 = vunpack.c.l.b16 %v1184
        %v1281 = vunpack.c.l.b16 %v1185
        %v1282 = vunpack.c.l.b16 %v1186
        %v1283 = vunpack.c.l.b16 %v1187
        %v1284 = vunpack.c.l.b16 %v1188
        %v1285 = vunpack.c.l.b16 %v1189
        %v1286 = vunpack.c.l.b16 %v1190
        %v1287 = vunpack.c.l.b16 %v1191
        %v1288 = vunpack.c.l.b16 %v1192
        %v1289 = vunpack.c.l.b16 %v1193
        %v1290 = vunpack.c.l.b16 %v1194
        %v1291 = vunpack.c.l.b16 %v1195
        %v1292 = vunpack.c.l.b16 %v1196
        %v1293 = vunpack.c.l.b16 %v1197
        %v1294 = vunpack.c.l.b16 %v1198
        %v1295 = vunpack.c.l.b16 %v1199
        %v1296 = vpack.c.b16 %v1281, %v1280
        %v1297 = vpack.c.b16 %v1283, %v1282
        %v1298 = vpack.c.b16 %v1285, %v1284
        %v1299 = vpack.c.b16 %v1287, %v1286
        %v1300 = vpack.c.b16 %v1289, %v1288
        %v1301 = vpack.c.b16 %v1291, %v1290
        %v1302 = vpack.c.b16 %v1293, %v1292
        %v1303 = vpack.c.b16 %v1295, %v1294
        %1312 = vmatprep.subr.bf16.mxu0 0
        %1313 = vmatpush1.bf16.msra.mxu0 %v1296
        %1314 = vmatprep.subr.bf16.mxu0 0
        %1315 = vmatpush1.bf16.msra.mxu0 %v1297
        %1316 = vmatprep.subr.bf16.mxu0 0
        %1317 = vmatpush1.bf16.msra.mxu0 %v1298
        %1318 = vmatprep.subr.bf16.mxu0 0
        %1319 = vmatpush1.bf16.msra.mxu0 %v1299
        %1320 = vmatprep.subr.bf16.mxu0 0
        %1321 = vmatpush1.bf16.msra.mxu0 %v1300
        %1322 = vmatprep.subr.bf16.mxu0 0
        %1323 = vmatpush1.bf16.msra.mxu0 %v1301
        %1324 = vmatprep.subr.bf16.mxu0 0
        %1325 = vmatpush1.bf16.msra.mxu0 %v1302
        %1326 = vmatprep.subr.bf16.mxu0 0
        %1327 = vmatpush1.bf16.msra.mxu0 %v1303
        %1328 = vmatprep.subr.bf16.mxu0 0
        %1329 = vmatpush1.bf16.msra.mxu0 0
        %1330 = vmatprep.subr.bf16.mxu0 0
        %1331 = vmatpush1.bf16.msra.mxu0 0
        %1332 = vmatprep.subr.bf16.mxu0 0
        %1333 = vmatpush1.bf16.msra.mxu0 0
        %1334 = vmatprep.subr.bf16.mxu0 0
        %1335 = vmatpush1.bf16.msra.mxu0 0
        %1336 = vmatprep.subr.bf16.mxu0 0
        %1337 = vmatpush1.bf16.msra.mxu0 0
        %1338 = vmatprep.subr.bf16.mxu0 0
        %1339 = vmatpush1.bf16.msra.mxu0 0
        %1340 = vmatprep.subr.bf16.mxu0 0
        %1341 = vmatpush1.bf16.msra.mxu0 0
        %1342 = vmatprep.subr.bf16.mxu0 0
        %1343 = vmatpush1.bf16.msra.mxu0 0
        %1344 = vmatprep.mubr.bf16.mxu0 0
        %1345 = vmatmul.mubr.bf16.gmra.mrb[0].mxu0 %v1232
        %v1346 = vpop.f32.mrb[0].mxu0
        %v1347 = vadd.f32 0.0, %v1346
        %v1348 = vpop.f32.mrb[0].mxu0
        %v1349 = vpop.f32.mrb[0].mxu0
        %v1350 = vadd.f32 0.0, %v1349
        %v1351 = vpop.f32.mrb[0].mxu0
        %1352 = vmatprep.mubr.bf16.mxu0 0
        %1353 = vmatmul.mubr.bf16.gmra.mrb[0].mxu0 %v1233
        %v1354 = vpop.f32.mrb[0].mxu0
        %v1355 = vadd.f32 0.0, %v1354
        %v1356 = vpop.f32.mrb[0].mxu0
        %v1357 = vpop.f32.mrb[0].mxu0
        %v1358 = vadd.f32 0.0, %v1357
        %v1359 = vpop.f32.mrb[0].mxu0
        %1360 = vmatprep.mubr.bf16.mxu0 0
        %1361 = vmatmul.mubr.bf16.gmra.mrb[0].mxu0 %v1234
        %v1362 = vpop.f32.mrb[0].mxu0
        %v1363 = vadd.f32 0.0, %v1362
        %v1364 = vpop.f32.mrb[0].mxu0
        %v1365 = vpop.f32.mrb[0].mxu0
        %v1366 = vadd.f32 0.0, %v1365
        %v1367 = vpop.f32.mrb[0].mxu0
        %1368 = vmatprep.mubr.bf16.mxu0 0
        %1369 = vmatmul.mubr.bf16.gmra.mrb[0].mxu0 %v1235
        %v1370 = vpop.f32.mrb[0].mxu0
        %v1371 = vadd.f32 0.0, %v1370
        %v1372 = vpop.f32.mrb[0].mxu0
        %v1373 = vpop.f32.mrb[0].mxu0
        %v1374 = vadd.f32 0.0, %v1373
        %v1375 = vpop.f32.mrb[0].mxu0
        %1376 = vmatprep.mubr.bf16.mxu0 0
        %1377 = vmatmul.mubr.bf16.gmra.mrb[0].mxu0 %v1236
        %v1378 = vpop.f32.mrb[0].mxu0
        %v1379 = vadd.f32 0.0, %v1378
        %v1380 = vpop.f32.mrb[0].mxu0
        %v1381 = vpop.f32.mrb[0].mxu0
        %v1382 = vadd.f32 0.0, %v1381
        %v1383 = vpop.f32.mrb[0].mxu0
        %1384 = vmatprep.mubr.bf16.mxu0 0
        %1385 = vmatmul.mubr.bf16.gmra.mrb[0].mxu0 %v1237
        %v1386 = vpop.f32.mrb[0].mxu0
        %v1387 = vadd.f32 0.0, %v1386
        %v1388 = vpop.f32.mrb[0].mxu0
        %v1389 = vpop.f32.mrb[0].mxu0
        %v1390 = vadd.f32 0.0, %v1389
        %v1391 = vpop.f32.mrb[0].mxu0
        %1392 = vmatprep.mubr.bf16.mxu0 0
        %1393 = vmatmul.mubr.bf16.gmra.mrb[0].mxu0 %v1238
        %v1394 = vpop.f32.mrb[0].mxu0
        %v1395 = vadd.f32 0.0, %v1394
        %v1396 = vpop.f32.mrb[0].mxu0
        %v1397 = vpop.f32.mrb[0].mxu0
        %v1398 = vadd.f32 0.0, %v1397
        %v1399 = vpop.f32.mrb[0].mxu0
        %1400 = vmatprep.mubr.bf16.mxu0 0
        %1401 = vmatmul.mubr.bf16.gmra.mrb[0].mxu0 %v1239
        %v1402 = vpop.f32.mrb[0].mxu0
        %v1403 = vadd.f32 0.0, %v1402
        %v1404 = vpop.f32.mrb[0].mxu0
        %v1405 = vpop.f32.mrb[0].mxu0
        %v1406 = vadd.f32 0.0, %v1405
        %v1407 = vpop.f32.mrb[0].mxu0
        %1408 = vmatprep.mubr.bf16.mxu0 0
        %1409 = vmatmul.mubr.bf16.gmra.mrb[0].mxu0 %v1240
        %v1410 = vpop.f32.mrb[0].mxu0
        %v1411 = vadd.f32 0.0, %v1410
        %v1412 = vpop.f32.mrb[0].mxu0
        %v1413 = vpop.f32.mrb[0].mxu0
        %v1414 = vadd.f32 0.0, %v1413
        %v1415 = vpop.f32.mrb[0].mxu0
        %1416 = vmatprep.mubr.bf16.mxu0 0
        %1417 = vmatmul.mubr.bf16.gmra.mrb[0].mxu0 %v1241
        %v1418 = vpop.f32.mrb[0].mxu0
        %v1419 = vadd.f32 0.0, %v1418
        %v1420 = vpop.f32.mrb[0].mxu0
        %v1421 = vpop.f32.mrb[0].mxu0
        %v1422 = vadd.f32 0.0, %v1421
        %v1423 = vpop.f32.mrb[0].mxu0
        %1424 = vmatprep.mubr.bf16.mxu0 0
        %1425 = vmatmul.mubr.bf16.gmra.mrb[0].mxu0 %v1242
        %v1426 = vpop.f32.mrb[0].mxu0
        %v1427 = vadd.f32 0.0, %v1426
        %v1428 = vpop.f32.mrb[0].mxu0
        %v1429 = vpop.f32.mrb[0].mxu0
        %v1430 = vadd.f32 0.0, %v1429
        %v1431 = vpop.f32.mrb[0].mxu0
        %1432 = vmatprep.mubr.bf16.mxu0 0
        %1433 = vmatmul.mubr.bf16.gmra.mrb[0].mxu0 %v1243
        %v1434 = vpop.f32.mrb[0].mxu0
        %v1435 = vadd.f32 0.0, %v1434
        %v1436 = vpop.f32.mrb[0].mxu0
        %v1437 = vpop.f32.mrb[0].mxu0
        %v1438 = vadd.f32 0.0, %v1437
        %v1439 = vpop.f32.mrb[0].mxu0
        %1440 = vmatprep.mubr.bf16.mxu0 0
        %1441 = vmatmul.mubr.bf16.gmra.mrb[0].mxu0 %v1244
        %v1442 = vpop.f32.mrb[0].mxu0
        %v1443 = vadd.f32 0.0, %v1442
        %v1444 = vpop.f32.mrb[0].mxu0
        %v1445 = vpop.f32.mrb[0].mxu0
        %v1446 = vadd.f32 0.0, %v1445
        %v1447 = vpop.f32.mrb[0].mxu0
        %1448 = vmatprep.mubr.bf16.mxu0 0
        %1449 = vmatmul.mubr.bf16.gmra.mrb[0].mxu0 %v1245
        %v1450 = vpop.f32.mrb[0].mxu0
        %v1451 = vadd.f32 0.0, %v1450
        %v1452 = vpop.f32.mrb[0].mxu0
        %v1453 = vpop.f32.mrb[0].mxu0
        %v1454 = vadd.f32 0.0, %v1453
        %v1455 = vpop.f32.mrb[0].mxu0
        %1456 = vmatprep.mubr.bf16.mxu0 0
        %1457 = vmatmul.mubr.bf16.gmra.mrb[0].mxu0 %v1246
        %v1458 = vpop.f32.mrb[0].mxu0
        %v1459 = vadd.f32 0.0, %v1458
        %v1460 = vpop.f32.mrb[0].mxu0
        %v1461 = vpop.f32.mrb[0].mxu0
        %v1462 = vadd.f32 0.0, %v1461
        %v1463 = vpop.f32.mrb[0].mxu0
        %1464 = vmatprep.mubr.bf16.mxu0 0
        %1465 = vmatmul.mubr.bf16.gmra.mrb[0].mxu0 %v1247
        %v1466 = vpop.f32.mrb[0].mxu0
        %v1467 = vadd.f32 0.0, %v1466
        %v1468 = vpop.f32.mrb[0].mxu0
        %v1469 = vpop.f32.mrb[0].mxu0
        %v1470 = vadd.f32 0.0, %v1469
        %v1471 = vpop.f32.mrb[0].mxu0
        %1472 = vdwg.mxu0
        %v1505 = vunpack.c.l.b16 %v732
        %v1506 = vunpack.c.l.b16 %v733
        %v1507 = vunpack.c.l.b16 %v734
        %v1508 = vunpack.c.l.b16 %v735
        %v1509 = vunpack.c.l.b16 %v736
        %v1510 = vunpack.c.l.b16 %v737
        %v1511 = vunpack.c.l.b16 %v738
        %v1512 = vunpack.c.l.b16 %v739
        %v1513 = vunpack.c.l.b16 %v740
        %v1514 = vunpack.c.l.b16 %v741
        %v1515 = vunpack.c.l.b16 %v742
        %v1516 = vunpack.c.l.b16 %v743
        %v1517 = vunpack.c.l.b16 %v744
        %v1518 = vunpack.c.l.b16 %v745
        %v1519 = vunpack.c.l.b16 %v746
        %v1520 = vunpack.c.l.b16 %v747
        %v1521 = vunpack.c.l.b16 %v748
        %v1522 = vunpack.c.l.b16 %v749
        %v1523 = vunpack.c.l.b16 %v750
        %v1524 = vunpack.c.l.b16 %v751
        %v1525 = vunpack.c.l.b16 %v752
        %v1526 = vunpack.c.l.b16 %v753
        %v1527 = vunpack.c.l.b16 %v754
        %v1528 = vunpack.c.l.b16 %v755
        %v1529 = vunpack.c.l.b16 %v756
        %v1530 = vunpack.c.l.b16 %v757
        %v1531 = vunpack.c.l.b16 %v758
        %v1532 = vunpack.c.l.b16 %v759
        %v1533 = vunpack.c.l.b16 %v760
        %v1534 = vunpack.c.l.b16 %v761
        %v1535 = vunpack.c.l.b16 %v762
        %v1536 = vunpack.c.l.b16 %v763
        %v1537 = vpack.c.b16 %v1506, %v1505
        %v1538 = vpack.c.b16 %v1508, %v1507
        %v1539 = vpack.c.b16 %v1510, %v1509
        %v1540 = vpack.c.b16 %v1512, %v1511
        %v1541 = vpack.c.b16 %v1514, %v1513
        %v1542 = vpack.c.b16 %v1516, %v1515
        %v1543 = vpack.c.b16 %v1518, %v1517
        %v1544 = vpack.c.b16 %v1520, %v1519
        %v1545 = vpack.c.b16 %v1522, %v1521
        %v1546 = vpack.c.b16 %v1524, %v1523
        %v1547 = vpack.c.b16 %v1526, %v1525
        %v1548 = vpack.c.b16 %v1528, %v1527
        %v1549 = vpack.c.b16 %v1530, %v1529
        %v1550 = vpack.c.b16 %v1532, %v1531
        %v1551 = vpack.c.b16 %v1534, %v1533
        %v1552 = vpack.c.b16 %v1536, %v1535
        %v1585 = vunpack.c.l.b16 %v764
        %v1586 = vunpack.c.l.b16 %v765
        %v1587 = vunpack.c.l.b16 %v766
        %v1588 = vunpack.c.l.b16 %v767
        %v1589 = vunpack.c.l.b16 %v768
        %v1590 = vunpack.c.l.b16 %v769
        %v1591 = vunpack.c.l.b16 %v770
        %v1592 = vunpack.c.l.b16 %v771
        %v1593 = vunpack.c.l.b16 %v772
        %v1594 = vunpack.c.l.b16 %v773
        %v1595 = vunpack.c.l.b16 %v774
        %v1596 = vunpack.c.l.b16 %v775
        %v1597 = vunpack.c.l.b16 %v776
        %v1598 = vunpack.c.l.b16 %v777
        %v1599 = vunpack.c.l.b16 %v778
        %v1600 = vunpack.c.l.b16 %v779
        %v1601 = vpack.c.b16 %v1586, %v1585
        %v1602 = vpack.c.b16 %v1588, %v1587
        %v1603 = vpack.c.b16 %v1590, %v1589
        %v1604 = vpack.c.b16 %v1592, %v1591
        %v1605 = vpack.c.b16 %v1594, %v1593
        %v1606 = vpack.c.b16 %v1596, %v1595
        %v1607 = vpack.c.b16 %v1598, %v1597
        %v1608 = vpack.c.b16 %v1600, %v1599
        %1617 = vmatprep.subr.bf16.mxu0 0
        %1618 = vmatpush1.bf16.msra.mxu0 %v1601
        %1619 = vmatprep.subr.bf16.mxu0 0
        %1620 = vmatpush1.bf16.msra.mxu0 %v1602
        %1621 = vmatprep.subr.bf16.mxu0 0
        %1622 = vmatpush1.bf16.msra.mxu0 %v1603
        %1623 = vmatprep.subr.bf16.mxu0 0
        %1624 = vmatpush1.bf16.msra.mxu0 %v1604
        %1625 = vmatprep.subr.bf16.mxu0 0
        %1626 = vmatpush1.bf16.msra.mxu0 %v1605
        %1627 = vmatprep.subr.bf16.mxu0 0
        %1628 = vmatpush1.bf16.msra.mxu0 %v1606
        %1629 = vmatprep.subr.bf16.mxu0 0
        %1630 = vmatpush1.bf16.msra.mxu0 %v1607
        %1631 = vmatprep.subr.bf16.mxu0 0
        %1632 = vmatpush1.bf16.msra.mxu0 %v1608
        %1633 = vmatprep.subr.bf16.mxu0 0
        %1634 = vmatpush1.bf16.msra.mxu0 0
        %1635 = vmatprep.subr.bf16.mxu0 0
        %1636 = vmatpush1.bf16.msra.mxu0 0
        %1637 = vmatprep.subr.bf16.mxu0 0
        %1638 = vmatpush1.bf16.msra.mxu0 0
        %1639 = vmatprep.subr.bf16.mxu0 0
        %1640 = vmatpush1.bf16.msra.mxu0 0
        %1641 = vmatprep.subr.bf16.mxu0 0
        %1642 = vmatpush1.bf16.msra.mxu0 0
        %1643 = vmatprep.subr.bf16.mxu0 0
        %1644 = vmatpush1.bf16.msra.mxu0 0
        %1645 = vmatprep.subr.bf16.mxu0 0
        %1646 = vmatpush1.bf16.msra.mxu0 0
        %1647 = vmatprep.subr.bf16.mxu0 0
        %1648 = vmatpush1.bf16.msra.mxu0 0
        %1649 = vmatprep.mubr.bf16.mxu0 0
        %1650 = vmatmul.mubr.bf16.gmra.mrb[0].mxu0 %v1537
        %v1651 = vpop.f32.mrb[0].mxu0
        %v1652 = vadd.f32 %v1347, %v1651
        %v1653 = vpop.f32.mrb[0].mxu0
        %v1654 = vpop.f32.mrb[0].mxu0
        %v1655 = vadd.f32 %v1350, %v1654
        %v1656 = vpop.f32.mrb[0].mxu0
        %1657 = vmatprep.mubr.bf16.mxu0 0
        %1658 = vmatmul.mubr.bf16.gmra.mrb[0].mxu0 %v1538
        %v1659 = vpop.f32.mrb[0].mxu0
        %v1660 = vadd.f32 %v1355, %v1659
        %v1661 = vpop.f32.mrb[0].mxu0
        %v1662 = vpop.f32.mrb[0].mxu0
        %v1663 = vadd.f32 %v1358, %v1662
        %v1664 = vpop.f32.mrb[0].mxu0
        %1665 = vmatprep.mubr.bf16.mxu0 0
        %1666 = vmatmul.mubr.bf16.gmra.mrb[0].mxu0 %v1539
        %v1667 = vpop.f32.mrb[0].mxu0
        %v1668 = vadd.f32 %v1363, %v1667
        %v1669 = vpop.f32.mrb[0].mxu0
        %v1670 = vpop.f32.mrb[0].mxu0
        %v1671 = vadd.f32 %v1366, %v1670
        %v1672 = vpop.f32.mrb[0].mxu0
        %1673 = vmatprep.mubr.bf16.mxu0 0
        %1674 = vmatmul.mubr.bf16.gmra.mrb[0].mxu0 %v1540
        %v1675 = vpop.f32.mrb[0].mxu0
        %v1676 = vadd.f32 %v1371, %v1675
        %v1677 = vpop.f32.mrb[0].mxu0
        %v1678 = vpop.f32.mrb[0].mxu0
        %v1679 = vadd.f32 %v1374, %v1678
        %v1680 = vpop.f32.mrb[0].mxu0
        %1681 = vmatprep.mubr.bf16.mxu0 0
        %1682 = vmatmul.mubr.bf16.gmra.mrb[0].mxu0 %v1541
        %v1683 = vpop.f32.mrb[0].mxu0
        %v1684 = vadd.f32 %v1379, %v1683
        %v1685 = vpop.f32.mrb[0].mxu0
        %v1686 = vpop.f32.mrb[0].mxu0
        %v1687 = vadd.f32 %v1382, %v1686
        %v1688 = vpop.f32.mrb[0].mxu0
        %1689 = vmatprep.mubr.bf16.mxu0 0
        %1690 = vmatmul.mubr.bf16.gmra.mrb[0].mxu0 %v1542
        %v1691 = vpop.f32.mrb[0].mxu0
        %v1692 = vadd.f32 %v1387, %v1691
        %v1693 = vpop.f32.mrb[0].mxu0
        %v1694 = vpop.f32.mrb[0].mxu0
        %v1695 = vadd.f32 %v1390, %v1694
        %v1696 = vpop.f32.mrb[0].mxu0
        %1697 = vmatprep.mubr.bf16.mxu0 0
        %1698 = vmatmul.mubr.bf16.gmra.mrb[0].mxu0 %v1543
        %v1699 = vpop.f32.mrb[0].mxu0
        %v1700 = vadd.f32 %v1395, %v1699
        %v1701 = vpop.f32.mrb[0].mxu0
        %v1702 = vpop.f32.mrb[0].mxu0
        %v1703 = vadd.f32 %v1398, %v1702
        %v1704 = vpop.f32.mrb[0].mxu0
        %1705 = vmatprep.mubr.bf16.mxu0 0
        %1706 = vmatmul.mubr.bf16.gmra.mrb[0].mxu0 %v1544
        %v1707 = vpop.f32.mrb[0].mxu0
        %v1708 = vadd.f32 %v1403, %v1707
        %v1709 = vpop.f32.mrb[0].mxu0
        %v1710 = vpop.f32.mrb[0].mxu0
        %v1711 = vadd.f32 %v1406, %v1710
        %v1712 = vpop.f32.mrb[0].mxu0
        %1713 = vmatprep.mubr.bf16.mxu0 0
        %1714 = vmatmul.mubr.bf16.gmra.mrb[0].mxu0 %v1545
        %v1715 = vpop.f32.mrb[0].mxu0
        %v1716 = vadd.f32 %v1411, %v1715
        %v1717 = vpop.f32.mrb[0].mxu0
        %v1718 = vpop.f32.mrb[0].mxu0
        %v1719 = vadd.f32 %v1414, %v1718
        %v1720 = vpop.f32.mrb[0].mxu0
        %1721 = vmatprep.mubr.bf16.mxu0 0
        %1722 = vmatmul.mubr.bf16.gmra.mrb[0].mxu0 %v1546
        %v1723 = vpop.f32.mrb[0].mxu0
        %v1724 = vadd.f32 %v1419, %v1723
        %v1725 = vpop.f32.mrb[0].mxu0
        %v1726 = vpop.f32.mrb[0].mxu0
        %v1727 = vadd.f32 %v1422, %v1726
        %v1728 = vpop.f32.mrb[0].mxu0
        %1729 = vmatprep.mubr.bf16.mxu0 0
        %1730 = vmatmul.mubr.bf16.gmra.mrb[0].mxu0 %v1547
        %v1731 = vpop.f32.mrb[0].mxu0
        %v1732 = vadd.f32 %v1427, %v1731
        %v1733 = vpop.f32.mrb[0].mxu0
        %v1734 = vpop.f32.mrb[0].mxu0
        %v1735 = vadd.f32 %v1430, %v1734
        %v1736 = vpop.f32.mrb[0].mxu0
        %1737 = vmatprep.mubr.bf16.mxu0 0
        %1738 = vmatmul.mubr.bf16.gmra.mrb[0].mxu0 %v1548
        %v1739 = vpop.f32.mrb[0].mxu0
        %v1740 = vadd.f32 %v1435, %v1739
        %v1741 = vpop.f32.mrb[0].mxu0
        %v1742 = vpop.f32.mrb[0].mxu0
        %v1743 = vadd.f32 %v1438, %v1742
        %v1744 = vpop.f32.mrb[0].mxu0
        %1745 = vmatprep.mubr.bf16.mxu0 0
        %1746 = vmatmul.mubr.bf16.gmra.mrb[0].mxu0 %v1549
        %v1747 = vpop.f32.mrb[0].mxu0
        %v1748 = vadd.f32 %v1443, %v1747
        %v1749 = vpop.f32.mrb[0].mxu0
        %v1750 = vpop.f32.mrb[0].mxu0
        %v1751 = vadd.f32 %v1446, %v1750
        %v1752 = vpop.f32.mrb[0].mxu0
        %1753 = vmatprep.mubr.bf16.mxu0 0
        %1754 = vmatmul.mubr.bf16.gmra.mrb[0].mxu0 %v1550
        %v1755 = vpop.f32.mrb[0].mxu0
        %v1756 = vadd.f32 %v1451, %v1755
        %v1757 = vpop.f32.mrb[0].mxu0
        %v1758 = vpop.f32.mrb[0].mxu0
        %v1759 = vadd.f32 %v1454, %v1758
        %v1760 = vpop.f32.mrb[0].mxu0
        %1761 = vmatprep.mubr.bf16.mxu0 0
        %1762 = vmatmul.mubr.bf16.gmra.mrb[0].mxu0 %v1551
        %v1763 = vpop.f32.mrb[0].mxu0
        %v1764 = vadd.f32 %v1459, %v1763
        %v1765 = vpop.f32.mrb[0].mxu0
        %v1766 = vpop.f32.mrb[0].mxu0
        %v1767 = vadd.f32 %v1462, %v1766
        %v1768 = vpop.f32.mrb[0].mxu0
        %1769 = vmatprep.mubr.bf16.mxu0 0
        %1770 = vmatmul.mubr.bf16.gmra.mrb[0].mxu0 %v1552
        %v1771 = vpop.f32.mrb[0].mxu0
        %v1772 = vadd.f32 %v1467, %v1771
        %v1773 = vpop.f32.mrb[0].mxu0
        %v1774 = vpop.f32.mrb[0].mxu0
        %v1775 = vadd.f32 %v1470, %v1774
        %v1776 = vpop.f32.mrb[0].mxu0
        %1777 = vdwg.mxu0
        %v1778 = vld [vmem:[#allocation2] sm:$0xe]
        %v1779 = vld [vmem:[#allocation2 + $0xc] sm:$0xe]
        %v1780 = vld [vmem:[#allocation2 + $0x18] sm:$0xe]
        %v1781 = vld [vmem:[#allocation2 + $0x24] sm:$0xe]
        %v1782 = vld [vmem:[#allocation2 + $0x30] sm:$0xe]
        %v1783 = vld [vmem:[#allocation2 + $0x3c] sm:$0xe]
        %v1784 = vld [vmem:[#allocation2 + $0x48] sm:$0xe]
        %v1785 = vld [vmem:[#allocation2 + $0x54] sm:$0xe]
        %v1786 = vld [vmem:[#allocation2 + $0x60] sm:$0xe]
        %v1787 = vld [vmem:[#allocation2 + $0x6c] sm:$0xe]
        %v1788 = vld [vmem:[#allocation2 + $0x78] sm:$0xe]
        %v1789 = vld [vmem:[#allocation2 + $0x84] sm:$0xe]
        %v1790 = vld [vmem:[#allocation2 + $0x90] sm:$0xe]
        %v1791 = vld [vmem:[#allocation2 + $0x9c] sm:$0xe]
        %v1792 = vld [vmem:[#allocation2 + $0xa8] sm:$0xe]
        %v1793 = vld [vmem:[#allocation2 + $0xb4] sm:$0xe]
        %vm1826 = vcmask 1042432
        %vm1827 = vcmask 1046532
        %vm1828 = vmor %vm1826, %vm1827
        %v1829 = vrot.slane %v1778, 5
        %v1830 = vrot.slane %v1829, 4
        %v1831 = vrot.slane %v733, 5
        %v1832 = vsel %vm1828, %v1830, %v1831
        %v1833 = vrot.slane %v1831, 4
        %v1834 = vrot.slane %v780, 5
        %v1835 = vsel %vm1828, %v1833, %v1834
        %v1836 = vrot.slane %v1779, 5
        %v1837 = vrot.slane %v1836, 4
        %v1838 = vrot.slane %v735, 5
        %v1839 = vsel %vm1828, %v1837, %v1838
        %v1840 = vrot.slane %v1838, 4
        %v1841 = vrot.slane %v781, 5
        %v1842 = vsel %vm1828, %v1840, %v1841
        %v1843 = vrot.slane %v1780, 5
        %v1844 = vrot.slane %v1843, 4
        %v1845 = vrot.slane %v737, 5
        %v1846 = vsel %vm1828, %v1844, %v1845
        %v1847 = vrot.slane %v1845, 4
        %v1848 = vrot.slane %v782, 5
        %v1849 = vsel %vm1828, %v1847, %v1848
        %v1850 = vrot.slane %v1781, 5
        %v1851 = vrot.slane %v1850, 4
        %v1852 = vrot.slane %v739, 5
        %v1853 = vsel %vm1828, %v1851, %v1852
        %v1854 = vrot.slane %v1852, 4
        %v1855 = vrot.slane %v783, 5
        %v1856 = vsel %vm1828, %v1854, %v1855
        %v1857 = vrot.slane %v1782, 5
        %v1858 = vrot.slane %v1857, 4
        %v1859 = vrot.slane %v741, 5
        %v1860 = vsel %vm1828, %v1858, %v1859
        %v1861 = vrot.slane %v1859, 4
        %v1862 = vrot.slane %v784, 5
        %v1863 = vsel %vm1828, %v1861, %v1862
        %v1864 = vrot.slane %v1783, 5
        %v1865 = vrot.slane %v1864, 4
        %v1866 = vrot.slane %v743, 5
        %v1867 = vsel %vm1828, %v1865, %v1866
        %v1868 = vrot.slane %v1866, 4
        %v1869 = vrot.slane %v785, 5
        %v1870 = vsel %vm1828, %v1868, %v1869
        %v1871 = vrot.slane %v1784, 5
        %v1872 = vrot.slane %v1871, 4
        %v1873 = vrot.slane %v745, 5
        %v1874 = vsel %vm1828, %v1872, %v1873
        %v1875 = vrot.slane %v1873, 4
        %v1876 = vrot.slane %v786, 5
        %v1877 = vsel %vm1828, %v1875, %v1876
        %v1878 = vrot.slane %v1785, 5
        %v1879 = vrot.slane %v1878, 4
        %v1880 = vrot.slane %v747, 5
        %v1881 = vsel %vm1828, %v1879, %v1880
        %v1882 = vrot.slane %v1880, 4
        %v1883 = vrot.slane %v787, 5
        %v1884 = vsel %vm1828, %v1882, %v1883
        %v1885 = vrot.slane %v1786, 5
        %v1886 = vrot.slane %v1885, 4
        %v1887 = vrot.slane %v749, 5
        %v1888 = vsel %vm1828, %v1886, %v1887
        %v1889 = vrot.slane %v1887, 4
        %v1890 = vrot.slane %v788, 5
        %v1891 = vsel %vm1828, %v1889, %v1890
        %v1892 = vrot.slane %v1787, 5
        %v1893 = vrot.slane %v1892, 4
        %v1894 = vrot.slane %v751, 5
        %v1895 = vsel %vm1828, %v1893, %v1894
        %v1896 = vrot.slane %v1894, 4
        %v1897 = vrot.slane %v789, 5
        %v1898 = vsel %vm1828, %v1896, %v1897
        %v1899 = vrot.slane %v1788, 5
        %v1900 = vrot.slane %v1899, 4
        %v1901 = vrot.slane %v753, 5
        %v1902 = vsel %vm1828, %v1900, %v1901
        %v1903 = vrot.slane %v1901, 4
        %v1904 = vrot.slane %v790, 5
        %v1905 = vsel %vm1828, %v1903, %v1904
        %v1906 = vrot.slane %v1789, 5
        %v1907 = vrot.slane %v1906, 4
        %v1908 = vrot.slane %v755, 5
        %v1909 = vsel %vm1828, %v1907, %v1908
        %v1910 = vrot.slane %v1908, 4
        %v1911 = vrot.slane %v791, 5
        %v1912 = vsel %vm1828, %v1910, %v1911
        %v1913 = vrot.slane %v1790, 5
        %v1914 = vrot.slane %v1913, 4
        %v1915 = vrot.slane %v757, 5
        %v1916 = vsel %vm1828, %v1914, %v1915
        %v1917 = vrot.slane %v1915, 4
        %v1918 = vrot.slane %v792, 5
        %v1919 = vsel %vm1828, %v1917, %v1918
        %v1920 = vrot.slane %v1791, 5
        %v1921 = vrot.slane %v1920, 4
        %v1922 = vrot.slane %v759, 5
        %v1923 = vsel %vm1828, %v1921, %v1922
        %v1924 = vrot.slane %v1922, 4
        %v1925 = vrot.slane %v793, 5
        %v1926 = vsel %vm1828, %v1924, %v1925
        %v1927 = vrot.slane %v1792, 5
        %v1928 = vrot.slane %v1927, 4
        %v1929 = vrot.slane %v761, 5
        %v1930 = vsel %vm1828, %v1928, %v1929
        %v1931 = vrot.slane %v1929, 4
        %v1932 = vrot.slane %v794, 5
        %v1933 = vsel %vm1828, %v1931, %v1932
        %v1934 = vrot.slane %v1793, 5
        %v1935 = vrot.slane %v1934, 4
        %v1936 = vrot.slane %v763, 5
        %v1937 = vsel %vm1828, %v1935, %v1936
        %v1938 = vrot.slane %v1936, 4
        %v1939 = vrot.slane %v795, 5
        %v1940 = vsel %vm1828, %v1938, %v1939
        %s1941 = scalar_lea.vmem [#allocation6], 128
        %v1942 = vld [vmem:[%s1941] sm:$0xf]
        %v1943 = vld [vmem:[%s1941 + $0x4] sm:$0xf]
        %v1944 = vld [vmem:[%s1941 + $0x8] sm:$0xf]
        %v1945 = vld [vmem:[%s1941 + $0xc] sm:$0xf]
        %v1946 = vld [vmem:[%s1941 + $0x10] sm:$0xf]
        %v1947 = vld [vmem:[%s1941 + $0x14] sm:$0xf]
        %v1948 = vld [vmem:[%s1941 + $0x18] sm:$0xf]
        %v1949 = vld [vmem:[%s1941 + $0x1c] sm:$0xf]
        %v1950 = vld [vmem:[%s1941 + $0x20] sm:$0xf]
        %v1951 = vld [vmem:[%s1941 + $0x24] sm:$0xf]
        %v1952 = vld [vmem:[%s1941 + $0x28] sm:$0xf]
        %v1953 = vld [vmem:[%s1941 + $0x2c] sm:$0xf]
        %v1954 = vld [vmem:[%s1941 + $0x30] sm:$0xf]
        %v1955 = vld [vmem:[%s1941 + $0x34] sm:$0xf]
        %v1956 = vld [vmem:[%s1941 + $0x38] sm:$0xf]
        %v1957 = vld [vmem:[%s1941 + $0x3c] sm:$0xf]
        %v1958 = vunpack.c.l.b16 %v1832
        %v1959 = vunpack.c.l.b16 %v1835
        %v1960 = vunpack.c.l.b16 %v1839
        %v1961 = vunpack.c.l.b16 %v1842
        %v1962 = vunpack.c.l.b16 %v1846
        %v1963 = vunpack.c.l.b16 %v1849
        %v1964 = vunpack.c.l.b16 %v1853
        %v1965 = vunpack.c.l.b16 %v1856
        %v1966 = vunpack.c.l.b16 %v1860
        %v1967 = vunpack.c.l.b16 %v1863
        %v1968 = vunpack.c.l.b16 %v1867
        %v1969 = vunpack.c.l.b16 %v1870
        %v1970 = vunpack.c.l.b16 %v1874
        %v1971 = vunpack.c.l.b16 %v1877
        %v1972 = vunpack.c.l.b16 %v1881
        %v1973 = vunpack.c.l.b16 %v1884
        %v1974 = vunpack.c.l.b16 %v1888
        %v1975 = vunpack.c.l.b16 %v1891
        %v1976 = vunpack.c.l.b16 %v1895
        %v1977 = vunpack.c.l.b16 %v1898
        %v1978 = vunpack.c.l.b16 %v1902
        %v1979 = vunpack.c.l.b16 %v1905
        %v1980 = vunpack.c.l.b16 %v1909
        %v1981 = vunpack.c.l.b16 %v1912
        %v1982 = vunpack.c.l.b16 %v1916
        %v1983 = vunpack.c.l.b16 %v1919
        %v1984 = vunpack.c.l.b16 %v1923
        %v1985 = vunpack.c.l.b16 %v1926
        %v1986 = vunpack.c.l.b16 %v1930
        %v1987 = vunpack.c.l.b16 %v1933
        %v1988 = vunpack.c.l.b16 %v1937
        %v1989 = vunpack.c.l.b16 %v1940
        %v1990 = vpack.c.b16 %v1959, %v1958
        %v1991 = vpack.c.b16 %v1961, %v1960
        %v1992 = vpack.c.b16 %v1963, %v1962
        %v1993 = vpack.c.b16 %v1965, %v1964
        %v1994 = vpack.c.b16 %v1967, %v1966
        %v1995 = vpack.c.b16 %v1969, %v1968
        %v1996 = vpack.c.b16 %v1971, %v1970
        %v1997 = vpack.c.b16 %v1973, %v1972
        %v1998 = vpack.c.b16 %v1975, %v1974
        %v1999 = vpack.c.b16 %v1977, %v1976
        %v2000 = vpack.c.b16 %v1979, %v1978
        %v2001 = vpack.c.b16 %v1981, %v1980
        %v2002 = vpack.c.b16 %v1983, %v1982
        %v2003 = vpack.c.b16 %v1985, %v1984
        %v2004 = vpack.c.b16 %v1987, %v1986
        %v2005 = vpack.c.b16 %v1989, %v1988
        %v2038 = vunpack.c.l.b16 %v1942
        %v2039 = vunpack.c.l.b16 %v1943
        %v2040 = vunpack.c.l.b16 %v1944
        %v2041 = vunpack.c.l.b16 %v1945
        %v2042 = vunpack.c.l.b16 %v1946
        %v2043 = vunpack.c.l.b16 %v1947
        %v2044 = vunpack.c.l.b16 %v1948
        %v2045 = vunpack.c.l.b16 %v1949
        %v2046 = vunpack.c.l.b16 %v1950
        %v2047 = vunpack.c.l.b16 %v1951
        %v2048 = vunpack.c.l.b16 %v1952
        %v2049 = vunpack.c.l.b16 %v1953
        %v2050 = vunpack.c.l.b16 %v1954
        %v2051 = vunpack.c.l.b16 %v1955
        %v2052 = vunpack.c.l.b16 %v1956
        %v2053 = vunpack.c.l.b16 %v1957
        %v2054 = vpack.c.b16 %v2039, %v2038
        %v2055 = vpack.c.b16 %v2041, %v2040
        %v2056 = vpack.c.b16 %v2043, %v2042
        %v2057 = vpack.c.b16 %v2045, %v2044
        %v2058 = vpack.c.b16 %v2047, %v2046
        %v2059 = vpack.c.b16 %v2049, %v2048
        %v2060 = vpack.c.b16 %v2051, %v2050
        %v2061 = vpack.c.b16 %v2053, %v2052
        %2070 = vmatprep.subr.bf16.mxu0 0
        %2071 = vmatpush1.bf16.msra.mxu0 %v2054
        %2072 = vmatprep.subr.bf16.mxu0 0
        %2073 = vmatpush1.bf16.msra.mxu0 %v2055
        %2074 = vmatprep.subr.bf16.mxu0 0
        %2075 = vmatpush1.bf16.msra.mxu0 %v2056
        %2076 = vmatprep.subr.bf16.mxu0 0
        %2077 = vmatpush1.bf16.msra.mxu0 %v2057
        %2078 = vmatprep.subr.bf16.mxu0 0
        %2079 = vmatpush1.bf16.msra.mxu0 %v2058
        %2080 = vmatprep.subr.bf16.mxu0 0
        %2081 = vmatpush1.bf16.msra.mxu0 %v2059
        %2082 = vmatprep.subr.bf16.mxu0 0
        %2083 = vmatpush1.bf16.msra.mxu0 %v2060
        %2084 = vmatprep.subr.bf16.mxu0 0
        %2085 = vmatpush1.bf16.msra.mxu0 %v2061
        %2086 = vmatprep.subr.bf16.mxu0 0
        %2087 = vmatpush1.bf16.msra.mxu0 0
        %2088 = vmatprep.subr.bf16.mxu0 0
        %2089 = vmatpush1.bf16.msra.mxu0 0
        %2090 = vmatprep.subr.bf16.mxu0 0
        %2091 = vmatpush1.bf16.msra.mxu0 0
        %2092 = vmatprep.subr.bf16.mxu0 0
        %2093 = vmatpush1.bf16.msra.mxu0 0
        %2094 = vmatprep.subr.bf16.mxu0 0
        %2095 = vmatpush1.bf16.msra.mxu0 0
        %2096 = vmatprep.subr.bf16.mxu0 0
        %2097 = vmatpush1.bf16.msra.mxu0 0
        %2098 = vmatprep.subr.bf16.mxu0 0
        %2099 = vmatpush1.bf16.msra.mxu0 0
        %2100 = vmatprep.subr.bf16.mxu0 0
        %2101 = vmatpush1.bf16.msra.mxu0 0
        %2102 = vmatprep.mubr.bf16.mxu0 0
        %2103 = vmatmul.mubr.bf16.gmra.mrb[0].mxu0 %v1990
        %v2104 = vpop.f32.mrb[0].mxu0
        %v2105 = vadd.f32 0.0, %v2104
        %v2106 = vpop.f32.mrb[0].mxu0
        %v2107 = vpop.f32.mrb[0].mxu0
        %v2108 = vadd.f32 0.0, %v2107
        %v2109 = vpop.f32.mrb[0].mxu0
        %2110 = vmatprep.mubr.bf16.mxu0 0
        %2111 = vmatmul.mubr.bf16.gmra.mrb[0].mxu0 %v1991
        %v2112 = vpop.f32.mrb[0].mxu0
        %v2113 = vadd.f32 0.0, %v2112
        %v2114 = vpop.f32.mrb[0].mxu0
        %v2115 = vpop.f32.mrb[0].mxu0
        %v2116 = vadd.f32 0.0, %v2115
        %v2117 = vpop.f32.mrb[0].mxu0
        %2118 = vmatprep.mubr.bf16.mxu0 0
        %2119 = vmatmul.mubr.bf16.gmra.mrb[0].mxu0 %v1992
        %v2120 = vpop.f32.mrb[0].mxu0
        %v2121 = vadd.f32 0.0, %v2120
        %v2122 = vpop.f32.mrb[0].mxu0
        %v2123 = vpop.f32.mrb[0].mxu0
        %v2124 = vadd.f32 0.0, %v2123
        %v2125 = vpop.f32.mrb[0].mxu0
        %2126 = vmatprep.mubr.bf16.mxu0 0
        %2127 = vmatmul.mubr.bf16.gmra.mrb[0].mxu0 %v1993
        %v2128 = vpop.f32.mrb[0].mxu0
        %v2129 = vadd.f32 0.0, %v2128
        %v2130 = vpop.f32.mrb[0].mxu0
        %v2131 = vpop.f32.mrb[0].mxu0
        %v2132 = vadd.f32 0.0, %v2131
        %v2133 = vpop.f32.mrb[0].mxu0
        %2134 = vmatprep.mubr.bf16.mxu0 0
        %2135 = vmatmul.mubr.bf16.gmra.mrb[0].mxu0 %v1994
        %v2136 = vpop.f32.mrb[0].mxu0
        %v2137 = vadd.f32 0.0, %v2136
        %v2138 = vpop.f32.mrb[0].mxu0
        %v2139 = vpop.f32.mrb[0].mxu0
        %v2140 = vadd.f32 0.0, %v2139
        %v2141 = vpop.f32.mrb[0].mxu0
        %2142 = vmatprep.mubr.bf16.mxu0 0
        %2143 = vmatmul.mubr.bf16.gmra.mrb[0].mxu0 %v1995
        %v2144 = vpop.f32.mrb[0].mxu0
        %v2145 = vadd.f32 0.0, %v2144
        %v2146 = vpop.f32.mrb[0].mxu0
        %v2147 = vpop.f32.mrb[0].mxu0
        %v2148 = vadd.f32 0.0, %v2147
        %v2149 = vpop.f32.mrb[0].mxu0
        %2150 = vmatprep.mubr.bf16.mxu0 0
        %2151 = vmatmul.mubr.bf16.gmra.mrb[0].mxu0 %v1996
        %v2152 = vpop.f32.mrb[0].mxu0
        %v2153 = vadd.f32 0.0, %v2152
        %v2154 = vpop.f32.mrb[0].mxu0
        %v2155 = vpop.f32.mrb[0].mxu0
        %v2156 = vadd.f32 0.0, %v2155
        %v2157 = vpop.f32.mrb[0].mxu0
        %2158 = vmatprep.mubr.bf16.mxu0 0
        %2159 = vmatmul.mubr.bf16.gmra.mrb[0].mxu0 %v1997
        %v2160 = vpop.f32.mrb[0].mxu0
        %v2161 = vadd.f32 0.0, %v2160
        %v2162 = vpop.f32.mrb[0].mxu0
        %v2163 = vpop.f32.mrb[0].mxu0
        %v2164 = vadd.f32 0.0, %v2163
        %v2165 = vpop.f32.mrb[0].mxu0
        %2166 = vmatprep.mubr.bf16.mxu0 0
        %2167 = vmatmul.mubr.bf16.gmra.mrb[0].mxu0 %v1998
        %v2168 = vpop.f32.mrb[0].mxu0
        %v2169 = vadd.f32 0.0, %v2168
        %v2170 = vpop.f32.mrb[0].mxu0
        %v2171 = vpop.f32.mrb[0].mxu0
        %v2172 = vadd.f32 0.0, %v2171
        %v2173 = vpop.f32.mrb[0].mxu0
        %2174 = vmatprep.mubr.bf16.mxu0 0
        %2175 = vmatmul.mubr.bf16.gmra.mrb[0].mxu0 %v1999
        %v2176 = vpop.f32.mrb[0].mxu0
        %v2177 = vadd.f32 0.0, %v2176
        %v2178 = vpop.f32.mrb[0].mxu0
        %v2179 = vpop.f32.mrb[0].mxu0
        %v2180 = vadd.f32 0.0, %v2179
        %v2181 = vpop.f32.mrb[0].mxu0
        %2182 = vmatprep.mubr.bf16.mxu0 0
        %2183 = vmatmul.mubr.bf16.gmra.mrb[0].mxu0 %v2000
        %v2184 = vpop.f32.mrb[0].mxu0
        %v2185 = vadd.f32 0.0, %v2184
        %v2186 = vpop.f32.mrb[0].mxu0
        %v2187 = vpop.f32.mrb[0].mxu0
        %v2188 = vadd.f32 0.0, %v2187
        %v2189 = vpop.f32.mrb[0].mxu0
        %2190 = vmatprep.mubr.bf16.mxu0 0
        %2191 = vmatmul.mubr.bf16.gmra.mrb[0].mxu0 %v2001
        %v2192 = vpop.f32.mrb[0].mxu0
        %v2193 = vadd.f32 0.0, %v2192
        %v2194 = vpop.f32.mrb[0].mxu0
        %v2195 = vpop.f32.mrb[0].mxu0
        %v2196 = vadd.f32 0.0, %v2195
        %v2197 = vpop.f32.mrb[0].mxu0
        %2198 = vmatprep.mubr.bf16.mxu0 0
        %2199 = vmatmul.mubr.bf16.gmra.mrb[0].mxu0 %v2002
        %v2200 = vpop.f32.mrb[0].mxu0
        %v2201 = vadd.f32 0.0, %v2200
        %v2202 = vpop.f32.mrb[0].mxu0
        %v2203 = vpop.f32.mrb[0].mxu0
        %v2204 = vadd.f32 0.0, %v2203
        %v2205 = vpop.f32.mrb[0].mxu0
        %2206 = vmatprep.mubr.bf16.mxu0 0
        %2207 = vmatmul.mubr.bf16.gmra.mrb[0].mxu0 %v2003
        %v2208 = vpop.f32.mrb[0].mxu0
        %v2209 = vadd.f32 0.0, %v2208
        %v2210 = vpop.f32.mrb[0].mxu0
        %v2211 = vpop.f32.mrb[0].mxu0
        %v2212 = vadd.f32 0.0, %v2211
        %v2213 = vpop.f32.mrb[0].mxu0
        %2214 = vmatprep.mubr.bf16.mxu0 0
        %2215 = vmatmul.mubr.bf16.gmra.mrb[0].mxu0 %v2004
        %v2216 = vpop.f32.mrb[0].mxu0
        %v2217 = vadd.f32 0.0, %v2216
        %v2218 = vpop.f32.mrb[0].mxu0
        %v2219 = vpop.f32.mrb[0].mxu0
        %v2220 = vadd.f32 0.0, %v2219
        %v2221 = vpop.f32.mrb[0].mxu0
        %2222 = vmatprep.mubr.bf16.mxu0 0
        %2223 = vmatmul.mubr.bf16.gmra.mrb[0].mxu0 %v2005
        %v2224 = vpop.f32.mrb[0].mxu0
        %v2225 = vadd.f32 0.0, %v2224
        %v2226 = vpop.f32.mrb[0].mxu0
        %v2227 = vpop.f32.mrb[0].mxu0
        %v2228 = vadd.f32 0.0, %v2227
        %v2229 = vpop.f32.mrb[0].mxu0
        %2230 = vdwg.mxu0
        %v2231 = vadd.f32 %v1652, %v2105
        %v2232 = vadd.f32 %v1655, %v2108
        %v2233 = vadd.f32 %v1660, %v2113
        %v2234 = vadd.f32 %v1663, %v2116
        %v2235 = vadd.f32 %v1668, %v2121
        %v2236 = vadd.f32 %v1671, %v2124
        %v2237 = vadd.f32 %v1676, %v2129
        %v2238 = vadd.f32 %v1679, %v2132
        %v2239 = vadd.f32 %v1684, %v2137
        %v2240 = vadd.f32 %v1687, %v2140
        %v2241 = vadd.f32 %v1692, %v2145
        %v2242 = vadd.f32 %v1695, %v2148
        %v2243 = vadd.f32 %v1700, %v2153
        %v2244 = vadd.f32 %v1703, %v2156
        %v2245 = vadd.f32 %v1708, %v2161
        %v2246 = vadd.f32 %v1711, %v2164
        %v2247 = vadd.f32 %v1716, %v2169
        %v2248 = vadd.f32 %v1719, %v2172
        %v2249 = vadd.f32 %v1724, %v2177
        %v2250 = vadd.f32 %v1727, %v2180
        %v2251 = vadd.f32 %v1732, %v2185
        %v2252 = vadd.f32 %v1735, %v2188
        %v2253 = vadd.f32 %v1740, %v2193
        %v2254 = vadd.f32 %v1743, %v2196
        %v2255 = vadd.f32 %v1748, %v2201
        %v2256 = vadd.f32 %v1751, %v2204
        %v2257 = vadd.f32 %v1756, %v2209
        %v2258 = vadd.f32 %v1759, %v2212
        %v2259 = vadd.f32 %v1764, %v2217
        %v2260 = vadd.f32 %v1767, %v2220
        %v2261 = vadd.f32 %v1772, %v2225
        %v2262 = vadd.f32 %v1775, %v2228
        %v2263 = vld [vmem:[%s614] sm:$0xf]
        %v2264 = vld [vmem:[%s614 + $0x4] sm:$0xf]
        %v2265 = vld [vmem:[%s614 + $0xc] sm:$0xf]
        %v2266 = vld [vmem:[%s614 + $0x10] sm:$0xf]
        %v2267 = vld [vmem:[%s614 + $0x18] sm:$0xf]
        %v2268 = vld [vmem:[%s614 + $0x1c] sm:$0xf]
        %v2269 = vld [vmem:[%s614 + $0x24] sm:$0xf]
        %v2270 = vld [vmem:[%s614 + $0x28] sm:$0xf]
        %v2271 = vld [vmem:[%s614 + $0x30] sm:$0xf]
        %v2272 = vld [vmem:[%s614 + $0x34] sm:$0xf]
        %v2273 = vld [vmem:[%s614 + $0x3c] sm:$0xf]
        %v2274 = vld [vmem:[%s614 + $0x40] sm:$0xf]
        %v2275 = vld [vmem:[%s614 + $0x48] sm:$0xf]
        %v2276 = vld [vmem:[%s614 + $0x4c] sm:$0xf]
        %v2277 = vld [vmem:[%s614 + $0x54] sm:$0xf]
        %v2278 = vld [vmem:[%s614 + $0x58] sm:$0xf]
        %v2279 = vld [vmem:[%s614 + $0x60] sm:$0xf]
        %v2280 = vld [vmem:[%s614 + $0x64] sm:$0xf]
        %v2281 = vld [vmem:[%s614 + $0x6c] sm:$0xf]
        %v2282 = vld [vmem:[%s614 + $0x70] sm:$0xf]
        %v2283 = vld [vmem:[%s614 + $0x78] sm:$0xf]
        %v2284 = vld [vmem:[%s614 + $0x7c] sm:$0xf]
        %v2285 = vld [vmem:[%s614 + $0x84] sm:$0xf]
        %v2286 = vld [vmem:[%s614 + $0x88] sm:$0xf]
        %v2287 = vld [vmem:[%s614 + $0x90] sm:$0xf]
        %v2288 = vld [vmem:[%s614 + $0x94] sm:$0xf]
        %v2289 = vld [vmem:[%s614 + $0x9c] sm:$0xf]
        %v2290 = vld [vmem:[%s614 + $0xa0] sm:$0xf]
        %v2291 = vld [vmem:[%s614 + $0xa8] sm:$0xf]
        %v2292 = vld [vmem:[%s614 + $0xac] sm:$0xf]
        %v2293 = vld [vmem:[%s614 + $0xb4] sm:$0xf]
        %v2294 = vld [vmem:[%s614 + $0xb8] sm:$0xf]
        %s2295 = scalar_lea.vmem [#allocation6], 192
        %v2296 = vld [vmem:[%s2295] sm:$0xf]
        %v2297 = vld [vmem:[%s2295 + $0x4] sm:$0xf]
        %v2298 = vld [vmem:[%s2295 + $0x8] sm:$0xf]
        %v2299 = vld [vmem:[%s2295 + $0xc] sm:$0xf]
        %v2300 = vld [vmem:[%s2295 + $0x10] sm:$0xf]
        %v2301 = vld [vmem:[%s2295 + $0x14] sm:$0xf]
        %v2302 = vld [vmem:[%s2295 + $0x18] sm:$0xf]
        %v2303 = vld [vmem:[%s2295 + $0x1c] sm:$0xf]
        %v2304 = vld [vmem:[%s2295 + $0x20] sm:$0xf]
        %v2305 = vld [vmem:[%s2295 + $0x24] sm:$0xf]
        %v2306 = vld [vmem:[%s2295 + $0x28] sm:$0xf]
        %v2307 = vld [vmem:[%s2295 + $0x2c] sm:$0xf]
        %v2308 = vld [vmem:[%s2295 + $0x30] sm:$0xf]
        %v2309 = vld [vmem:[%s2295 + $0x34] sm:$0xf]
        %v2310 = vld [vmem:[%s2295 + $0x38] sm:$0xf]
        %v2311 = vld [vmem:[%s2295 + $0x3c] sm:$0xf]
        %v2344 = vunpack.c.l.b16 %v2263
        %v2345 = vunpack.c.l.b16 %v2264
        %v2346 = vunpack.c.l.b16 %v2265
        %v2347 = vunpack.c.l.b16 %v2266
        %v2348 = vunpack.c.l.b16 %v2267
        %v2349 = vunpack.c.l.b16 %v2268
        %v2350 = vunpack.c.l.b16 %v2269
        %v2351 = vunpack.c.l.b16 %v2270
        %v2352 = vunpack.c.l.b16 %v2271
        %v2353 = vunpack.c.l.b16 %v2272
        %v2354 = vunpack.c.l.b16 %v2273
        %v2355 = vunpack.c.l.b16 %v2274
        %v2356 = vunpack.c.l.b16 %v2275
        %v2357 = vunpack.c.l.b16 %v2276
        %v2358 = vunpack.c.l.b16 %v2277
        %v2359 = vunpack.c.l.b16 %v2278
        %v2360 = vunpack.c.l.b16 %v2279
        %v2361 = vunpack.c.l.b16 %v2280
        %v2362 = vunpack.c.l.b16 %v2281
        %v2363 = vunpack.c.l.b16 %v2282
        %v2364 = vunpack.c.l.b16 %v2283
        %v2365 = vunpack.c.l.b16 %v2284
        %v2366 = vunpack.c.l.b16 %v2285
        %v2367 = vunpack.c.l.b16 %v2286
        %v2368 = vunpack.c.l.b16 %v2287
        %v2369 = vunpack.c.l.b16 %v2288
        %v2370 = vunpack.c.l.b16 %v2289
        %v2371 = vunpack.c.l.b16 %v2290
        %v2372 = vunpack.c.l.b16 %v2291
        %v2373 = vunpack.c.l.b16 %v2292
        %v2374 = vunpack.c.l.b16 %v2293
        %v2375 = vunpack.c.l.b16 %v2294
        %v2376 = vpack.c.b16 %v2345, %v2344
        %v2377 = vpack.c.b16 %v2347, %v2346
        %v2378 = vpack.c.b16 %v2349, %v2348
        %v2379 = vpack.c.b16 %v2351, %v2350
        %v2380 = vpack.c.b16 %v2353, %v2352
        %v2381 = vpack.c.b16 %v2355, %v2354
        %v2382 = vpack.c.b16 %v2357, %v2356
        %v2383 = vpack.c.b16 %v2359, %v2358
        %v2384 = vpack.c.b16 %v2361, %v2360
        %v2385 = vpack.c.b16 %v2363, %v2362
        %v2386 = vpack.c.b16 %v2365, %v2364
        %v2387 = vpack.c.b16 %v2367, %v2366
        %v2388 = vpack.c.b16 %v2369, %v2368
        %v2389 = vpack.c.b16 %v2371, %v2370
        %v2390 = vpack.c.b16 %v2373, %v2372
        %v2391 = vpack.c.b16 %v2375, %v2374
        %v2424 = vunpack.c.l.b16 %v2296
        %v2425 = vunpack.c.l.b16 %v2297
        %v2426 = vunpack.c.l.b16 %v2298
        %v2427 = vunpack.c.l.b16 %v2299
        %v2428 = vunpack.c.l.b16 %v2300
        %v2429 = vunpack.c.l.b16 %v2301
        %v2430 = vunpack.c.l.b16 %v2302
        %v2431 = vunpack.c.l.b16 %v2303
        %v2432 = vunpack.c.l.b16 %v2304
        %v2433 = vunpack.c.l.b16 %v2305
        %v2434 = vunpack.c.l.b16 %v2306
        %v2435 = vunpack.c.l.b16 %v2307
        %v2436 = vunpack.c.l.b16 %v2308
        %v2437 = vunpack.c.l.b16 %v2309
        %v2438 = vunpack.c.l.b16 %v2310
        %v2439 = vunpack.c.l.b16 %v2311
        %v2440 = vpack.c.b16 %v2425, %v2424
        %v2441 = vpack.c.b16 %v2427, %v2426
        %v2442 = vpack.c.b16 %v2429, %v2428
        %v2443 = vpack.c.b16 %v2431, %v2430
        %v2444 = vpack.c.b16 %v2433, %v2432
        %v2445 = vpack.c.b16 %v2435, %v2434
        %v2446 = vpack.c.b16 %v2437, %v2436
        %v2447 = vpack.c.b16 %v2439, %v2438
        %2456 = vmatprep.subr.bf16.mxu0 0
        %2457 = vmatpush1.bf16.msra.mxu0 %v2440
        %2458 = vmatprep.subr.bf16.mxu0 0
        %2459 = vmatpush1.bf16.msra.mxu0 %v2441
        %2460 = vmatprep.subr.bf16.mxu0 0
        %2461 = vmatpush1.bf16.msra.mxu0 %v2442
        %2462 = vmatprep.subr.bf16.mxu0 0
        %2463 = vmatpush1.bf16.msra.mxu0 %v2443
        %2464 = vmatprep.subr.bf16.mxu0 0
        %2465 = vmatpush1.bf16.msra.mxu0 %v2444
        %2466 = vmatprep.subr.bf16.mxu0 0
        %2467 = vmatpush1.bf16.msra.mxu0 %v2445
        %2468 = vmatprep.subr.bf16.mxu0 0
        %2469 = vmatpush1.bf16.msra.mxu0 %v2446
        %2470 = vmatprep.subr.bf16.mxu0 0
        %2471 = vmatpush1.bf16.msra.mxu0 %v2447
        %2472 = vmatprep.subr.bf16.mxu0 0
        %2473 = vmatpush1.bf16.msra.mxu0 0
        %2474 = vmatprep.subr.bf16.mxu0 0
        %2475 = vmatpush1.bf16.msra.mxu0 0
        %2476 = vmatprep.subr.bf16.mxu0 0
        %2477 = vmatpush1.bf16.msra.mxu0 0
        %2478 = vmatprep.subr.bf16.mxu0 0
        %2479 = vmatpush1.bf16.msra.mxu0 0
        %2480 = vmatprep.subr.bf16.mxu0 0
        %2481 = vmatpush1.bf16.msra.mxu0 0
        %2482 = vmatprep.subr.bf16.mxu0 0
        %2483 = vmatpush1.bf16.msra.mxu0 0
        %2484 = vmatprep.subr.bf16.mxu0 0
        %2485 = vmatpush1.bf16.msra.mxu0 0
        %2486 = vmatprep.subr.bf16.mxu0 0
        %2487 = vmatpush1.bf16.msra.mxu0 0
        %2488 = vmatprep.mubr.bf16.mxu0 0
        %2489 = vmatmul.mubr.bf16.gmra.mrb[0].mxu0 %v2376
        %v2490 = vpop.f32.mrb[0].mxu0
        %v2491 = vadd.f32 0.0, %v2490
        %v2492 = vpop.f32.mrb[0].mxu0
        %v2493 = vpop.f32.mrb[0].mxu0
        %v2494 = vadd.f32 0.0, %v2493
        %v2495 = vpop.f32.mrb[0].mxu0
        %2496 = vmatprep.mubr.bf16.mxu0 0
        %2497 = vmatmul.mubr.bf16.gmra.mrb[0].mxu0 %v2377
        %v2498 = vpop.f32.mrb[0].mxu0
        %v2499 = vadd.f32 0.0, %v2498
        %v2500 = vpop.f32.mrb[0].mxu0
        %v2501 = vpop.f32.mrb[0].mxu0
        %v2502 = vadd.f32 0.0, %v2501
        %v2503 = vpop.f32.mrb[0].mxu0
        %2504 = vmatprep.mubr.bf16.mxu0 0
        %2505 = vmatmul.mubr.bf16.gmra.mrb[0].mxu0 %v2378
        %v2506 = vpop.f32.mrb[0].mxu0
        %v2507 = vadd.f32 0.0, %v2506
        %v2508 = vpop.f32.mrb[0].mxu0
        %v2509 = vpop.f32.mrb[0].mxu0
        %v2510 = vadd.f32 0.0, %v2509
        %v2511 = vpop.f32.mrb[0].mxu0
        %2512 = vmatprep.mubr.bf16.mxu0 0
        %2513 = vmatmul.mubr.bf16.gmra.mrb[0].mxu0 %v2379
        %v2514 = vpop.f32.mrb[0].mxu0
        %v2515 = vadd.f32 0.0, %v2514
        %v2516 = vpop.f32.mrb[0].mxu0
        %v2517 = vpop.f32.mrb[0].mxu0
        %v2518 = vadd.f32 0.0, %v2517
        %v2519 = vpop.f32.mrb[0].mxu0
        %2520 = vmatprep.mubr.bf16.mxu0 0
        %2521 = vmatmul.mubr.bf16.gmra.mrb[0].mxu0 %v2380
        %v2522 = vpop.f32.mrb[0].mxu0
        %v2523 = vadd.f32 0.0, %v2522
        %v2524 = vpop.f32.mrb[0].mxu0
        %v2525 = vpop.f32.mrb[0].mxu0
        %v2526 = vadd.f32 0.0, %v2525
        %v2527 = vpop.f32.mrb[0].mxu0
        %2528 = vmatprep.mubr.bf16.mxu0 0
        %2529 = vmatmul.mubr.bf16.gmra.mrb[0].mxu0 %v2381
        %v2530 = vpop.f32.mrb[0].mxu0
        %v2531 = vadd.f32 0.0, %v2530
        %v2532 = vpop.f32.mrb[0].mxu0
        %v2533 = vpop.f32.mrb[0].mxu0
        %v2534 = vadd.f32 0.0, %v2533
        %v2535 = vpop.f32.mrb[0].mxu0
        %2536 = vmatprep.mubr.bf16.mxu0 0
        %2537 = vmatmul.mubr.bf16.gmra.mrb[0].mxu0 %v2382
        %v2538 = vpop.f32.mrb[0].mxu0
        %v2539 = vadd.f32 0.0, %v2538
        %v2540 = vpop.f32.mrb[0].mxu0
        %v2541 = vpop.f32.mrb[0].mxu0
        %v2542 = vadd.f32 0.0, %v2541
        %v2543 = vpop.f32.mrb[0].mxu0
        %2544 = vmatprep.mubr.bf16.mxu0 0
        %2545 = vmatmul.mubr.bf16.gmra.mrb[0].mxu0 %v2383
        %v2546 = vpop.f32.mrb[0].mxu0
        %v2547 = vadd.f32 0.0, %v2546
        %v2548 = vpop.f32.mrb[0].mxu0
        %v2549 = vpop.f32.mrb[0].mxu0
        %v2550 = vadd.f32 0.0, %v2549
        %v2551 = vpop.f32.mrb[0].mxu0
        %2552 = vmatprep.mubr.bf16.mxu0 0
        %2553 = vmatmul.mubr.bf16.gmra.mrb[0].mxu0 %v2384
        %v2554 = vpop.f32.mrb[0].mxu0
        %v2555 = vadd.f32 0.0, %v2554
        %v2556 = vpop.f32.mrb[0].mxu0
        %v2557 = vpop.f32.mrb[0].mxu0
        %v2558 = vadd.f32 0.0, %v2557
        %v2559 = vpop.f32.mrb[0].mxu0
        %2560 = vmatprep.mubr.bf16.mxu0 0
        %2561 = vmatmul.mubr.bf16.gmra.mrb[0].mxu0 %v2385
        %v2562 = vpop.f32.mrb[0].mxu0
        %v2563 = vadd.f32 0.0, %v2562
        %v2564 = vpop.f32.mrb[0].mxu0
        %v2565 = vpop.f32.mrb[0].mxu0
        %v2566 = vadd.f32 0.0, %v2565
        %v2567 = vpop.f32.mrb[0].mxu0
        %2568 = vmatprep.mubr.bf16.mxu0 0
        %2569 = vmatmul.mubr.bf16.gmra.mrb[0].mxu0 %v2386
        %v2570 = vpop.f32.mrb[0].mxu0
        %v2571 = vadd.f32 0.0, %v2570
        %v2572 = vpop.f32.mrb[0].mxu0
        %v2573 = vpop.f32.mrb[0].mxu0
        %v2574 = vadd.f32 0.0, %v2573
        %v2575 = vpop.f32.mrb[0].mxu0
        %2576 = vmatprep.mubr.bf16.mxu0 0
        %2577 = vmatmul.mubr.bf16.gmra.mrb[0].mxu0 %v2387
        %v2578 = vpop.f32.mrb[0].mxu0
        %v2579 = vadd.f32 0.0, %v2578
        %v2580 = vpop.f32.mrb[0].mxu0
        %v2581 = vpop.f32.mrb[0].mxu0
        %v2582 = vadd.f32 0.0, %v2581
        %v2583 = vpop.f32.mrb[0].mxu0
        %2584 = vmatprep.mubr.bf16.mxu0 0
        %2585 = vmatmul.mubr.bf16.gmra.mrb[0].mxu0 %v2388
        %v2586 = vpop.f32.mrb[0].mxu0
        %v2587 = vadd.f32 0.0, %v2586
        %v2588 = vpop.f32.mrb[0].mxu0
        %v2589 = vpop.f32.mrb[0].mxu0
        %v2590 = vadd.f32 0.0, %v2589
        %v2591 = vpop.f32.mrb[0].mxu0
        %2592 = vmatprep.mubr.bf16.mxu0 0
        %2593 = vmatmul.mubr.bf16.gmra.mrb[0].mxu0 %v2389
        %v2594 = vpop.f32.mrb[0].mxu0
        %v2595 = vadd.f32 0.0, %v2594
        %v2596 = vpop.f32.mrb[0].mxu0
        %v2597 = vpop.f32.mrb[0].mxu0
        %v2598 = vadd.f32 0.0, %v2597
        %v2599 = vpop.f32.mrb[0].mxu0
        %2600 = vmatprep.mubr.bf16.mxu0 0
        %2601 = vmatmul.mubr.bf16.gmra.mrb[0].mxu0 %v2390
        %v2602 = vpop.f32.mrb[0].mxu0
        %v2603 = vadd.f32 0.0, %v2602
        %v2604 = vpop.f32.mrb[0].mxu0
        %v2605 = vpop.f32.mrb[0].mxu0
        %v2606 = vadd.f32 0.0, %v2605
        %v2607 = vpop.f32.mrb[0].mxu0
        %2608 = vmatprep.mubr.bf16.mxu0 0
        %2609 = vmatmul.mubr.bf16.gmra.mrb[0].mxu0 %v2391
        %v2610 = vpop.f32.mrb[0].mxu0
        %v2611 = vadd.f32 0.0, %v2610
        %v2612 = vpop.f32.mrb[0].mxu0
        %v2613 = vpop.f32.mrb[0].mxu0
        %v2614 = vadd.f32 0.0, %v2613
        %v2615 = vpop.f32.mrb[0].mxu0
        %2616 = vdwg.mxu0
        %v2617 = vadd.f32 %v2231, %v2491
        %v2618 = vadd.f32 %v2232, %v2494
        %v2619 = vadd.f32 %v2233, %v2499
        %v2620 = vadd.f32 %v2234, %v2502
        %v2621 = vadd.f32 %v2235, %v2507
        %v2622 = vadd.f32 %v2236, %v2510
        %v2623 = vadd.f32 %v2237, %v2515
        %v2624 = vadd.f32 %v2238, %v2518
        %v2625 = vadd.f32 %v2239, %v2523
        %v2626 = vadd.f32 %v2240, %v2526
        %v2627 = vadd.f32 %v2241, %v2531
        %v2628 = vadd.f32 %v2242, %v2534
        %v2629 = vadd.f32 %v2243, %v2539
        %v2630 = vadd.f32 %v2244, %v2542
        %v2631 = vadd.f32 %v2245, %v2547
        %v2632 = vadd.f32 %v2246, %v2550
        %v2633 = vadd.f32 %v2247, %v2555
        %v2634 = vadd.f32 %v2248, %v2558
        %v2635 = vadd.f32 %v2249, %v2563
        %v2636 = vadd.f32 %v2250, %v2566
        %v2637 = vadd.f32 %v2251, %v2571
        %v2638 = vadd.f32 %v2252, %v2574
        %v2639 = vadd.f32 %v2253, %v2579
        %v2640 = vadd.f32 %v2254, %v2582
        %v2641 = vadd.f32 %v2255, %v2587
        %v2642 = vadd.f32 %v2256, %v2590
        %v2643 = vadd.f32 %v2257, %v2595
        %v2644 = vadd.f32 %v2258, %v2598
        %v2645 = vadd.f32 %v2259, %v2603
        %v2646 = vadd.f32 %v2260, %v2606
        %v2647 = vadd.f32 %v2261, %v2611
        %v2648 = vadd.f32 %v2262, %v2614
        %v2649 = vld [vmem:[%s614] sm:$0xf]
        %v2650 = vld [vmem:[%s614 + $0x4] sm:$0xf]
        %v2651 = vld [vmem:[%s614 + $0x8] sm:$0x1]
        %v2652 = vld [vmem:[%s614 + $0xc] sm:$0xf]
        %v2653 = vld [vmem:[%s614 + $0x10] sm:$0xf]
        %v2654 = vld [vmem:[%s614 + $0x14] sm:$0x1]
        %v2655 = vld [vmem:[%s614 + $0x18] sm:$0xf]
        %v2656 = vld [vmem:[%s614 + $0x1c] sm:$0xf]
        %v2657 = vld [vmem:[%s614 + $0x20] sm:$0x1]
        %v2658 = vld [vmem:[%s614 + $0x24] sm:$0xf]
        %v2659 = vld [vmem:[%s614 + $0x28] sm:$0xf]
        %v2660 = vld [vmem:[%s614 + $0x2c] sm:$0x1]
        %v2661 = vld [vmem:[%s614 + $0x30] sm:$0xf]
        %v2662 = vld [vmem:[%s614 + $0x34] sm:$0xf]
        %v2663 = vld [vmem:[%s614 + $0x38] sm:$0x1]
        %v2664 = vld [vmem:[%s614 + $0x3c] sm:$0xf]
        %v2665 = vld [vmem:[%s614 + $0x40] sm:$0xf]
        %v2666 = vld [vmem:[%s614 + $0x44] sm:$0x1]
        %v2667 = vld [vmem:[%s614 + $0x48] sm:$0xf]
        %v2668 = vld [vmem:[%s614 + $0x4c] sm:$0xf]
        %v2669 = vld [vmem:[%s614 + $0x50] sm:$0x1]
        %v2670 = vld [vmem:[%s614 + $0x54] sm:$0xf]
        %v2671 = vld [vmem:[%s614 + $0x58] sm:$0xf]
        %v2672 = vld [vmem:[%s614 + $0x5c] sm:$0x1]
        %v2673 = vld [vmem:[%s614 + $0x60] sm:$0xf]
        %v2674 = vld [vmem:[%s614 + $0x64] sm:$0xf]
        %v2675 = vld [vmem:[%s614 + $0x68] sm:$0x1]
        %v2676 = vld [vmem:[%s614 + $0x6c] sm:$0xf]
        %v2677 = vld [vmem:[%s614 + $0x70] sm:$0xf]
        %v2678 = vld [vmem:[%s614 + $0x74] sm:$0x1]
        %v2679 = vld [vmem:[%s614 + $0x78] sm:$0xf]
        %v2680 = vld [vmem:[%s614 + $0x7c] sm:$0xf]
        %v2681 = vld [vmem:[%s614 + $0x80] sm:$0x1]
        %v2682 = vld [vmem:[%s614 + $0x84] sm:$0xf]
        %v2683 = vld [vmem:[%s614 + $0x88] sm:$0xf]
        %v2684 = vld [vmem:[%s614 + $0x8c] sm:$0x1]
        %v2685 = vld [vmem:[%s614 + $0x90] sm:$0xf]
        %v2686 = vld [vmem:[%s614 + $0x94] sm:$0xf]
        %v2687 = vld [vmem:[%s614 + $0x98] sm:$0x1]
        %v2688 = vld [vmem:[%s614 + $0x9c] sm:$0xf]
        %v2689 = vld [vmem:[%s614 + $0xa0] sm:$0xf]
        %v2690 = vld [vmem:[%s614 + $0xa4] sm:$0x1]
        %v2691 = vld [vmem:[%s614 + $0xa8] sm:$0xf]
        %v2692 = vld [vmem:[%s614 + $0xac] sm:$0xf]
        %v2693 = vld [vmem:[%s614 + $0xb0] sm:$0x1]
        %v2694 = vld [vmem:[%s614 + $0xb4] sm:$0xf]
        %v2695 = vld [vmem:[%s614 + $0xb8] sm:$0xf]
        %v2696 = vld [vmem:[%s614 + $0xbc] sm:$0x1]
        %v2698 = vshrl.u32 %v2649, 16
        %v2700 = vrot.slane %v2698, 4
        %v2701 = vshll.u32 %v2649, 16
        %v2703 = vrot.slane %v2701, 5
        %v2704 = vor.u32 %v2700, %v2703
        %v2705 = vrot.slane %v2704, 4
        %v2707 = vshll.u32 %v2650, 16
        %v2709 = vrot.slane %v2707, 5
        %v2710 = vsel %vm798, %v2705, %v2709
        %v2711 = vshrl.u32 %v2650, 16
        %v2713 = vrot.slane %v2711, 4
        %v2714 = vor.u32 %v2713, %v2709
        %v2715 = vrot.slane %v2714, 4
        %v2717 = vshll.u32 %v2651, 16
        %v2719 = vrot.slane %v2717, 5
        %v2720 = vsel %vm798, %v2715, %v2719
        %v2722 = vshrl.u32 %v2652, 16
        %v2724 = vrot.slane %v2722, 4
        %v2725 = vshll.u32 %v2652, 16
        %v2727 = vrot.slane %v2725, 5
        %v2728 = vor.u32 %v2724, %v2727
        %v2729 = vrot.slane %v2728, 4
        %v2731 = vshll.u32 %v2653, 16
        %v2733 = vrot.slane %v2731, 5
        %v2734 = vsel %vm798, %v2729, %v2733
        %v2735 = vshrl.u32 %v2653, 16
        %v2737 = vrot.slane %v2735, 4
        %v2738 = vor.u32 %v2737, %v2733
        %v2739 = vrot.slane %v2738, 4
        %v2741 = vshll.u32 %v2654, 16
        %v2743 = vrot.slane %v2741, 5
        %v2744 = vsel %vm798, %v2739, %v2743
        %v2746 = vshrl.u32 %v2655, 16
        %v2748 = vrot.slane %v2746, 4
        %v2749 = vshll.u32 %v2655, 16
        %v2751 = vrot.slane %v2749, 5
        %v2752 = vor.u32 %v2748, %v2751
        %v2753 = vrot.slane %v2752, 4
        %v2755 = vshll.u32 %v2656, 16
        %v2757 = vrot.slane %v2755, 5
        %v2758 = vsel %vm798, %v2753, %v2757
        %v2759 = vshrl.u32 %v2656, 16
        %v2761 = vrot.slane %v2759, 4
        %v2762 = vor.u32 %v2761, %v2757
        %v2763 = vrot.slane %v2762, 4
        %v2765 = vshll.u32 %v2657, 16
        %v2767 = vrot.slane %v2765, 5
        %v2768 = vsel %vm798, %v2763, %v2767
        %v2770 = vshrl.u32 %v2658, 16
        %v2772 = vrot.slane %v2770, 4
        %v2773 = vshll.u32 %v2658, 16
        %v2775 = vrot.slane %v2773, 5
        %v2776 = vor.u32 %v2772, %v2775
        %v2777 = vrot.slane %v2776, 4
        %v2779 = vshll.u32 %v2659, 16
        %v2781 = vrot.slane %v2779, 5
        %v2782 = vsel %vm798, %v2777, %v2781
        %v2783 = vshrl.u32 %v2659, 16
        %v2785 = vrot.slane %v2783, 4
        %v2786 = vor.u32 %v2785, %v2781
        %v2787 = vrot.slane %v2786, 4
        %v2789 = vshll.u32 %v2660, 16
        %v2791 = vrot.slane %v2789, 5
        %v2792 = vsel %vm798, %v2787, %v2791
        %v2794 = vshrl.u32 %v2661, 16
        %v2796 = vrot.slane %v2794, 4
        %v2797 = vshll.u32 %v2661, 16
        %v2799 = vrot.slane %v2797, 5
        %v2800 = vor.u32 %v2796, %v2799
        %v2801 = vrot.slane %v2800, 4
        %v2803 = vshll.u32 %v2662, 16
        %v2805 = vrot.slane %v2803, 5
        %v2806 = vsel %vm798, %v2801, %v2805
        %v2807 = vshrl.u32 %v2662, 16
        %v2809 = vrot.slane %v2807, 4
        %v2810 = vor.u32 %v2809, %v2805
        %v2811 = vrot.slane %v2810, 4
        %v2813 = vshll.u32 %v2663, 16
        %v2815 = vrot.slane %v2813, 5
        %v2816 = vsel %vm798, %v2811, %v2815
        %v2818 = vshrl.u32 %v2664, 16
        %v2820 = vrot.slane %v2818, 4
        %v2821 = vshll.u32 %v2664, 16
        %v2823 = vrot.slane %v2821, 5
        %v2824 = vor.u32 %v2820, %v2823
        %v2825 = vrot.slane %v2824, 4
        %v2827 = vshll.u32 %v2665, 16
        %v2829 = vrot.slane %v2827, 5
        %v2830 = vsel %vm798, %v2825, %v2829
        %v2831 = vshrl.u32 %v2665, 16
        %v2833 = vrot.slane %v2831, 4
        %v2834 = vor.u32 %v2833, %v2829
        %v2835 = vrot.slane %v2834, 4
        %v2837 = vshll.u32 %v2666, 16
        %v2839 = vrot.slane %v2837, 5
        %v2840 = vsel %vm798, %v2835, %v2839
        %v2842 = vshrl.u32 %v2667, 16
        %v2844 = vrot.slane %v2842, 4
        %v2845 = vshll.u32 %v2667, 16
        %v2847 = vrot.slane %v2845, 5
        %v2848 = vor.u32 %v2844, %v2847
        %v2849 = vrot.slane %v2848, 4
        %v2851 = vshll.u32 %v2668, 16
        %v2853 = vrot.slane %v2851, 5
        %v2854 = vsel %vm798, %v2849, %v2853
        %v2855 = vshrl.u32 %v2668, 16
        %v2857 = vrot.slane %v2855, 4
        %v2858 = vor.u32 %v2857, %v2853
        %v2859 = vrot.slane %v2858, 4
        %v2861 = vshll.u32 %v2669, 16
        %v2863 = vrot.slane %v2861, 5
        %v2864 = vsel %vm798, %v2859, %v2863
        %v2866 = vshrl.u32 %v2670, 16
        %v2868 = vrot.slane %v2866, 4
        %v2869 = vshll.u32 %v2670, 16
        %v2871 = vrot.slane %v2869, 5
        %v2872 = vor.u32 %v2868, %v2871
        %v2873 = vrot.slane %v2872, 4
        %v2875 = vshll.u32 %v2671, 16
        %v2877 = vrot.slane %v2875, 5
        %v2878 = vsel %vm798, %v2873, %v2877
        %v2879 = vshrl.u32 %v2671, 16
        %v2881 = vrot.slane %v2879, 4
        %v2882 = vor.u32 %v2881, %v2877
        %v2883 = vrot.slane %v2882, 4
        %v2885 = vshll.u32 %v2672, 16
        %v2887 = vrot.slane %v2885, 5
        %v2888 = vsel %vm798, %v2883, %v2887
        %v2890 = vshrl.u32 %v2673, 16
        %v2892 = vrot.slane %v2890, 4
        %v2893 = vshll.u32 %v2673, 16
        %v2895 = vrot.slane %v2893, 5
        %v2896 = vor.u32 %v2892, %v2895
        %v2897 = vrot.slane %v2896, 4
        %v2899 = vshll.u32 %v2674, 16
        %v2901 = vrot.slane %v2899, 5
        %v2902 = vsel %vm798, %v2897, %v2901
        %v2903 = vshrl.u32 %v2674, 16
        %v2905 = vrot.slane %v2903, 4
        %v2906 = vor.u32 %v2905, %v2901
        %v2907 = vrot.slane %v2906, 4
        %v2909 = vshll.u32 %v2675, 16
        %v2911 = vrot.slane %v2909, 5
        %v2912 = vsel %vm798, %v2907, %v2911
        %v2914 = vshrl.u32 %v2676, 16
        %v2916 = vrot.slane %v2914, 4
        %v2917 = vshll.u32 %v2676, 16
        %v2919 = vrot.slane %v2917, 5
        %v2920 = vor.u32 %v2916, %v2919
        %v2921 = vrot.slane %v2920, 4
        %v2923 = vshll.u32 %v2677, 16
        %v2925 = vrot.slane %v2923, 5
        %v2926 = vsel %vm798, %v2921, %v2925
        %v2927 = vshrl.u32 %v2677, 16
        %v2929 = vrot.slane %v2927, 4
        %v2930 = vor.u32 %v2929, %v2925
        %v2931 = vrot.slane %v2930, 4
        %v2933 = vshll.u32 %v2678, 16
        %v2935 = vrot.slane %v2933, 5
        %v2936 = vsel %vm798, %v2931, %v2935
        %v2938 = vshrl.u32 %v2679, 16
        %v2940 = vrot.slane %v2938, 4
        %v2941 = vshll.u32 %v2679, 16
        %v2943 = vrot.slane %v2941, 5
        %v2944 = vor.u32 %v2940, %v2943
        %v2945 = vrot.slane %v2944, 4
        %v2947 = vshll.u32 %v2680, 16
        %v2949 = vrot.slane %v2947, 5
        %v2950 = vsel %vm798, %v2945, %v2949
        %v2951 = vshrl.u32 %v2680, 16
        %v2953 = vrot.slane %v2951, 4
        %v2954 = vor.u32 %v2953, %v2949
        %v2955 = vrot.slane %v2954, 4
        %v2957 = vshll.u32 %v2681, 16
        %v2959 = vrot.slane %v2957, 5
        %v2960 = vsel %vm798, %v2955, %v2959
        %v2962 = vshrl.u32 %v2682, 16
        %v2964 = vrot.slane %v2962, 4
        %v2965 = vshll.u32 %v2682, 16
        %v2967 = vrot.slane %v2965, 5
        %v2968 = vor.u32 %v2964, %v2967
        %v2969 = vrot.slane %v2968, 4
        %v2971 = vshll.u32 %v2683, 16
        %v2973 = vrot.slane %v2971, 5
        %v2974 = vsel %vm798, %v2969, %v2973
        %v2975 = vshrl.u32 %v2683, 16
        %v2977 = vrot.slane %v2975, 4
        %v2978 = vor.u32 %v2977, %v2973
        %v2979 = vrot.slane %v2978, 4
        %v2981 = vshll.u32 %v2684, 16
        %v2983 = vrot.slane %v2981, 5
        %v2984 = vsel %vm798, %v2979, %v2983
        %v2986 = vshrl.u32 %v2685, 16
        %v2988 = vrot.slane %v2986, 4
        %v2989 = vshll.u32 %v2685, 16
        %v2991 = vrot.slane %v2989, 5
        %v2992 = vor.u32 %v2988, %v2991
        %v2993 = vrot.slane %v2992, 4
        %v2995 = vshll.u32 %v2686, 16
        %v2997 = vrot.slane %v2995, 5
        %v2998 = vsel %vm798, %v2993, %v2997
        %v2999 = vshrl.u32 %v2686, 16
        %v3001 = vrot.slane %v2999, 4
        %v3002 = vor.u32 %v3001, %v2997
        %v3003 = vrot.slane %v3002, 4
        %v3005 = vshll.u32 %v2687, 16
        %v3007 = vrot.slane %v3005, 5
        %v3008 = vsel %vm798, %v3003, %v3007
        %v3010 = vshrl.u32 %v2688, 16
        %v3012 = vrot.slane %v3010, 4
        %v3013 = vshll.u32 %v2688, 16
        %v3015 = vrot.slane %v3013, 5
        %v3016 = vor.u32 %v3012, %v3015
        %v3017 = vrot.slane %v3016, 4
        %v3019 = vshll.u32 %v2689, 16
        %v3021 = vrot.slane %v3019, 5
        %v3022 = vsel %vm798, %v3017, %v3021
        %v3023 = vshrl.u32 %v2689, 16
        %v3025 = vrot.slane %v3023, 4
        %v3026 = vor.u32 %v3025, %v3021
        %v3027 = vrot.slane %v3026, 4
        %v3029 = vshll.u32 %v2690, 16
        %v3031 = vrot.slane %v3029, 5
        %v3032 = vsel %vm798, %v3027, %v3031
        %v3034 = vshrl.u32 %v2691, 16
        %v3036 = vrot.slane %v3034, 4
        %v3037 = vshll.u32 %v2691, 16
        %v3039 = vrot.slane %v3037, 5
        %v3040 = vor.u32 %v3036, %v3039
        %v3041 = vrot.slane %v3040, 4
        %v3043 = vshll.u32 %v2692, 16
        %v3045 = vrot.slane %v3043, 5
        %v3046 = vsel %vm798, %v3041, %v3045
        %v3047 = vshrl.u32 %v2692, 16
        %v3049 = vrot.slane %v3047, 4
        %v3050 = vor.u32 %v3049, %v3045
        %v3051 = vrot.slane %v3050, 4
        %v3053 = vshll.u32 %v2693, 16
        %v3055 = vrot.slane %v3053, 5
        %v3056 = vsel %vm798, %v3051, %v3055
        %v3058 = vshrl.u32 %v2694, 16
        %v3060 = vrot.slane %v3058, 4
        %v3061 = vshll.u32 %v2694, 16
        %v3063 = vrot.slane %v3061, 5
        %v3064 = vor.u32 %v3060, %v3063
        %v3065 = vrot.slane %v3064, 4
        %v3067 = vshll.u32 %v2695, 16
        %v3069 = vrot.slane %v3067, 5
        %v3070 = vsel %vm798, %v3065, %v3069
        %v3071 = vshrl.u32 %v2695, 16
        %v3073 = vrot.slane %v3071, 4
        %v3074 = vor.u32 %v3073, %v3069
        %v3075 = vrot.slane %v3074, 4
        %v3077 = vshll.u32 %v2696, 16
        %v3079 = vrot.slane %v3077, 5
        %v3080 = vsel %vm798, %v3075, %v3079
        %s3081 = scalar_lea.vmem [#allocation6], 256
        %v3082 = vld [vmem:[%s3081] sm:$0xf]
        %v3083 = vld [vmem:[%s3081 + $0x4] sm:$0xf]
        %v3084 = vld [vmem:[%s3081 + $0x8] sm:$0xf]
        %v3085 = vld [vmem:[%s3081 + $0xc] sm:$0xf]
        %v3086 = vld [vmem:[%s3081 + $0x10] sm:$0xf]
        %v3087 = vld [vmem:[%s3081 + $0x14] sm:$0xf]
        %v3088 = vld [vmem:[%s3081 + $0x18] sm:$0xf]
        %v3089 = vld [vmem:[%s3081 + $0x1c] sm:$0xf]
        %v3090 = vld [vmem:[%s3081 + $0x20] sm:$0xf]
        %v3091 = vld [vmem:[%s3081 + $0x24] sm:$0xf]
        %v3092 = vld [vmem:[%s3081 + $0x28] sm:$0xf]
        %v3093 = vld [vmem:[%s3081 + $0x2c] sm:$0xf]
        %v3094 = vld [vmem:[%s3081 + $0x30] sm:$0xf]
        %v3095 = vld [vmem:[%s3081 + $0x34] sm:$0xf]
        %v3096 = vld [vmem:[%s3081 + $0x38] sm:$0xf]
        %v3097 = vld [vmem:[%s3081 + $0x3c] sm:$0xf]
        %v3098 = vunpack.c.l.b16 %v2710
        %v3099 = vunpack.c.l.b16 %v2720
        %v3100 = vunpack.c.l.b16 %v2734
        %v3101 = vunpack.c.l.b16 %v2744
        %v3102 = vunpack.c.l.b16 %v2758
        %v3103 = vunpack.c.l.b16 %v2768
        %v3104 = vunpack.c.l.b16 %v2782
        %v3105 = vunpack.c.l.b16 %v2792
        %v3106 = vunpack.c.l.b16 %v2806
        %v3107 = vunpack.c.l.b16 %v2816
        %v3108 = vunpack.c.l.b16 %v2830
        %v3109 = vunpack.c.l.b16 %v2840
        %v3110 = vunpack.c.l.b16 %v2854
        %v3111 = vunpack.c.l.b16 %v2864
        %v3112 = vunpack.c.l.b16 %v2878
        %v3113 = vunpack.c.l.b16 %v2888
        %v3114 = vunpack.c.l.b16 %v2902
        %v3115 = vunpack.c.l.b16 %v2912
        %v3116 = vunpack.c.l.b16 %v2926
        %v3117 = vunpack.c.l.b16 %v2936
        %v3118 = vunpack.c.l.b16 %v2950
        %v3119 = vunpack.c.l.b16 %v2960
        %v3120 = vunpack.c.l.b16 %v2974
        %v3121 = vunpack.c.l.b16 %v2984
        %v3122 = vunpack.c.l.b16 %v2998
        %v3123 = vunpack.c.l.b16 %v3008
        %v3124 = vunpack.c.l.b16 %v3022
        %v3125 = vunpack.c.l.b16 %v3032
        %v3126 = vunpack.c.l.b16 %v3046
        %v3127 = vunpack.c.l.b16 %v3056
        %v3128 = vunpack.c.l.b16 %v3070
        %v3129 = vunpack.c.l.b16 %v3080
        %v3130 = vpack.c.b16 %v3099, %v3098
        %v3131 = vpack.c.b16 %v3101, %v3100
        %v3132 = vpack.c.b16 %v3103, %v3102
        %v3133 = vpack.c.b16 %v3105, %v3104
        %v3134 = vpack.c.b16 %v3107, %v3106
        %v3135 = vpack.c.b16 %v3109, %v3108
        %v3136 = vpack.c.b16 %v3111, %v3110
        %v3137 = vpack.c.b16 %v3113, %v3112
        %v3138 = vpack.c.b16 %v3115, %v3114
        %v3139 = vpack.c.b16 %v3117, %v3116
        %v3140 = vpack.c.b16 %v3119, %v3118
        %v3141 = vpack.c.b16 %v3121, %v3120
        %v3142 = vpack.c.b16 %v3123, %v3122
        %v3143 = vpack.c.b16 %v3125, %v3124
        %v3144 = vpack.c.b16 %v3127, %v3126
        %v3145 = vpack.c.b16 %v3129, %v3128
        %v3178 = vunpack.c.l.b16 %v3082
        %v3179 = vunpack.c.l.b16 %v3083
        %v3180 = vunpack.c.l.b16 %v3084
        %v3181 = vunpack.c.l.b16 %v3085
        %v3182 = vunpack.c.l.b16 %v3086
        %v3183 = vunpack.c.l.b16 %v3087
        %v3184 = vunpack.c.l.b16 %v3088
        %v3185 = vunpack.c.l.b16 %v3089
        %v3186 = vunpack.c.l.b16 %v3090
        %v3187 = vunpack.c.l.b16 %v3091
        %v3188 = vunpack.c.l.b16 %v3092
        %v3189 = vunpack.c.l.b16 %v3093
        %v3190 = vunpack.c.l.b16 %v3094
        %v3191 = vunpack.c.l.b16 %v3095
        %v3192 = vunpack.c.l.b16 %v3096
        %v3193 = vunpack.c.l.b16 %v3097
        %v3194 = vpack.c.b16 %v3179, %v3178
        %v3195 = vpack.c.b16 %v3181, %v3180
        %v3196 = vpack.c.b16 %v3183, %v3182
        %v3197 = vpack.c.b16 %v3185, %v3184
        %v3198 = vpack.c.b16 %v3187, %v3186
        %v3199 = vpack.c.b16 %v3189, %v3188
        %v3200 = vpack.c.b16 %v3191, %v3190
        %v3201 = vpack.c.b16 %v3193, %v3192
        %3210 = vmatprep.subr.bf16.mxu0 0
        %3211 = vmatpush1.bf16.msra.mxu0 %v3194
        %3212 = vmatprep.subr.bf16.mxu0 0
        %3213 = vmatpush1.bf16.msra.mxu0 %v3195
        %3214 = vmatprep.subr.bf16.mxu0 0
        %3215 = vmatpush1.bf16.msra.mxu0 %v3196
        %3216 = vmatprep.subr.bf16.mxu0 0
        %3217 = vmatpush1.bf16.msra.mxu0 %v3197
        %3218 = vmatprep.subr.bf16.mxu0 0
        %3219 = vmatpush1.bf16.msra.mxu0 %v3198
        %3220 = vmatprep.subr.bf16.mxu0 0
        %3221 = vmatpush1.bf16.msra.mxu0 %v3199
        %3222 = vmatprep.subr.bf16.mxu0 0
        %3223 = vmatpush1.bf16.msra.mxu0 %v3200
        %3224 = vmatprep.subr.bf16.mxu0 0
        %3225 = vmatpush1.bf16.msra.mxu0 %v3201
        %3226 = vmatprep.subr.bf16.mxu0 0
        %3227 = vmatpush1.bf16.msra.mxu0 0
        %3228 = vmatprep.subr.bf16.mxu0 0
        %3229 = vmatpush1.bf16.msra.mxu0 0
        %3230 = vmatprep.subr.bf16.mxu0 0
        %3231 = vmatpush1.bf16.msra.mxu0 0
        %3232 = vmatprep.subr.bf16.mxu0 0
        %3233 = vmatpush1.bf16.msra.mxu0 0
        %3234 = vmatprep.subr.bf16.mxu0 0
        %3235 = vmatpush1.bf16.msra.mxu0 0
        %3236 = vmatprep.subr.bf16.mxu0 0
        %3237 = vmatpush1.bf16.msra.mxu0 0
        %3238 = vmatprep.subr.bf16.mxu0 0
        %3239 = vmatpush1.bf16.msra.mxu0 0
        %3240 = vmatprep.subr.bf16.mxu0 0
        %3241 = vmatpush1.bf16.msra.mxu0 0
        %3242 = vmatprep.mubr.bf16.mxu0 0
        %3243 = vmatmul.mubr.bf16.gmra.mrb[0].mxu0 %v3130
        %v3244 = vpop.f32.mrb[0].mxu0
        %v3245 = vadd.f32 0.0, %v3244
        %v3246 = vpop.f32.mrb[0].mxu0
        %v3247 = vpop.f32.mrb[0].mxu0
        %v3248 = vadd.f32 0.0, %v3247
        %v3249 = vpop.f32.mrb[0].mxu0
        %3250 = vmatprep.mubr.bf16.mxu0 0
        %3251 = vmatmul.mubr.bf16.gmra.mrb[0].mxu0 %v3131
        %v3252 = vpop.f32.mrb[0].mxu0
        %v3253 = vadd.f32 0.0, %v3252
        %v3254 = vpop.f32.mrb[0].mxu0
        %v3255 = vpop.f32.mrb[0].mxu0
        %v3256 = vadd.f32 0.0, %v3255
        %v3257 = vpop.f32.mrb[0].mxu0
        %3258 = vmatprep.mubr.bf16.mxu0 0
        %3259 = vmatmul.mubr.bf16.gmra.mrb[0].mxu0 %v3132
        %v3260 = vpop.f32.mrb[0].mxu0
        %v3261 = vadd.f32 0.0, %v3260
        %v3262 = vpop.f32.mrb[0].mxu0
        %v3263 = vpop.f32.mrb[0].mxu0
        %v3264 = vadd.f32 0.0, %v3263
        %v3265 = vpop.f32.mrb[0].mxu0
        %3266 = vmatprep.mubr.bf16.mxu0 0
        %3267 = vmatmul.mubr.bf16.gmra.mrb[0].mxu0 %v3133
        %v3268 = vpop.f32.mrb[0].mxu0
        %v3269 = vadd.f32 0.0, %v3268
        %v3270 = vpop.f32.mrb[0].mxu0
        %v3271 = vpop.f32.mrb[0].mxu0
        %v3272 = vadd.f32 0.0, %v3271
        %v3273 = vpop.f32.mrb[0].mxu0
        %3274 = vmatprep.mubr.bf16.mxu0 0
        %3275 = vmatmul.mubr.bf16.gmra.mrb[0].mxu0 %v3134
        %v3276 = vpop.f32.mrb[0].mxu0
        %v3277 = vadd.f32 0.0, %v3276
        %v3278 = vpop.f32.mrb[0].mxu0
        %v3279 = vpop.f32.mrb[0].mxu0
        %v3280 = vadd.f32 0.0, %v3279
        %v3281 = vpop.f32.mrb[0].mxu0
        %3282 = vmatprep.mubr.bf16.mxu0 0
        %3283 = vmatmul.mubr.bf16.gmra.mrb[0].mxu0 %v3135
        %v3284 = vpop.f32.mrb[0].mxu0
        %v3285 = vadd.f32 0.0, %v3284
        %v3286 = vpop.f32.mrb[0].mxu0
        %v3287 = vpop.f32.mrb[0].mxu0
        %v3288 = vadd.f32 0.0, %v3287
        %v3289 = vpop.f32.mrb[0].mxu0
        %3290 = vmatprep.mubr.bf16.mxu0 0
        %3291 = vmatmul.mubr.bf16.gmra.mrb[0].mxu0 %v3136
        %v3292 = vpop.f32.mrb[0].mxu0
        %v3293 = vadd.f32 0.0, %v3292
        %v3294 = vpop.f32.mrb[0].mxu0
        %v3295 = vpop.f32.mrb[0].mxu0
        %v3296 = vadd.f32 0.0, %v3295
        %v3297 = vpop.f32.mrb[0].mxu0
        %3298 = vmatprep.mubr.bf16.mxu0 0
        %3299 = vmatmul.mubr.bf16.gmra.mrb[0].mxu0 %v3137
        %v3300 = vpop.f32.mrb[0].mxu0
        %v3301 = vadd.f32 0.0, %v3300
        %v3302 = vpop.f32.mrb[0].mxu0
        %v3303 = vpop.f32.mrb[0].mxu0
        %v3304 = vadd.f32 0.0, %v3303
        %v3305 = vpop.f32.mrb[0].mxu0
        %3306 = vmatprep.mubr.bf16.mxu0 0
        %3307 = vmatmul.mubr.bf16.gmra.mrb[0].mxu0 %v3138
        %v3308 = vpop.f32.mrb[0].mxu0
        %v3309 = vadd.f32 0.0, %v3308
        %v3310 = vpop.f32.mrb[0].mxu0
        %v3311 = vpop.f32.mrb[0].mxu0
        %v3312 = vadd.f32 0.0, %v3311
        %v3313 = vpop.f32.mrb[0].mxu0
        %3314 = vmatprep.mubr.bf16.mxu0 0
        %3315 = vmatmul.mubr.bf16.gmra.mrb[0].mxu0 %v3139
        %v3316 = vpop.f32.mrb[0].mxu0
        %v3317 = vadd.f32 0.0, %v3316
        %v3318 = vpop.f32.mrb[0].mxu0
        %v3319 = vpop.f32.mrb[0].mxu0
        %v3320 = vadd.f32 0.0, %v3319
        %v3321 = vpop.f32.mrb[0].mxu0
        %3322 = vmatprep.mubr.bf16.mxu0 0
        %3323 = vmatmul.mubr.bf16.gmra.mrb[0].mxu0 %v3140
        %v3324 = vpop.f32.mrb[0].mxu0
        %v3325 = vadd.f32 0.0, %v3324
        %v3326 = vpop.f32.mrb[0].mxu0
        %v3327 = vpop.f32.mrb[0].mxu0
        %v3328 = vadd.f32 0.0, %v3327
        %v3329 = vpop.f32.mrb[0].mxu0
        %3330 = vmatprep.mubr.bf16.mxu0 0
        %3331 = vmatmul.mubr.bf16.gmra.mrb[0].mxu0 %v3141
        %v3332 = vpop.f32.mrb[0].mxu0
        %v3333 = vadd.f32 0.0, %v3332
        %v3334 = vpop.f32.mrb[0].mxu0
        %v3335 = vpop.f32.mrb[0].mxu0
        %v3336 = vadd.f32 0.0, %v3335
        %v3337 = vpop.f32.mrb[0].mxu0
        %3338 = vmatprep.mubr.bf16.mxu0 0
        %3339 = vmatmul.mubr.bf16.gmra.mrb[0].mxu0 %v3142
        %v3340 = vpop.f32.mrb[0].mxu0
        %v3341 = vadd.f32 0.0, %v3340
        %v3342 = vpop.f32.mrb[0].mxu0
        %v3343 = vpop.f32.mrb[0].mxu0
        %v3344 = vadd.f32 0.0, %v3343
        %v3345 = vpop.f32.mrb[0].mxu0
        %3346 = vmatprep.mubr.bf16.mxu0 0
        %3347 = vmatmul.mubr.bf16.gmra.mrb[0].mxu0 %v3143
        %v3348 = vpop.f32.mrb[0].mxu0
        %v3349 = vadd.f32 0.0, %v3348
        %v3350 = vpop.f32.mrb[0].mxu0
        %v3351 = vpop.f32.mrb[0].mxu0
        %v3352 = vadd.f32 0.0, %v3351
        %v3353 = vpop.f32.mrb[0].mxu0
        %3354 = vmatprep.mubr.bf16.mxu0 0
        %3355 = vmatmul.mubr.bf16.gmra.mrb[0].mxu0 %v3144
        %v3356 = vpop.f32.mrb[0].mxu0
        %v3357 = vadd.f32 0.0, %v3356
        %v3358 = vpop.f32.mrb[0].mxu0
        %v3359 = vpop.f32.mrb[0].mxu0
        %v3360 = vadd.f32 0.0, %v3359
        %v3361 = vpop.f32.mrb[0].mxu0
        %3362 = vmatprep.mubr.bf16.mxu0 0
        %3363 = vmatmul.mubr.bf16.gmra.mrb[0].mxu0 %v3145
        %v3364 = vpop.f32.mrb[0].mxu0
        %v3365 = vadd.f32 0.0, %v3364
        %v3366 = vpop.f32.mrb[0].mxu0
        %v3367 = vpop.f32.mrb[0].mxu0
        %v3368 = vadd.f32 0.0, %v3367
        %v3369 = vpop.f32.mrb[0].mxu0
        %3370 = vdwg.mxu0
        %v3371 = vadd.f32 %v2617, %v3245
        %v3372 = vadd.f32 %v2618, %v3248
        %v3373 = vadd.f32 %v2619, %v3253
        %v3374 = vadd.f32 %v2620, %v3256
        %v3375 = vadd.f32 %v2621, %v3261
        %v3376 = vadd.f32 %v2622, %v3264
        %v3377 = vadd.f32 %v2623, %v3269
        %v3378 = vadd.f32 %v2624, %v3272
        %v3379 = vadd.f32 %v2625, %v3277
        %v3380 = vadd.f32 %v2626, %v3280
        %v3381 = vadd.f32 %v2627, %v3285
        %v3382 = vadd.f32 %v2628, %v3288
        %v3383 = vadd.f32 %v2629, %v3293
        %v3384 = vadd.f32 %v2630, %v3296
        %v3385 = vadd.f32 %v2631, %v3301
        %v3386 = vadd.f32 %v2632, %v3304
        %v3387 = vadd.f32 %v2633, %v3309
        %v3388 = vadd.f32 %v2634, %v3312
        %v3389 = vadd.f32 %v2635, %v3317
        %v3390 = vadd.f32 %v2636, %v3320
        %v3391 = vadd.f32 %v2637, %v3325
        %v3392 = vadd.f32 %v2638, %v3328
        %v3393 = vadd.f32 %v2639, %v3333
        %v3394 = vadd.f32 %v2640, %v3336
        %v3395 = vadd.f32 %v2641, %v3341
        %v3396 = vadd.f32 %v2642, %v3344
        %v3397 = vadd.f32 %v2643, %v3349
        %v3398 = vadd.f32 %v2644, %v3352
        %v3399 = vadd.f32 %v2645, %v3357
        %v3400 = vadd.f32 %v2646, %v3360
        %v3401 = vadd.f32 %v2647, %v3365
        %v3402 = vadd.f32 %v2648, %v3368
        %v3403 = vld [vmem:[%s614] sm:$0xe]
        %v3404 = vld [vmem:[%s614 + $0xc] sm:$0xe]
        %v3405 = vld [vmem:[%s614 + $0x18] sm:$0xe]
        %v3406 = vld [vmem:[%s614 + $0x24] sm:$0xe]
        %v3407 = vld [vmem:[%s614 + $0x30] sm:$0xe]
        %v3408 = vld [vmem:[%s614 + $0x3c] sm:$0xe]
        %v3409 = vld [vmem:[%s614 + $0x48] sm:$0xe]
        %v3410 = vld [vmem:[%s614 + $0x54] sm:$0xe]
        %v3411 = vld [vmem:[%s614 + $0x60] sm:$0xe]
        %v3412 = vld [vmem:[%s614 + $0x6c] sm:$0xe]
        %v3413 = vld [vmem:[%s614 + $0x78] sm:$0xe]
        %v3414 = vld [vmem:[%s614 + $0x84] sm:$0xe]
        %v3415 = vld [vmem:[%s614 + $0x90] sm:$0xe]
        %v3416 = vld [vmem:[%s614 + $0x9c] sm:$0xe]
        %v3417 = vld [vmem:[%s614 + $0xa8] sm:$0xe]
        %v3418 = vld [vmem:[%s614 + $0xb4] sm:$0xe]
        %v3467 = vrot.slane %v3403, 5
        %v3468 = vrot.slane %v3467, 4
        %v3469 = vrot.slane %v2650, 5
        %v3470 = vsel %vm1828, %v3468, %v3469
        %v3471 = vrot.slane %v3469, 4
        %v3472 = vrot.slane %v2651, 5
        %v3473 = vsel %vm1828, %v3471, %v3472
        %v3474 = vrot.slane %v3404, 5
        %v3475 = vrot.slane %v3474, 4
        %v3476 = vrot.slane %v2653, 5
        %v3477 = vsel %vm1828, %v3475, %v3476
        %v3478 = vrot.slane %v3476, 4
        %v3479 = vrot.slane %v2654, 5
        %v3480 = vsel %vm1828, %v3478, %v3479
        %v3481 = vrot.slane %v3405, 5
        %v3482 = vrot.slane %v3481, 4
        %v3483 = vrot.slane %v2656, 5
        %v3484 = vsel %vm1828, %v3482, %v3483
        %v3485 = vrot.slane %v3483, 4
        %v3486 = vrot.slane %v2657, 5
        %v3487 = vsel %vm1828, %v3485, %v3486
        %v3488 = vrot.slane %v3406, 5
        %v3489 = vrot.slane %v3488, 4
        %v3490 = vrot.slane %v2659, 5
        %v3491 = vsel %vm1828, %v3489, %v3490
        %v3492 = vrot.slane %v3490, 4
        %v3493 = vrot.slane %v2660, 5
        %v3494 = vsel %vm1828, %v3492, %v3493
        %v3495 = vrot.slane %v3407, 5
        %v3496 = vrot.slane %v3495, 4
        %v3497 = vrot.slane %v2662, 5
        %v3498 = vsel %vm1828, %v3496, %v3497
        %v3499 = vrot.slane %v3497, 4
        %v3500 = vrot.slane %v2663, 5
        %v3501 = vsel %vm1828, %v3499, %v3500
        %v3502 = vrot.slane %v3408, 5
        %v3503 = vrot.slane %v3502, 4
        %v3504 = vrot.slane %v2665, 5
        %v3505 = vsel %vm1828, %v3503, %v3504
        %v3506 = vrot.slane %v3504, 4
        %v3507 = vrot.slane %v2666, 5
        %v3508 = vsel %vm1828, %v3506, %v3507
        %v3509 = vrot.slane %v3409, 5
        %v3510 = vrot.slane %v3509, 4
        %v3511 = vrot.slane %v2668, 5
        %v3512 = vsel %vm1828, %v3510, %v3511
        %v3513 = vrot.slane %v3511, 4
        %v3514 = vrot.slane %v2669, 5
        %v3515 = vsel %vm1828, %v3513, %v3514
        %v3516 = vrot.slane %v3410, 5
        %v3517 = vrot.slane %v3516, 4
        %v3518 = vrot.slane %v2671, 5
        %v3519 = vsel %vm1828, %v3517, %v3518
        %v3520 = vrot.slane %v3518, 4
        %v3521 = vrot.slane %v2672, 5
        %v3522 = vsel %vm1828, %v3520, %v3521
        %v3523 = vrot.slane %v3411, 5
        %v3524 = vrot.slane %v3523, 4
        %v3525 = vrot.slane %v2674, 5
        %v3526 = vsel %vm1828, %v3524, %v3525
        %v3527 = vrot.slane %v3525, 4
        %v3528 = vrot.slane %v2675, 5
        %v3529 = vsel %vm1828, %v3527, %v3528
        %v3530 = vrot.slane %v3412, 5
        %v3531 = vrot.slane %v3530, 4
        %v3532 = vrot.slane %v2677, 5
        %v3533 = vsel %vm1828, %v3531, %v3532
        %v3534 = vrot.slane %v3532, 4
        %v3535 = vrot.slane %v2678, 5
        %v3536 = vsel %vm1828, %v3534, %v3535
        %v3537 = vrot.slane %v3413, 5
        %v3538 = vrot.slane %v3537, 4
        %v3539 = vrot.slane %v2680, 5
        %v3540 = vsel %vm1828, %v3538, %v3539
        %v3541 = vrot.slane %v3539, 4
        %v3542 = vrot.slane %v2681, 5
        %v3543 = vsel %vm1828, %v3541, %v3542
        %v3544 = vrot.slane %v3414, 5
        %v3545 = vrot.slane %v3544, 4
        %v3546 = vrot.slane %v2683, 5
        %v3547 = vsel %vm1828, %v3545, %v3546
        %v3548 = vrot.slane %v3546, 4
        %v3549 = vrot.slane %v2684, 5
        %v3550 = vsel %vm1828, %v3548, %v3549
        %v3551 = vrot.slane %v3415, 5
        %v3552 = vrot.slane %v3551, 4
        %v3553 = vrot.slane %v2686, 5
        %v3554 = vsel %vm1828, %v3552, %v3553
        %v3555 = vrot.slane %v3553, 4
        %v3556 = vrot.slane %v2687, 5
        %v3557 = vsel %vm1828, %v3555, %v3556
        %v3558 = vrot.slane %v3416, 5
        %v3559 = vrot.slane %v3558, 4
        %v3560 = vrot.slane %v2689, 5
        %v3561 = vsel %vm1828, %v3559, %v3560
        %v3562 = vrot.slane %v3560, 4
        %v3563 = vrot.slane %v2690, 5
        %v3564 = vsel %vm1828, %v3562, %v3563
        %v3565 = vrot.slane %v3417, 5
        %v3566 = vrot.slane %v3565, 4
        %v3567 = vrot.slane %v2692, 5
        %v3568 = vsel %vm1828, %v3566, %v3567
        %v3569 = vrot.slane %v3567, 4
        %v3570 = vrot.slane %v2693, 5
        %v3571 = vsel %vm1828, %v3569, %v3570
        %v3572 = vrot.slane %v3418, 5
        %v3573 = vrot.slane %v3572, 4
        %v3574 = vrot.slane %v2695, 5
        %v3575 = vsel %vm1828, %v3573, %v3574
        %v3576 = vrot.slane %v3574, 4
        %v3577 = vrot.slane %v2696, 5
        %v3578 = vsel %vm1828, %v3576, %v3577
        %s3579 = scalar_lea.vmem [#allocation6], 320
        %v3580 = vld [vmem:[%s3579] sm:$0xf]
        %v3581 = vld [vmem:[%s3579 + $0x4] sm:$0xf]
        %v3582 = vld [vmem:[%s3579 + $0x8] sm:$0xf]
        %v3583 = vld [vmem:[%s3579 + $0xc] sm:$0xf]
        %v3584 = vld [vmem:[%s3579 + $0x10] sm:$0xf]
        %v3585 = vld [vmem:[%s3579 + $0x14] sm:$0xf]
        %v3586 = vld [vmem:[%s3579 + $0x18] sm:$0xf]
        %v3587 = vld [vmem:[%s3579 + $0x1c] sm:$0xf]
        %v3588 = vld [vmem:[%s3579 + $0x20] sm:$0xf]
        %v3589 = vld [vmem:[%s3579 + $0x24] sm:$0xf]
        %v3590 = vld [vmem:[%s3579 + $0x28] sm:$0xf]
        %v3591 = vld [vmem:[%s3579 + $0x2c] sm:$0xf]
        %v3592 = vld [vmem:[%s3579 + $0x30] sm:$0xf]
        %v3593 = vld [vmem:[%s3579 + $0x34] sm:$0xf]
        %v3594 = vld [vmem:[%s3579 + $0x38] sm:$0xf]
        %v3595 = vld [vmem:[%s3579 + $0x3c] sm:$0xf]
        %v3596 = vunpack.c.l.b16 %v3470
        %v3597 = vunpack.c.l.b16 %v3473
        %v3598 = vunpack.c.l.b16 %v3477
        %v3599 = vunpack.c.l.b16 %v3480
        %v3600 = vunpack.c.l.b16 %v3484
        %v3601 = vunpack.c.l.b16 %v3487
        %v3602 = vunpack.c.l.b16 %v3491
        %v3603 = vunpack.c.l.b16 %v3494
        %v3604 = vunpack.c.l.b16 %v3498
        %v3605 = vunpack.c.l.b16 %v3501
        %v3606 = vunpack.c.l.b16 %v3505
        %v3607 = vunpack.c.l.b16 %v3508
        %v3608 = vunpack.c.l.b16 %v3512
        %v3609 = vunpack.c.l.b16 %v3515
        %v3610 = vunpack.c.l.b16 %v3519
        %v3611 = vunpack.c.l.b16 %v3522
        %v3612 = vunpack.c.l.b16 %v3526
        %v3613 = vunpack.c.l.b16 %v3529
        %v3614 = vunpack.c.l.b16 %v3533
        %v3615 = vunpack.c.l.b16 %v3536
        %v3616 = vunpack.c.l.b16 %v3540
        %v3617 = vunpack.c.l.b16 %v3543
        %v3618 = vunpack.c.l.b16 %v3547
        %v3619 = vunpack.c.l.b16 %v3550
        %v3620 = vunpack.c.l.b16 %v3554
        %v3621 = vunpack.c.l.b16 %v3557
        %v3622 = vunpack.c.l.b16 %v3561
        %v3623 = vunpack.c.l.b16 %v3564
        %v3624 = vunpack.c.l.b16 %v3568
        %v3625 = vunpack.c.l.b16 %v3571
        %v3626 = vunpack.c.l.b16 %v3575
        %v3627 = vunpack.c.l.b16 %v3578
        %v3628 = vpack.c.b16 %v3597, %v3596
        %v3629 = vpack.c.b16 %v3599, %v3598
        %v3630 = vpack.c.b16 %v3601, %v3600
        %v3631 = vpack.c.b16 %v3603, %v3602
        %v3632 = vpack.c.b16 %v3605, %v3604
        %v3633 = vpack.c.b16 %v3607, %v3606
        %v3634 = vpack.c.b16 %v3609, %v3608
        %v3635 = vpack.c.b16 %v3611, %v3610
        %v3636 = vpack.c.b16 %v3613, %v3612
        %v3637 = vpack.c.b16 %v3615, %v3614
        %v3638 = vpack.c.b16 %v3617, %v3616
        %v3639 = vpack.c.b16 %v3619, %v3618
        %v3640 = vpack.c.b16 %v3621, %v3620
        %v3641 = vpack.c.b16 %v3623, %v3622
        %v3642 = vpack.c.b16 %v3625, %v3624
        %v3643 = vpack.c.b16 %v3627, %v3626
        %v3676 = vunpack.c.l.b16 %v3580
        %v3677 = vunpack.c.l.b16 %v3581
        %v3678 = vunpack.c.l.b16 %v3582
        %v3679 = vunpack.c.l.b16 %v3583
        %v3680 = vunpack.c.l.b16 %v3584
        %v3681 = vunpack.c.l.b16 %v3585
        %v3682 = vunpack.c.l.b16 %v3586
        %v3683 = vunpack.c.l.b16 %v3587
        %v3684 = vunpack.c.l.b16 %v3588
        %v3685 = vunpack.c.l.b16 %v3589
        %v3686 = vunpack.c.l.b16 %v3590
        %v3687 = vunpack.c.l.b16 %v3591
        %v3688 = vunpack.c.l.b16 %v3592
        %v3689 = vunpack.c.l.b16 %v3593
        %v3690 = vunpack.c.l.b16 %v3594
        %v3691 = vunpack.c.l.b16 %v3595
        %v3692 = vpack.c.b16 %v3677, %v3676
        %v3693 = vpack.c.b16 %v3679, %v3678
        %v3694 = vpack.c.b16 %v3681, %v3680
        %v3695 = vpack.c.b16 %v3683, %v3682
        %v3696 = vpack.c.b16 %v3685, %v3684
        %v3697 = vpack.c.b16 %v3687, %v3686
        %v3698 = vpack.c.b16 %v3689, %v3688
        %v3699 = vpack.c.b16 %v3691, %v3690
        %3708 = vmatprep.subr.bf16.mxu0 0
        %3709 = vmatpush1.bf16.msra.mxu0 %v3692
        %3710 = vmatprep.subr.bf16.mxu0 0
        %3711 = vmatpush1.bf16.msra.mxu0 %v3693
        %3712 = vmatprep.subr.bf16.mxu0 0
        %3713 = vmatpush1.bf16.msra.mxu0 %v3694
        %3714 = vmatprep.subr.bf16.mxu0 0
        %3715 = vmatpush1.bf16.msra.mxu0 %v3695
        %3716 = vmatprep.subr.bf16.mxu0 0
        %3717 = vmatpush1.bf16.msra.mxu0 %v3696
        %3718 = vmatprep.subr.bf16.mxu0 0
        %3719 = vmatpush1.bf16.msra.mxu0 %v3697
        %3720 = vmatprep.subr.bf16.mxu0 0
        %3721 = vmatpush1.bf16.msra.mxu0 %v3698
        %3722 = vmatprep.subr.bf16.mxu0 0
        %3723 = vmatpush1.bf16.msra.mxu0 %v3699
        %3724 = vmatprep.subr.bf16.mxu0 0
        %3725 = vmatpush1.bf16.msra.mxu0 0
        %3726 = vmatprep.subr.bf16.mxu0 0
        %3727 = vmatpush1.bf16.msra.mxu0 0
        %3728 = vmatprep.subr.bf16.mxu0 0
        %3729 = vmatpush1.bf16.msra.mxu0 0
        %3730 = vmatprep.subr.bf16.mxu0 0
        %3731 = vmatpush1.bf16.msra.mxu0 0
        %3732 = vmatprep.subr.bf16.mxu0 0
        %3733 = vmatpush1.bf16.msra.mxu0 0
        %3734 = vmatprep.subr.bf16.mxu0 0
        %3735 = vmatpush1.bf16.msra.mxu0 0
        %3736 = vmatprep.subr.bf16.mxu0 0
        %3737 = vmatpush1.bf16.msra.mxu0 0
        %3738 = vmatprep.subr.bf16.mxu0 0
        %3739 = vmatpush1.bf16.msra.mxu0 0
        %3740 = vmatprep.mubr.bf16.mxu0 0
        %3741 = vmatmul.mubr.bf16.gmra.mrb[0].mxu0 %v3628
        %v3742 = vpop.f32.mrb[0].mxu0
        %v3743 = vadd.f32 0.0, %v3742
        %v3744 = vpop.f32.mrb[0].mxu0
        %v3745 = vpop.f32.mrb[0].mxu0
        %v3746 = vadd.f32 0.0, %v3745
        %v3747 = vpop.f32.mrb[0].mxu0
        %3748 = vmatprep.mubr.bf16.mxu0 0
        %3749 = vmatmul.mubr.bf16.gmra.mrb[0].mxu0 %v3629
        %v3750 = vpop.f32.mrb[0].mxu0
        %v3751 = vadd.f32 0.0, %v3750
        %v3752 = vpop.f32.mrb[0].mxu0
        %v3753 = vpop.f32.mrb[0].mxu0
        %v3754 = vadd.f32 0.0, %v3753
        %v3755 = vpop.f32.mrb[0].mxu0
        %3756 = vmatprep.mubr.bf16.mxu0 0
        %3757 = vmatmul.mubr.bf16.gmra.mrb[0].mxu0 %v3630
        %v3758 = vpop.f32.mrb[0].mxu0
        %v3759 = vadd.f32 0.0, %v3758
        %v3760 = vpop.f32.mrb[0].mxu0
        %v3761 = vpop.f32.mrb[0].mxu0
        %v3762 = vadd.f32 0.0, %v3761
        %v3763 = vpop.f32.mrb[0].mxu0
        %3764 = vmatprep.mubr.bf16.mxu0 0
        %3765 = vmatmul.mubr.bf16.gmra.mrb[0].mxu0 %v3631
        %v3766 = vpop.f32.mrb[0].mxu0
        %v3767 = vadd.f32 0.0, %v3766
        %v3768 = vpop.f32.mrb[0].mxu0
        %v3769 = vpop.f32.mrb[0].mxu0
        %v3770 = vadd.f32 0.0, %v3769
        %v3771 = vpop.f32.mrb[0].mxu0
        %3772 = vmatprep.mubr.bf16.mxu0 0
        %3773 = vmatmul.mubr.bf16.gmra.mrb[0].mxu0 %v3632
        %v3774 = vpop.f32.mrb[0].mxu0
        %v3775 = vadd.f32 0.0, %v3774
        %v3776 = vpop.f32.mrb[0].mxu0
        %v3777 = vpop.f32.mrb[0].mxu0
        %v3778 = vadd.f32 0.0, %v3777
        %v3779 = vpop.f32.mrb[0].mxu0
        %3780 = vmatprep.mubr.bf16.mxu0 0
        %3781 = vmatmul.mubr.bf16.gmra.mrb[0].mxu0 %v3633
        %v3782 = vpop.f32.mrb[0].mxu0
        %v3783 = vadd.f32 0.0, %v3782
        %v3784 = vpop.f32.mrb[0].mxu0
        %v3785 = vpop.f32.mrb[0].mxu0
        %v3786 = vadd.f32 0.0, %v3785
        %v3787 = vpop.f32.mrb[0].mxu0
        %3788 = vmatprep.mubr.bf16.mxu0 0
        %3789 = vmatmul.mubr.bf16.gmra.mrb[0].mxu0 %v3634
        %v3790 = vpop.f32.mrb[0].mxu0
        %v3791 = vadd.f32 0.0, %v3790
        %v3792 = vpop.f32.mrb[0].mxu0
        %v3793 = vpop.f32.mrb[0].mxu0
        %v3794 = vadd.f32 0.0, %v3793
        %v3795 = vpop.f32.mrb[0].mxu0
        %3796 = vmatprep.mubr.bf16.mxu0 0
        %3797 = vmatmul.mubr.bf16.gmra.mrb[0].mxu0 %v3635
        %v3798 = vpop.f32.mrb[0].mxu0
        %v3799 = vadd.f32 0.0, %v3798
        %v3800 = vpop.f32.mrb[0].mxu0
        %v3801 = vpop.f32.mrb[0].mxu0
        %v3802 = vadd.f32 0.0, %v3801
        %v3803 = vpop.f32.mrb[0].mxu0
        %3804 = vmatprep.mubr.bf16.mxu0 0
        %3805 = vmatmul.mubr.bf16.gmra.mrb[0].mxu0 %v3636
        %v3806 = vpop.f32.mrb[0].mxu0
        %v3807 = vadd.f32 0.0, %v3806
        %v3808 = vpop.f32.mrb[0].mxu0
        %v3809 = vpop.f32.mrb[0].mxu0
        %v3810 = vadd.f32 0.0, %v3809
        %v3811 = vpop.f32.mrb[0].mxu0
        %3812 = vmatprep.mubr.bf16.mxu0 0
        %3813 = vmatmul.mubr.bf16.gmra.mrb[0].mxu0 %v3637
        %v3814 = vpop.f32.mrb[0].mxu0
        %v3815 = vadd.f32 0.0, %v3814
        %v3816 = vpop.f32.mrb[0].mxu0
        %v3817 = vpop.f32.mrb[0].mxu0
        %v3818 = vadd.f32 0.0, %v3817
        %v3819 = vpop.f32.mrb[0].mxu0
        %3820 = vmatprep.mubr.bf16.mxu0 0
        %3821 = vmatmul.mubr.bf16.gmra.mrb[0].mxu0 %v3638
        %v3822 = vpop.f32.mrb[0].mxu0
        %v3823 = vadd.f32 0.0, %v3822
        %v3824 = vpop.f32.mrb[0].mxu0
        %v3825 = vpop.f32.mrb[0].mxu0
        %v3826 = vadd.f32 0.0, %v3825
        %v3827 = vpop.f32.mrb[0].mxu0
        %3828 = vmatprep.mubr.bf16.mxu0 0
        %3829 = vmatmul.mubr.bf16.gmra.mrb[0].mxu0 %v3639
        %v3830 = vpop.f32.mrb[0].mxu0
        %v3831 = vadd.f32 0.0, %v3830
        %v3832 = vpop.f32.mrb[0].mxu0
        %v3833 = vpop.f32.mrb[0].mxu0
        %v3834 = vadd.f32 0.0, %v3833
        %v3835 = vpop.f32.mrb[0].mxu0
        %3836 = vmatprep.mubr.bf16.mxu0 0
        %3837 = vmatmul.mubr.bf16.gmra.mrb[0].mxu0 %v3640
        %v3838 = vpop.f32.mrb[0].mxu0
        %v3839 = vadd.f32 0.0, %v3838
        %v3840 = vpop.f32.mrb[0].mxu0
        %v3841 = vpop.f32.mrb[0].mxu0
        %v3842 = vadd.f32 0.0, %v3841
        %v3843 = vpop.f32.mrb[0].mxu0
        %3844 = vmatprep.mubr.bf16.mxu0 0
        %3845 = vmatmul.mubr.bf16.gmra.mrb[0].mxu0 %v3641
        %v3846 = vpop.f32.mrb[0].mxu0
        %v3847 = vadd.f32 0.0, %v3846
        %v3848 = vpop.f32.mrb[0].mxu0
        %v3849 = vpop.f32.mrb[0].mxu0
        %v3850 = vadd.f32 0.0, %v3849
        %v3851 = vpop.f32.mrb[0].mxu0
        %3852 = vmatprep.mubr.bf16.mxu0 0
        %3853 = vmatmul.mubr.bf16.gmra.mrb[0].mxu0 %v3642
        %v3854 = vpop.f32.mrb[0].mxu0
        %v3855 = vadd.f32 0.0, %v3854
        %v3856 = vpop.f32.mrb[0].mxu0
        %v3857 = vpop.f32.mrb[0].mxu0
        %v3858 = vadd.f32 0.0, %v3857
        %v3859 = vpop.f32.mrb[0].mxu0
        %3860 = vmatprep.mubr.bf16.mxu0 0
        %3861 = vmatmul.mubr.bf16.gmra.mrb[0].mxu0 %v3643
        %v3862 = vpop.f32.mrb[0].mxu0
        %v3863 = vadd.f32 0.0, %v3862
        %v3864 = vpop.f32.mrb[0].mxu0
        %v3865 = vpop.f32.mrb[0].mxu0
        %v3866 = vadd.f32 0.0, %v3865
        %v3867 = vpop.f32.mrb[0].mxu0
        %3868 = vdwg.mxu0
        %v3869 = vadd.f32 %v3371, %v3743
        %v3870 = vadd.f32 %v3372, %v3746
        %v3871 = vadd.f32 %v3373, %v3751
        %v3872 = vadd.f32 %v3374, %v3754
        %v3873 = vadd.f32 %v3375, %v3759
        %v3874 = vadd.f32 %v3376, %v3762
        %v3875 = vadd.f32 %v3377, %v3767
        %v3876 = vadd.f32 %v3378, %v3770
        %v3877 = vadd.f32 %v3379, %v3775
        %v3878 = vadd.f32 %v3380, %v3778
        %v3879 = vadd.f32 %v3381, %v3783
        %v3880 = vadd.f32 %v3382, %v3786
        %v3881 = vadd.f32 %v3383, %v3791
        %v3882 = vadd.f32 %v3384, %v3794
        %v3883 = vadd.f32 %v3385, %v3799
        %v3884 = vadd.f32 %v3386, %v3802
        %v3885 = vadd.f32 %v3387, %v3807
        %v3886 = vadd.f32 %v3388, %v3810
        %v3887 = vadd.f32 %v3389, %v3815
        %v3888 = vadd.f32 %v3390, %v3818
        %v3889 = vadd.f32 %v3391, %v3823
        %v3890 = vadd.f32 %v3392, %v3826
        %v3891 = vadd.f32 %v3393, %v3831
        %v3892 = vadd.f32 %v3394, %v3834
        %v3893 = vadd.f32 %v3395, %v3839
        %v3894 = vadd.f32 %v3396, %v3842
        %v3895 = vadd.f32 %v3397, %v3847
        %v3896 = vadd.f32 %v3398, %v3850
        %v3897 = vadd.f32 %v3399, %v3855
        %v3898 = vadd.f32 %v3400, %v3858
        %v3899 = vadd.f32 %v3401, %v3863
        %v3900 = vadd.f32 %v3402, %v3866
        %s3901 = scalar_lea.vmem [#allocation2], 24
        %v3902 = vld [vmem:[%s3901] sm:$0xf]
        %v3903 = vld [vmem:[%s3901 + $0x4] sm:$0xf]
        %v3904 = vld [vmem:[%s3901 + $0xc] sm:$0xf]
        %v3905 = vld [vmem:[%s3901 + $0x10] sm:$0xf]
        %v3906 = vld [vmem:[%s3901 + $0x18] sm:$0xf]
        %v3907 = vld [vmem:[%s3901 + $0x1c] sm:$0xf]
        %v3908 = vld [vmem:[%s3901 + $0x24] sm:$0xf]
        %v3909 = vld [vmem:[%s3901 + $0x28] sm:$0xf]
        %v3910 = vld [vmem:[%s3901 + $0x30] sm:$0xf]
        %v3911 = vld [vmem:[%s3901 + $0x34] sm:$0xf]
        %v3912 = vld [vmem:[%s3901 + $0x3c] sm:$0xf]
        %v3913 = vld [vmem:[%s3901 + $0x40] sm:$0xf]
        %v3914 = vld [vmem:[%s3901 + $0x48] sm:$0xf]
        %v3915 = vld [vmem:[%s3901 + $0x4c] sm:$0xf]
        %v3916 = vld [vmem:[%s3901 + $0x54] sm:$0xf]
        %v3917 = vld [vmem:[%s3901 + $0x58] sm:$0xf]
        %v3918 = vld [vmem:[%s3901 + $0x60] sm:$0xf]
        %v3919 = vld [vmem:[%s3901 + $0x64] sm:$0xf]
        %v3920 = vld [vmem:[%s3901 + $0x6c] sm:$0xf]
        %v3921 = vld [vmem:[%s3901 + $0x70] sm:$0xf]
        %v3922 = vld [vmem:[%s3901 + $0x78] sm:$0xf]
        %v3923 = vld [vmem:[%s3901 + $0x7c] sm:$0xf]
        %v3924 = vld [vmem:[%s3901 + $0x84] sm:$0xf]
        %v3925 = vld [vmem:[%s3901 + $0x88] sm:$0xf]
        %v3926 = vld [vmem:[%s3901 + $0x90] sm:$0xf]
        %v3927 = vld [vmem:[%s3901 + $0x94] sm:$0xf]
        %v3928 = vld [vmem:[%s3901 + $0x9c] sm:$0xf]
        %v3929 = vld [vmem:[%s3901 + $0xa0] sm:$0xf]
        %v3930 = vld [vmem:[%s3901 + $0xa8] sm:$0xf]
        %v3931 = vld [vmem:[%s3901 + $0xac] sm:$0xf]
        %v3932 = vld [vmem:[%s3901 + $0xb4] sm:$0xf]
        %v3933 = vld [vmem:[%s3901 + $0xb8] sm:$0xf]
        %s3934 = scalar_lea.vmem [#allocation6], 384
        %v3935 = vld [vmem:[%s3934] sm:$0xf]
        %v3936 = vld [vmem:[%s3934 + $0x4] sm:$0xf]
        %v3937 = vld [vmem:[%s3934 + $0x8] sm:$0xf]
        %v3938 = vld [vmem:[%s3934 + $0xc] sm:$0xf]
        %v3939 = vld [vmem:[%s3934 + $0x10] sm:$0xf]
        %v3940 = vld [vmem:[%s3934 + $0x14] sm:$0xf]
        %v3941 = vld [vmem:[%s3934 + $0x18] sm:$0xf]
        %v3942 = vld [vmem:[%s3934 + $0x1c] sm:$0xf]
        %v3943 = vld [vmem:[%s3934 + $0x20] sm:$0xf]
        %v3944 = vld [vmem:[%s3934 + $0x24] sm:$0xf]
        %v3945 = vld [vmem:[%s3934 + $0x28] sm:$0xf]
        %v3946 = vld [vmem:[%s3934 + $0x2c] sm:$0xf]
        %v3947 = vld [vmem:[%s3934 + $0x30] sm:$0xf]
        %v3948 = vld [vmem:[%s3934 + $0x34] sm:$0xf]
        %v3949 = vld [vmem:[%s3934 + $0x38] sm:$0xf]
        %v3950 = vld [vmem:[%s3934 + $0x3c] sm:$0xf]
        %v3983 = vunpack.c.l.b16 %v3902
        %v3984 = vunpack.c.l.b16 %v3903
        %v3985 = vunpack.c.l.b16 %v3904
        %v3986 = vunpack.c.l.b16 %v3905
        %v3987 = vunpack.c.l.b16 %v3906
        %v3988 = vunpack.c.l.b16 %v3907
        %v3989 = vunpack.c.l.b16 %v3908
        %v3990 = vunpack.c.l.b16 %v3909
        %v3991 = vunpack.c.l.b16 %v3910
        %v3992 = vunpack.c.l.b16 %v3911
        %v3993 = vunpack.c.l.b16 %v3912
        %v3994 = vunpack.c.l.b16 %v3913
        %v3995 = vunpack.c.l.b16 %v3914
        %v3996 = vunpack.c.l.b16 %v3915
        %v3997 = vunpack.c.l.b16 %v3916
        %v3998 = vunpack.c.l.b16 %v3917
        %v3999 = vunpack.c.l.b16 %v3918
        %v4000 = vunpack.c.l.b16 %v3919
        %v4001 = vunpack.c.l.b16 %v3920
        %v4002 = vunpack.c.l.b16 %v3921
        %v4003 = vunpack.c.l.b16 %v3922
        %v4004 = vunpack.c.l.b16 %v3923
        %v4005 = vunpack.c.l.b16 %v3924
        %v4006 = vunpack.c.l.b16 %v3925
        %v4007 = vunpack.c.l.b16 %v3926
        %v4008 = vunpack.c.l.b16 %v3927
        %v4009 = vunpack.c.l.b16 %v3928
        %v4010 = vunpack.c.l.b16 %v3929
        %v4011 = vunpack.c.l.b16 %v3930
        %v4012 = vunpack.c.l.b16 %v3931
        %v4013 = vunpack.c.l.b16 %v3932
        %v4014 = vunpack.c.l.b16 %v3933
        %v4015 = vpack.c.b16 %v3984, %v3983
        %v4016 = vpack.c.b16 %v3986, %v3985
        %v4017 = vpack.c.b16 %v3988, %v3987
        %v4018 = vpack.c.b16 %v3990, %v3989
        %v4019 = vpack.c.b16 %v3992, %v3991
        %v4020 = vpack.c.b16 %v3994, %v3993
        %v4021 = vpack.c.b16 %v3996, %v3995
        %v4022 = vpack.c.b16 %v3998, %v3997
        %v4023 = vpack.c.b16 %v4000, %v3999
        %v4024 = vpack.c.b16 %v4002, %v4001
        %v4025 = vpack.c.b16 %v4004, %v4003
        %v4026 = vpack.c.b16 %v4006, %v4005
        %v4027 = vpack.c.b16 %v4008, %v4007
        %v4028 = vpack.c.b16 %v4010, %v4009
        %v4029 = vpack.c.b16 %v4012, %v4011
        %v4030 = vpack.c.b16 %v4014, %v4013
        %v4063 = vunpack.c.l.b16 %v3935
        %v4064 = vunpack.c.l.b16 %v3936
        %v4065 = vunpack.c.l.b16 %v3937
        %v4066 = vunpack.c.l.b16 %v3938
        %v4067 = vunpack.c.l.b16 %v3939
        %v4068 = vunpack.c.l.b16 %v3940
        %v4069 = vunpack.c.l.b16 %v3941
        %v4070 = vunpack.c.l.b16 %v3942
        %v4071 = vunpack.c.l.b16 %v3943
        %v4072 = vunpack.c.l.b16 %v3944
        %v4073 = vunpack.c.l.b16 %v3945
        %v4074 = vunpack.c.l.b16 %v3946
        %v4075 = vunpack.c.l.b16 %v3947
        %v4076 = vunpack.c.l.b16 %v3948
        %v4077 = vunpack.c.l.b16 %v3949
        %v4078 = vunpack.c.l.b16 %v3950
        %v4079 = vpack.c.b16 %v4064, %v4063
        %v4080 = vpack.c.b16 %v4066, %v4065
        %v4081 = vpack.c.b16 %v4068, %v4067
        %v4082 = vpack.c.b16 %v4070, %v4069
        %v4083 = vpack.c.b16 %v4072, %v4071
        %v4084 = vpack.c.b16 %v4074, %v4073
        %v4085 = vpack.c.b16 %v4076, %v4075
        %v4086 = vpack.c.b16 %v4078, %v4077
        %4095 = vmatprep.subr.bf16.mxu0 0
        %4096 = vmatpush1.bf16.msra.mxu0 %v4079
        %4097 = vmatprep.subr.bf16.mxu0 0
        %4098 = vmatpush1.bf16.msra.mxu0 %v4080
        %4099 = vmatprep.subr.bf16.mxu0 0
        %4100 = vmatpush1.bf16.msra.mxu0 %v4081
        %4101 = vmatprep.subr.bf16.mxu0 0
        %4102 = vmatpush1.bf16.msra.mxu0 %v4082
        %4103 = vmatprep.subr.bf16.mxu0 0
        %4104 = vmatpush1.bf16.msra.mxu0 %v4083
        %4105 = vmatprep.subr.bf16.mxu0 0
        %4106 = vmatpush1.bf16.msra.mxu0 %v4084
        %4107 = vmatprep.subr.bf16.mxu0 0
        %4108 = vmatpush1.bf16.msra.mxu0 %v4085
        %4109 = vmatprep.subr.bf16.mxu0 0
        %4110 = vmatpush1.bf16.msra.mxu0 %v4086
        %4111 = vmatprep.subr.bf16.mxu0 0
        %4112 = vmatpush1.bf16.msra.mxu0 0
        %4113 = vmatprep.subr.bf16.mxu0 0
        %4114 = vmatpush1.bf16.msra.mxu0 0
        %4115 = vmatprep.subr.bf16.mxu0 0
        %4116 = vmatpush1.bf16.msra.mxu0 0
        %4117 = vmatprep.subr.bf16.mxu0 0
        %4118 = vmatpush1.bf16.msra.mxu0 0
        %4119 = vmatprep.subr.bf16.mxu0 0
        %4120 = vmatpush1.bf16.msra.mxu0 0
        %4121 = vmatprep.subr.bf16.mxu0 0
        %4122 = vmatpush1.bf16.msra.mxu0 0
        %4123 = vmatprep.subr.bf16.mxu0 0
        %4124 = vmatpush1.bf16.msra.mxu0 0
        %4125 = vmatprep.subr.bf16.mxu0 0
        %4126 = vmatpush1.bf16.msra.mxu0 0
        %4127 = vmatprep.mubr.bf16.mxu0 0
        %4128 = vmatmul.mubr.bf16.gmra.mrb[0].mxu0 %v4015
        %v4129 = vpop.f32.mrb[0].mxu0
        %v4130 = vadd.f32 0.0, %v4129
        %v4131 = vpop.f32.mrb[0].mxu0
        %v4132 = vpop.f32.mrb[0].mxu0
        %v4133 = vadd.f32 0.0, %v4132
        %v4134 = vpop.f32.mrb[0].mxu0
        %4135 = vmatprep.mubr.bf16.mxu0 0
        %4136 = vmatmul.mubr.bf16.gmra.mrb[0].mxu0 %v4016
        %v4137 = vpop.f32.mrb[0].mxu0
        %v4138 = vadd.f32 0.0, %v4137
        %v4139 = vpop.f32.mrb[0].mxu0
        %v4140 = vpop.f32.mrb[0].mxu0
        %v4141 = vadd.f32 0.0, %v4140
        %v4142 = vpop.f32.mrb[0].mxu0
        %4143 = vmatprep.mubr.bf16.mxu0 0
        %4144 = vmatmul.mubr.bf16.gmra.mrb[0].mxu0 %v4017
        %v4145 = vpop.f32.mrb[0].mxu0
        %v4146 = vadd.f32 0.0, %v4145
        %v4147 = vpop.f32.mrb[0].mxu0
        %v4148 = vpop.f32.mrb[0].mxu0
        %v4149 = vadd.f32 0.0, %v4148
        %v4150 = vpop.f32.mrb[0].mxu0
        %4151 = vmatprep.mubr.bf16.mxu0 0
        %4152 = vmatmul.mubr.bf16.gmra.mrb[0].mxu0 %v4018
        %v4153 = vpop.f32.mrb[0].mxu0
        %v4154 = vadd.f32 0.0, %v4153
        %v4155 = vpop.f32.mrb[0].mxu0
        %v4156 = vpop.f32.mrb[0].mxu0
        %v4157 = vadd.f32 0.0, %v4156
        %v4158 = vpop.f32.mrb[0].mxu0
        %4159 = vmatprep.mubr.bf16.mxu0 0
        %4160 = vmatmul.mubr.bf16.gmra.mrb[0].mxu0 %v4019
        %v4161 = vpop.f32.mrb[0].mxu0
        %v4162 = vadd.f32 0.0, %v4161
        %v4163 = vpop.f32.mrb[0].mxu0
        %v4164 = vpop.f32.mrb[0].mxu0
        %v4165 = vadd.f32 0.0, %v4164
        %v4166 = vpop.f32.mrb[0].mxu0
        %4167 = vmatprep.mubr.bf16.mxu0 0
        %4168 = vmatmul.mubr.bf16.gmra.mrb[0].mxu0 %v4020
        %v4169 = vpop.f32.mrb[0].mxu0
        %v4170 = vadd.f32 0.0, %v4169
        %v4171 = vpop.f32.mrb[0].mxu0
        %v4172 = vpop.f32.mrb[0].mxu0
        %v4173 = vadd.f32 0.0, %v4172
        %v4174 = vpop.f32.mrb[0].mxu0
        %4175 = vmatprep.mubr.bf16.mxu0 0
        %4176 = vmatmul.mubr.bf16.gmra.mrb[0].mxu0 %v4021
        %v4177 = vpop.f32.mrb[0].mxu0
        %v4178 = vadd.f32 0.0, %v4177
        %v4179 = vpop.f32.mrb[0].mxu0
        %v4180 = vpop.f32.mrb[0].mxu0
        %v4181 = vadd.f32 0.0, %v4180
        %v4182 = vpop.f32.mrb[0].mxu0
        %4183 = vmatprep.mubr.bf16.mxu0 0
        %4184 = vmatmul.mubr.bf16.gmra.mrb[0].mxu0 %v4022
        %v4185 = vpop.f32.mrb[0].mxu0
        %v4186 = vadd.f32 0.0, %v4185
        %v4187 = vpop.f32.mrb[0].mxu0
        %v4188 = vpop.f32.mrb[0].mxu0
        %v4189 = vadd.f32 0.0, %v4188
        %v4190 = vpop.f32.mrb[0].mxu0
        %4191 = vmatprep.mubr.bf16.mxu0 0
        %4192 = vmatmul.mubr.bf16.gmra.mrb[0].mxu0 %v4023
        %v4193 = vpop.f32.mrb[0].mxu0
        %v4194 = vadd.f32 0.0, %v4193
        %v4195 = vpop.f32.mrb[0].mxu0
        %v4196 = vpop.f32.mrb[0].mxu0
        %v4197 = vadd.f32 0.0, %v4196
        %v4198 = vpop.f32.mrb[0].mxu0
        %4199 = vmatprep.mubr.bf16.mxu0 0
        %4200 = vmatmul.mubr.bf16.gmra.mrb[0].mxu0 %v4024
        %v4201 = vpop.f32.mrb[0].mxu0
        %v4202 = vadd.f32 0.0, %v4201
        %v4203 = vpop.f32.mrb[0].mxu0
        %v4204 = vpop.f32.mrb[0].mxu0
        %v4205 = vadd.f32 0.0, %v4204
        %v4206 = vpop.f32.mrb[0].mxu0
        %4207 = vmatprep.mubr.bf16.mxu0 0
        %4208 = vmatmul.mubr.bf16.gmra.mrb[0].mxu0 %v4025
        %v4209 = vpop.f32.mrb[0].mxu0
        %v4210 = vadd.f32 0.0, %v4209
        %v4211 = vpop.f32.mrb[0].mxu0
        %v4212 = vpop.f32.mrb[0].mxu0
        %v4213 = vadd.f32 0.0, %v4212
        %v4214 = vpop.f32.mrb[0].mxu0
        %4215 = vmatprep.mubr.bf16.mxu0 0
        %4216 = vmatmul.mubr.bf16.gmra.mrb[0].mxu0 %v4026
        %v4217 = vpop.f32.mrb[0].mxu0
        %v4218 = vadd.f32 0.0, %v4217
        %v4219 = vpop.f32.mrb[0].mxu0
        %v4220 = vpop.f32.mrb[0].mxu0
        %v4221 = vadd.f32 0.0, %v4220
        %v4222 = vpop.f32.mrb[0].mxu0
        %4223 = vmatprep.mubr.bf16.mxu0 0
        %4224 = vmatmul.mubr.bf16.gmra.mrb[0].mxu0 %v4027
        %v4225 = vpop.f32.mrb[0].mxu0
        %v4226 = vadd.f32 0.0, %v4225
        %v4227 = vpop.f32.mrb[0].mxu0
        %v4228 = vpop.f32.mrb[0].mxu0
        %v4229 = vadd.f32 0.0, %v4228
        %v4230 = vpop.f32.mrb[0].mxu0
        %4231 = vmatprep.mubr.bf16.mxu0 0
        %4232 = vmatmul.mubr.bf16.gmra.mrb[0].mxu0 %v4028
        %v4233 = vpop.f32.mrb[0].mxu0
        %v4234 = vadd.f32 0.0, %v4233
        %v4235 = vpop.f32.mrb[0].mxu0
        %v4236 = vpop.f32.mrb[0].mxu0
        %v4237 = vadd.f32 0.0, %v4236
        %v4238 = vpop.f32.mrb[0].mxu0
        %4239 = vmatprep.mubr.bf16.mxu0 0
        %4240 = vmatmul.mubr.bf16.gmra.mrb[0].mxu0 %v4029
        %v4241 = vpop.f32.mrb[0].mxu0
        %v4242 = vadd.f32 0.0, %v4241
        %v4243 = vpop.f32.mrb[0].mxu0
        %v4244 = vpop.f32.mrb[0].mxu0
        %v4245 = vadd.f32 0.0, %v4244
        %v4246 = vpop.f32.mrb[0].mxu0
        %4247 = vmatprep.mubr.bf16.mxu0 0
        %4248 = vmatmul.mubr.bf16.gmra.mrb[0].mxu0 %v4030
        %v4249 = vpop.f32.mrb[0].mxu0
        %v4250 = vadd.f32 0.0, %v4249
        %v4251 = vpop.f32.mrb[0].mxu0
        %v4252 = vpop.f32.mrb[0].mxu0
        %v4253 = vadd.f32 0.0, %v4252
        %v4254 = vpop.f32.mrb[0].mxu0
        %4255 = vdwg.mxu0
        %v4256 = vadd.f32 %v3869, %v4130
        %v4257 = vadd.f32 %v3870, %v4133
        %v4258 = vadd.f32 %v3871, %v4138
        %v4259 = vadd.f32 %v3872, %v4141
        %v4260 = vadd.f32 %v3873, %v4146
        %v4261 = vadd.f32 %v3874, %v4149
        %v4262 = vadd.f32 %v3875, %v4154
        %v4263 = vadd.f32 %v3876, %v4157
        %v4264 = vadd.f32 %v3877, %v4162
        %v4265 = vadd.f32 %v3878, %v4165
        %v4266 = vadd.f32 %v3879, %v4170
        %v4267 = vadd.f32 %v3880, %v4173
        %v4268 = vadd.f32 %v3881, %v4178
        %v4269 = vadd.f32 %v3882, %v4181
        %v4270 = vadd.f32 %v3883, %v4186
        %v4271 = vadd.f32 %v3884, %v4189
        %v4272 = vadd.f32 %v3885, %v4194
        %v4273 = vadd.f32 %v3886, %v4197
        %v4274 = vadd.f32 %v3887, %v4202
        %v4275 = vadd.f32 %v3888, %v4205
        %v4276 = vadd.f32 %v3889, %v4210
        %v4277 = vadd.f32 %v3890, %v4213
        %v4278 = vadd.f32 %v3891, %v4218
        %v4279 = vadd.f32 %v3892, %v4221
        %v4280 = vadd.f32 %v3893, %v4226
        %v4281 = vadd.f32 %v3894, %v4229
        %v4282 = vadd.f32 %v3895, %v4234
        %v4283 = vadd.f32 %v3896, %v4237
        %v4284 = vadd.f32 %v3897, %v4242
        %v4285 = vadd.f32 %v3898, %v4245
        %v4286 = vadd.f32 %v3899, %v4250
        %v4287 = vadd.f32 %v3900, %v4253
        %v4288 = vld [vmem:[%s3901] sm:$0xf]
        %v4289 = vld [vmem:[%s3901 + $0x4] sm:$0xf]
        %v4290 = vld [vmem:[%s3901 + $0x8] sm:$0x1]
        %v4291 = vld [vmem:[%s3901 + $0xc] sm:$0xf]
        %v4292 = vld [vmem:[%s3901 + $0x10] sm:$0xf]
        %v4293 = vld [vmem:[%s3901 + $0x14] sm:$0x1]
        %v4294 = vld [vmem:[%s3901 + $0x18] sm:$0xf]
        %v4295 = vld [vmem:[%s3901 + $0x1c] sm:$0xf]
        %v4296 = vld [vmem:[%s3901 + $0x20] sm:$0x1]
        %v4297 = vld [vmem:[%s3901 + $0x24] sm:$0xf]
        %v4298 = vld [vmem:[%s3901 + $0x28] sm:$0xf]
        %v4299 = vld [vmem:[%s3901 + $0x2c] sm:$0x1]
        %v4300 = vld [vmem:[%s3901 + $0x30] sm:$0xf]
        %v4301 = vld [vmem:[%s3901 + $0x34] sm:$0xf]
        %v4302 = vld [vmem:[%s3901 + $0x38] sm:$0x1]
        %v4303 = vld [vmem:[%s3901 + $0x3c] sm:$0xf]
        %v4304 = vld [vmem:[%s3901 + $0x40] sm:$0xf]
        %v4305 = vld [vmem:[%s3901 + $0x44] sm:$0x1]
        %v4306 = vld [vmem:[%s3901 + $0x48] sm:$0xf]
        %v4307 = vld [vmem:[%s3901 + $0x4c] sm:$0xf]
        %v4308 = vld [vmem:[%s3901 + $0x50] sm:$0x1]
        %v4309 = vld [vmem:[%s3901 + $0x54] sm:$0xf]
        %v4310 = vld [vmem:[%s3901 + $0x58] sm:$0xf]
        %v4311 = vld [vmem:[%s3901 + $0x5c] sm:$0x1]
        %v4312 = vld [vmem:[%s3901 + $0x60] sm:$0xf]
        %v4313 = vld [vmem:[%s3901 + $0x64] sm:$0xf]
        %v4314 = vld [vmem:[%s3901 + $0x68] sm:$0x1]
        %v4315 = vld [vmem:[%s3901 + $0x6c] sm:$0xf]
        %v4316 = vld [vmem:[%s3901 + $0x70] sm:$0xf]
        %v4317 = vld [vmem:[%s3901 + $0x74] sm:$0x1]
        %v4318 = vld [vmem:[%s3901 + $0x78] sm:$0xf]
        %v4319 = vld [vmem:[%s3901 + $0x7c] sm:$0xf]
        %v4320 = vld [vmem:[%s3901 + $0x80] sm:$0x1]
        %v4321 = vld [vmem:[%s3901 + $0x84] sm:$0xf]
        %v4322 = vld [vmem:[%s3901 + $0x88] sm:$0xf]
        %v4323 = vld [vmem:[%s3901 + $0x8c] sm:$0x1]
        %v4324 = vld [vmem:[%s3901 + $0x90] sm:$0xf]
        %v4325 = vld [vmem:[%s3901 + $0x94] sm:$0xf]
        %v4326 = vld [vmem:[%s3901 + $0x98] sm:$0x1]
        %v4327 = vld [vmem:[%s3901 + $0x9c] sm:$0xf]
        %v4328 = vld [vmem:[%s3901 + $0xa0] sm:$0xf]
        %v4329 = vld [vmem:[%s3901 + $0xa4] sm:$0x1]
        %v4330 = vld [vmem:[%s3901 + $0xa8] sm:$0xf]
        %v4331 = vld [vmem:[%s3901 + $0xac] sm:$0xf]
        %v4332 = vld [vmem:[%s3901 + $0xb0] sm:$0x1]
        %v4333 = vld [vmem:[%s3901 + $0xb4] sm:$0xf]
        %v4334 = vld [vmem:[%s3901 + $0xb8] sm:$0xf]
        %v4335 = vld [vmem:[%s3901 + $0xbc] sm:$0x1]
        %v4337 = vshrl.u32 %v4288, 16
        %v4339 = vrot.slane %v4337, 4
        %v4340 = vshll.u32 %v4288, 16
        %v4342 = vrot.slane %v4340, 5
        %v4343 = vor.u32 %v4339, %v4342
        %v4344 = vrot.slane %v4343, 4
        %v4346 = vshll.u32 %v4289, 16
        %v4348 = vrot.slane %v4346, 5
        %v4349 = vsel %vm798, %v4344, %v4348
        %v4350 = vshrl.u32 %v4289, 16
        %v4352 = vrot.slane %v4350, 4
        %v4353 = vor.u32 %v4352, %v4348
        %v4354 = vrot.slane %v4353, 4
        %v4356 = vshll.u32 %v4290, 16
        %v4358 = vrot.slane %v4356, 5
        %v4359 = vsel %vm798, %v4354, %v4358
        %v4361 = vshrl.u32 %v4291, 16
        %v4363 = vrot.slane %v4361, 4
        %v4364 = vshll.u32 %v4291, 16
        %v4366 = vrot.slane %v4364, 5
        %v4367 = vor.u32 %v4363, %v4366
        %v4368 = vrot.slane %v4367, 4
        %v4370 = vshll.u32 %v4292, 16
        %v4372 = vrot.slane %v4370, 5
        %v4373 = vsel %vm798, %v4368, %v4372
        %v4374 = vshrl.u32 %v4292, 16
        %v4376 = vrot.slane %v4374, 4
        %v4377 = vor.u32 %v4376, %v4372
        %v4378 = vrot.slane %v4377, 4
        %v4380 = vshll.u32 %v4293, 16
        %v4382 = vrot.slane %v4380, 5
        %v4383 = vsel %vm798, %v4378, %v4382
        %v4385 = vshrl.u32 %v4294, 16
        %v4387 = vrot.slane %v4385, 4
        %v4388 = vshll.u32 %v4294, 16
        %v4390 = vrot.slane %v4388, 5
        %v4391 = vor.u32 %v4387, %v4390
        %v4392 = vrot.slane %v4391, 4
        %v4394 = vshll.u32 %v4295, 16
        %v4396 = vrot.slane %v4394, 5
        %v4397 = vsel %vm798, %v4392, %v4396
        %v4398 = vshrl.u32 %v4295, 16
        %v4400 = vrot.slane %v4398, 4
        %v4401 = vor.u32 %v4400, %v4396
        %v4402 = vrot.slane %v4401, 4
        %v4404 = vshll.u32 %v4296, 16
        %v4406 = vrot.slane %v4404, 5
        %v4407 = vsel %vm798, %v4402, %v4406
        %v4409 = vshrl.u32 %v4297, 16
        %v4411 = vrot.slane %v4409, 4
        %v4412 = vshll.u32 %v4297, 16
        %v4414 = vrot.slane %v4412, 5
        %v4415 = vor.u32 %v4411, %v4414
        %v4416 = vrot.slane %v4415, 4
        %v4418 = vshll.u32 %v4298, 16
        %v4420 = vrot.slane %v4418, 5
        %v4421 = vsel %vm798, %v4416, %v4420
        %v4422 = vshrl.u32 %v4298, 16
        %v4424 = vrot.slane %v4422, 4
        %v4425 = vor.u32 %v4424, %v4420
        %v4426 = vrot.slane %v4425, 4
        %v4428 = vshll.u32 %v4299, 16
        %v4430 = vrot.slane %v4428, 5
        %v4431 = vsel %vm798, %v4426, %v4430
        %v4433 = vshrl.u32 %v4300, 16
        %v4435 = vrot.slane %v4433, 4
        %v4436 = vshll.u32 %v4300, 16
        %v4438 = vrot.slane %v4436, 5
        %v4439 = vor.u32 %v4435, %v4438
        %v4440 = vrot.slane %v4439, 4
        %v4442 = vshll.u32 %v4301, 16
        %v4444 = vrot.slane %v4442, 5
        %v4445 = vsel %vm798, %v4440, %v4444
        %v4446 = vshrl.u32 %v4301, 16
        %v4448 = vrot.slane %v4446, 4
        %v4449 = vor.u32 %v4448, %v4444
        %v4450 = vrot.slane %v4449, 4
        %v4452 = vshll.u32 %v4302, 16
        %v4454 = vrot.slane %v4452, 5
        %v4455 = vsel %vm798, %v4450, %v4454
        %v4457 = vshrl.u32 %v4303, 16
        %v4459 = vrot.slane %v4457, 4
        %v4460 = vshll.u32 %v4303, 16
        %v4462 = vrot.slane %v4460, 5
        %v4463 = vor.u32 %v4459, %v4462
        %v4464 = vrot.slane %v4463, 4
        %v4466 = vshll.u32 %v4304, 16
        %v4468 = vrot.slane %v4466, 5
        %v4469 = vsel %vm798, %v4464, %v4468
        %v4470 = vshrl.u32 %v4304, 16
        %v4472 = vrot.slane %v4470, 4
        %v4473 = vor.u32 %v4472, %v4468
        %v4474 = vrot.slane %v4473, 4
        %v4476 = vshll.u32 %v4305, 16
        %v4478 = vrot.slane %v4476, 5
        %v4479 = vsel %vm798, %v4474, %v4478
        %v4481 = vshrl.u32 %v4306, 16
        %v4483 = vrot.slane %v4481, 4
        %v4484 = vshll.u32 %v4306, 16
        %v4486 = vrot.slane %v4484, 5
        %v4487 = vor.u32 %v4483, %v4486
        %v4488 = vrot.slane %v4487, 4
        %v4490 = vshll.u32 %v4307, 16
        %v4492 = vrot.slane %v4490, 5
        %v4493 = vsel %vm798, %v4488, %v4492
        %v4494 = vshrl.u32 %v4307, 16
        %v4496 = vrot.slane %v4494, 4
        %v4497 = vor.u32 %v4496, %v4492
        %v4498 = vrot.slane %v4497, 4
        %v4500 = vshll.u32 %v4308, 16
        %v4502 = vrot.slane %v4500, 5
        %v4503 = vsel %vm798, %v4498, %v4502
        %v4505 = vshrl.u32 %v4309, 16
        %v4507 = vrot.slane %v4505, 4
        %v4508 = vshll.u32 %v4309, 16
        %v4510 = vrot.slane %v4508, 5
        %v4511 = vor.u32 %v4507, %v4510
        %v4512 = vrot.slane %v4511, 4
        %v4514 = vshll.u32 %v4310, 16
        %v4516 = vrot.slane %v4514, 5
        %v4517 = vsel %vm798, %v4512, %v4516
        %v4518 = vshrl.u32 %v4310, 16
        %v4520 = vrot.slane %v4518, 4
        %v4521 = vor.u32 %v4520, %v4516
        %v4522 = vrot.slane %v4521, 4
        %v4524 = vshll.u32 %v4311, 16
        %v4526 = vrot.slane %v4524, 5
        %v4527 = vsel %vm798, %v4522, %v4526
        %v4529 = vshrl.u32 %v4312, 16
        %v4531 = vrot.slane %v4529, 4
        %v4532 = vshll.u32 %v4312, 16
        %v4534 = vrot.slane %v4532, 5
        %v4535 = vor.u32 %v4531, %v4534
        %v4536 = vrot.slane %v4535, 4
        %v4538 = vshll.u32 %v4313, 16
        %v4540 = vrot.slane %v4538, 5
        %v4541 = vsel %vm798, %v4536, %v4540
        %v4542 = vshrl.u32 %v4313, 16
        %v4544 = vrot.slane %v4542, 4
        %v4545 = vor.u32 %v4544, %v4540
        %v4546 = vrot.slane %v4545, 4
        %v4548 = vshll.u32 %v4314, 16
        %v4550 = vrot.slane %v4548, 5
        %v4551 = vsel %vm798, %v4546, %v4550
        %v4553 = vshrl.u32 %v4315, 16
        %v4555 = vrot.slane %v4553, 4
        %v4556 = vshll.u32 %v4315, 16
        %v4558 = vrot.slane %v4556, 5
        %v4559 = vor.u32 %v4555, %v4558
        %v4560 = vrot.slane %v4559, 4
        %v4562 = vshll.u32 %v4316, 16
        %v4564 = vrot.slane %v4562, 5
        %v4565 = vsel %vm798, %v4560, %v4564
        %v4566 = vshrl.u32 %v4316, 16
        %v4568 = vrot.slane %v4566, 4
        %v4569 = vor.u32 %v4568, %v4564
        %v4570 = vrot.slane %v4569, 4
        %v4572 = vshll.u32 %v4317, 16
        %v4574 = vrot.slane %v4572, 5
        %v4575 = vsel %vm798, %v4570, %v4574
        %v4577 = vshrl.u32 %v4318, 16
        %v4579 = vrot.slane %v4577, 4
        %v4580 = vshll.u32 %v4318, 16
        %v4582 = vrot.slane %v4580, 5
        %v4583 = vor.u32 %v4579, %v4582
        %v4584 = vrot.slane %v4583, 4
        %v4586 = vshll.u32 %v4319, 16
        %v4588 = vrot.slane %v4586, 5
        %v4589 = vsel %vm798, %v4584, %v4588
        %v4590 = vshrl.u32 %v4319, 16
        %v4592 = vrot.slane %v4590, 4
        %v4593 = vor.u32 %v4592, %v4588
        %v4594 = vrot.slane %v4593, 4
        %v4596 = vshll.u32 %v4320, 16
        %v4598 = vrot.slane %v4596, 5
        %v4599 = vsel %vm798, %v4594, %v4598
        %v4601 = vshrl.u32 %v4321, 16
        %v4603 = vrot.slane %v4601, 4
        %v4604 = vshll.u32 %v4321, 16
        %v4606 = vrot.slane %v4604, 5
        %v4607 = vor.u32 %v4603, %v4606
        %v4608 = vrot.slane %v4607, 4
        %v4610 = vshll.u32 %v4322, 16
        %v4612 = vrot.slane %v4610, 5
        %v4613 = vsel %vm798, %v4608, %v4612
        %v4614 = vshrl.u32 %v4322, 16
        %v4616 = vrot.slane %v4614, 4
        %v4617 = vor.u32 %v4616, %v4612
        %v4618 = vrot.slane %v4617, 4
        %v4620 = vshll.u32 %v4323, 16
        %v4622 = vrot.slane %v4620, 5
        %v4623 = vsel %vm798, %v4618, %v4622
        %v4625 = vshrl.u32 %v4324, 16
        %v4627 = vrot.slane %v4625, 4
        %v4628 = vshll.u32 %v4324, 16
        %v4630 = vrot.slane %v4628, 5
        %v4631 = vor.u32 %v4627, %v4630
        %v4632 = vrot.slane %v4631, 4
        %v4634 = vshll.u32 %v4325, 16
        %v4636 = vrot.slane %v4634, 5
        %v4637 = vsel %vm798, %v4632, %v4636
        %v4638 = vshrl.u32 %v4325, 16
        %v4640 = vrot.slane %v4638, 4
        %v4641 = vor.u32 %v4640, %v4636
        %v4642 = vrot.slane %v4641, 4
        %v4644 = vshll.u32 %v4326, 16
        %v4646 = vrot.slane %v4644, 5
        %v4647 = vsel %vm798, %v4642, %v4646
        %v4649 = vshrl.u32 %v4327, 16
        %v4651 = vrot.slane %v4649, 4
        %v4652 = vshll.u32 %v4327, 16
        %v4654 = vrot.slane %v4652, 5
        %v4655 = vor.u32 %v4651, %v4654
        %v4656 = vrot.slane %v4655, 4
        %v4658 = vshll.u32 %v4328, 16
        %v4660 = vrot.slane %v4658, 5
        %v4661 = vsel %vm798, %v4656, %v4660
        %v4662 = vshrl.u32 %v4328, 16
        %v4664 = vrot.slane %v4662, 4
        %v4665 = vor.u32 %v4664, %v4660
        %v4666 = vrot.slane %v4665, 4
        %v4668 = vshll.u32 %v4329, 16
        %v4670 = vrot.slane %v4668, 5
        %v4671 = vsel %vm798, %v4666, %v4670
        %v4673 = vshrl.u32 %v4330, 16
        %v4675 = vrot.slane %v4673, 4
        %v4676 = vshll.u32 %v4330, 16
        %v4678 = vrot.slane %v4676, 5
        %v4679 = vor.u32 %v4675, %v4678
        %v4680 = vrot.slane %v4679, 4
        %v4682 = vshll.u32 %v4331, 16
        %v4684 = vrot.slane %v4682, 5
        %v4685 = vsel %vm798, %v4680, %v4684
        %v4686 = vshrl.u32 %v4331, 16
        %v4688 = vrot.slane %v4686, 4
        %v4689 = vor.u32 %v4688, %v4684
        %v4690 = vrot.slane %v4689, 4
        %v4692 = vshll.u32 %v4332, 16
        %v4694 = vrot.slane %v4692, 5
        %v4695 = vsel %vm798, %v4690, %v4694
        %v4697 = vshrl.u32 %v4333, 16
        %v4699 = vrot.slane %v4697, 4
        %v4700 = vshll.u32 %v4333, 16
        %v4702 = vrot.slane %v4700, 5
        %v4703 = vor.u32 %v4699, %v4702
        %v4704 = vrot.slane %v4703, 4
        %v4706 = vshll.u32 %v4334, 16
        %v4708 = vrot.slane %v4706, 5
        %v4709 = vsel %vm798, %v4704, %v4708
        %v4710 = vshrl.u32 %v4334, 16
        %v4712 = vrot.slane %v4710, 4
        %v4713 = vor.u32 %v4712, %v4708
        %v4714 = vrot.slane %v4713, 4
        %v4716 = vshll.u32 %v4335, 16
        %v4718 = vrot.slane %v4716, 5
        %v4719 = vsel %vm798, %v4714, %v4718
        %s4720 = scalar_lea.vmem [#allocation6], 448
        %v4721 = vld [vmem:[%s4720] sm:$0xf]
        %v4722 = vld [vmem:[%s4720 + $0x4] sm:$0xf]
        %v4723 = vld [vmem:[%s4720 + $0x8] sm:$0xf]
        %v4724 = vld [vmem:[%s4720 + $0xc] sm:$0xf]
        %v4725 = vld [vmem:[%s4720 + $0x10] sm:$0xf]
        %v4726 = vld [vmem:[%s4720 + $0x14] sm:$0xf]
        %v4727 = vld [vmem:[%s4720 + $0x18] sm:$0xf]
        %v4728 = vld [vmem:[%s4720 + $0x1c] sm:$0xf]
        %v4729 = vld [vmem:[%s4720 + $0x20] sm:$0xf]
        %v4730 = vld [vmem:[%s4720 + $0x24] sm:$0xf]
        %v4731 = vld [vmem:[%s4720 + $0x28] sm:$0xf]
        %v4732 = vld [vmem:[%s4720 + $0x2c] sm:$0xf]
        %v4733 = vld [vmem:[%s4720 + $0x30] sm:$0xf]
        %v4734 = vld [vmem:[%s4720 + $0x34] sm:$0xf]
        %v4735 = vld [vmem:[%s4720 + $0x38] sm:$0xf]
        %v4736 = vld [vmem:[%s4720 + $0x3c] sm:$0xf]
        %v4737 = vunpack.c.l.b16 %v4349
        %v4738 = vunpack.c.l.b16 %v4359
        %v4739 = vunpack.c.l.b16 %v4373
        %v4740 = vunpack.c.l.b16 %v4383
        %v4741 = vunpack.c.l.b16 %v4397
        %v4742 = vunpack.c.l.b16 %v4407
        %v4743 = vunpack.c.l.b16 %v4421
        %v4744 = vunpack.c.l.b16 %v4431
        %v4745 = vunpack.c.l.b16 %v4445
        %v4746 = vunpack.c.l.b16 %v4455
        %v4747 = vunpack.c.l.b16 %v4469
        %v4748 = vunpack.c.l.b16 %v4479
        %v4749 = vunpack.c.l.b16 %v4493
        %v4750 = vunpack.c.l.b16 %v4503
        %v4751 = vunpack.c.l.b16 %v4517
        %v4752 = vunpack.c.l.b16 %v4527
        %v4753 = vunpack.c.l.b16 %v4541
        %v4754 = vunpack.c.l.b16 %v4551
        %v4755 = vunpack.c.l.b16 %v4565
        %v4756 = vunpack.c.l.b16 %v4575
        %v4757 = vunpack.c.l.b16 %v4589
        %v4758 = vunpack.c.l.b16 %v4599
        %v4759 = vunpack.c.l.b16 %v4613
        %v4760 = vunpack.c.l.b16 %v4623
        %v4761 = vunpack.c.l.b16 %v4637
        %v4762 = vunpack.c.l.b16 %v4647
        %v4763 = vunpack.c.l.b16 %v4661
        %v4764 = vunpack.c.l.b16 %v4671
        %v4765 = vunpack.c.l.b16 %v4685
        %v4766 = vunpack.c.l.b16 %v4695
        %v4767 = vunpack.c.l.b16 %v4709
        %v4768 = vunpack.c.l.b16 %v4719
        %v4769 = vpack.c.b16 %v4738, %v4737
        %v4770 = vpack.c.b16 %v4740, %v4739
        %v4771 = vpack.c.b16 %v4742, %v4741
        %v4772 = vpack.c.b16 %v4744, %v4743
        %v4773 = vpack.c.b16 %v4746, %v4745
        %v4774 = vpack.c.b16 %v4748, %v4747
        %v4775 = vpack.c.b16 %v4750, %v4749
        %v4776 = vpack.c.b16 %v4752, %v4751
        %v4777 = vpack.c.b16 %v4754, %v4753
        %v4778 = vpack.c.b16 %v4756, %v4755
        %v4779 = vpack.c.b16 %v4758, %v4757
        %v4780 = vpack.c.b16 %v4760, %v4759
        %v4781 = vpack.c.b16 %v4762, %v4761
        %v4782 = vpack.c.b16 %v4764, %v4763
        %v4783 = vpack.c.b16 %v4766, %v4765
        %v4784 = vpack.c.b16 %v4768, %v4767
        %v4817 = vunpack.c.l.b16 %v4721
        %v4818 = vunpack.c.l.b16 %v4722
        %v4819 = vunpack.c.l.b16 %v4723
        %v4820 = vunpack.c.l.b16 %v4724
        %v4821 = vunpack.c.l.b16 %v4725
        %v4822 = vunpack.c.l.b16 %v4726
        %v4823 = vunpack.c.l.b16 %v4727
        %v4824 = vunpack.c.l.b16 %v4728
        %v4825 = vunpack.c.l.b16 %v4729
        %v4826 = vunpack.c.l.b16 %v4730
        %v4827 = vunpack.c.l.b16 %v4731
        %v4828 = vunpack.c.l.b16 %v4732
        %v4829 = vunpack.c.l.b16 %v4733
        %v4830 = vunpack.c.l.b16 %v4734
        %v4831 = vunpack.c.l.b16 %v4735
        %v4832 = vunpack.c.l.b16 %v4736
        %v4833 = vpack.c.b16 %v4818, %v4817
        %v4834 = vpack.c.b16 %v4820, %v4819
        %v4835 = vpack.c.b16 %v4822, %v4821
        %v4836 = vpack.c.b16 %v4824, %v4823
        %v4837 = vpack.c.b16 %v4826, %v4825
        %v4838 = vpack.c.b16 %v4828, %v4827
        %v4839 = vpack.c.b16 %v4830, %v4829
        %v4840 = vpack.c.b16 %v4832, %v4831
        %4849 = vmatprep.subr.bf16.mxu0 0
        %4850 = vmatpush1.bf16.msra.mxu0 %v4833
        %4851 = vmatprep.subr.bf16.mxu0 0
        %4852 = vmatpush1.bf16.msra.mxu0 %v4834
        %4853 = vmatprep.subr.bf16.mxu0 0
        %4854 = vmatpush1.bf16.msra.mxu0 %v4835
        %4855 = vmatprep.subr.bf16.mxu0 0
        %4856 = vmatpush1.bf16.msra.mxu0 %v4836
        %4857 = vmatprep.subr.bf16.mxu0 0
        %4858 = vmatpush1.bf16.msra.mxu0 %v4837
        %4859 = vmatprep.subr.bf16.mxu0 0
        %4860 = vmatpush1.bf16.msra.mxu0 %v4838
        %4861 = vmatprep.subr.bf16.mxu0 0
        %4862 = vmatpush1.bf16.msra.mxu0 %v4839
        %4863 = vmatprep.subr.bf16.mxu0 0
        %4864 = vmatpush1.bf16.msra.mxu0 %v4840
        %4865 = vmatprep.subr.bf16.mxu0 0
        %4866 = vmatpush1.bf16.msra.mxu0 0
        %4867 = vmatprep.subr.bf16.mxu0 0
        %4868 = vmatpush1.bf16.msra.mxu0 0
        %4869 = vmatprep.subr.bf16.mxu0 0
        %4870 = vmatpush1.bf16.msra.mxu0 0
        %4871 = vmatprep.subr.bf16.mxu0 0
        %4872 = vmatpush1.bf16.msra.mxu0 0
        %4873 = vmatprep.subr.bf16.mxu0 0
        %4874 = vmatpush1.bf16.msra.mxu0 0
        %4875 = vmatprep.subr.bf16.mxu0 0
        %4876 = vmatpush1.bf16.msra.mxu0 0
        %4877 = vmatprep.subr.bf16.mxu0 0
        %4878 = vmatpush1.bf16.msra.mxu0 0
        %4879 = vmatprep.subr.bf16.mxu0 0
        %4880 = vmatpush1.bf16.msra.mxu0 0
        %4881 = vmatprep.mubr.bf16.mxu0 0
        %4882 = vmatmul.mubr.bf16.gmra.mrb[0].mxu0 %v4769
        %v4883 = vpop.f32.mrb[0].mxu0
        %v4884 = vadd.f32 0.0, %v4883
        %v4885 = vpop.f32.mrb[0].mxu0
        %v4886 = vpop.f32.mrb[0].mxu0
        %v4887 = vadd.f32 0.0, %v4886
        %v4888 = vpop.f32.mrb[0].mxu0
        %4889 = vmatprep.mubr.bf16.mxu0 0
        %4890 = vmatmul.mubr.bf16.gmra.mrb[0].mxu0 %v4770
        %v4891 = vpop.f32.mrb[0].mxu0
        %v4892 = vadd.f32 0.0, %v4891
        %v4893 = vpop.f32.mrb[0].mxu0
        %v4894 = vpop.f32.mrb[0].mxu0
        %v4895 = vadd.f32 0.0, %v4894
        %v4896 = vpop.f32.mrb[0].mxu0
        %4897 = vmatprep.mubr.bf16.mxu0 0
        %4898 = vmatmul.mubr.bf16.gmra.mrb[0].mxu0 %v4771
        %v4899 = vpop.f32.mrb[0].mxu0
        %v4900 = vadd.f32 0.0, %v4899
        %v4901 = vpop.f32.mrb[0].mxu0
        %v4902 = vpop.f32.mrb[0].mxu0
        %v4903 = vadd.f32 0.0, %v4902
        %v4904 = vpop.f32.mrb[0].mxu0
        %4905 = vmatprep.mubr.bf16.mxu0 0
        %4906 = vmatmul.mubr.bf16.gmra.mrb[0].mxu0 %v4772
        %v4907 = vpop.f32.mrb[0].mxu0
        %v4908 = vadd.f32 0.0, %v4907
        %v4909 = vpop.f32.mrb[0].mxu0
        %v4910 = vpop.f32.mrb[0].mxu0
        %v4911 = vadd.f32 0.0, %v4910
        %v4912 = vpop.f32.mrb[0].mxu0
        %4913 = vmatprep.mubr.bf16.mxu0 0
        %4914 = vmatmul.mubr.bf16.gmra.mrb[0].mxu0 %v4773
        %v4915 = vpop.f32.mrb[0].mxu0
        %v4916 = vadd.f32 0.0, %v4915
        %v4917 = vpop.f32.mrb[0].mxu0
        %v4918 = vpop.f32.mrb[0].mxu0
        %v4919 = vadd.f32 0.0, %v4918
        %v4920 = vpop.f32.mrb[0].mxu0
        %4921 = vmatprep.mubr.bf16.mxu0 0
        %4922 = vmatmul.mubr.bf16.gmra.mrb[0].mxu0 %v4774
        %v4923 = vpop.f32.mrb[0].mxu0
        %v4924 = vadd.f32 0.0, %v4923
        %v4925 = vpop.f32.mrb[0].mxu0
        %v4926 = vpop.f32.mrb[0].mxu0
        %v4927 = vadd.f32 0.0, %v4926
        %v4928 = vpop.f32.mrb[0].mxu0
        %4929 = vmatprep.mubr.bf16.mxu0 0
        %4930 = vmatmul.mubr.bf16.gmra.mrb[0].mxu0 %v4775
        %v4931 = vpop.f32.mrb[0].mxu0
        %v4932 = vadd.f32 0.0, %v4931
        %v4933 = vpop.f32.mrb[0].mxu0
        %v4934 = vpop.f32.mrb[0].mxu0
        %v4935 = vadd.f32 0.0, %v4934
        %v4936 = vpop.f32.mrb[0].mxu0
        %4937 = vmatprep.mubr.bf16.mxu0 0
        %4938 = vmatmul.mubr.bf16.gmra.mrb[0].mxu0 %v4776
        %v4939 = vpop.f32.mrb[0].mxu0
        %v4940 = vadd.f32 0.0, %v4939
        %v4941 = vpop.f32.mrb[0].mxu0
        %v4942 = vpop.f32.mrb[0].mxu0
        %v4943 = vadd.f32 0.0, %v4942
        %v4944 = vpop.f32.mrb[0].mxu0
        %4945 = vmatprep.mubr.bf16.mxu0 0
        %4946 = vmatmul.mubr.bf16.gmra.mrb[0].mxu0 %v4777
        %v4947 = vpop.f32.mrb[0].mxu0
        %v4948 = vadd.f32 0.0, %v4947
        %v4949 = vpop.f32.mrb[0].mxu0
        %v4950 = vpop.f32.mrb[0].mxu0
        %v4951 = vadd.f32 0.0, %v4950
        %v4952 = vpop.f32.mrb[0].mxu0
        %4953 = vmatprep.mubr.bf16.mxu0 0
        %4954 = vmatmul.mubr.bf16.gmra.mrb[0].mxu0 %v4778
        %v4955 = vpop.f32.mrb[0].mxu0
        %v4956 = vadd.f32 0.0, %v4955
        %v4957 = vpop.f32.mrb[0].mxu0
        %v4958 = vpop.f32.mrb[0].mxu0
        %v4959 = vadd.f32 0.0, %v4958
        %v4960 = vpop.f32.mrb[0].mxu0
        %4961 = vmatprep.mubr.bf16.mxu0 0
        %4962 = vmatmul.mubr.bf16.gmra.mrb[0].mxu0 %v4779
        %v4963 = vpop.f32.mrb[0].mxu0
        %v4964 = vadd.f32 0.0, %v4963
        %v4965 = vpop.f32.mrb[0].mxu0
        %v4966 = vpop.f32.mrb[0].mxu0
        %v4967 = vadd.f32 0.0, %v4966
        %v4968 = vpop.f32.mrb[0].mxu0
        %4969 = vmatprep.mubr.bf16.mxu0 0
        %4970 = vmatmul.mubr.bf16.gmra.mrb[0].mxu0 %v4780
        %v4971 = vpop.f32.mrb[0].mxu0
        %v4972 = vadd.f32 0.0, %v4971
        %v4973 = vpop.f32.mrb[0].mxu0
        %v4974 = vpop.f32.mrb[0].mxu0
        %v4975 = vadd.f32 0.0, %v4974
        %v4976 = vpop.f32.mrb[0].mxu0
        %4977 = vmatprep.mubr.bf16.mxu0 0
        %4978 = vmatmul.mubr.bf16.gmra.mrb[0].mxu0 %v4781
        %v4979 = vpop.f32.mrb[0].mxu0
        %v4980 = vadd.f32 0.0, %v4979
        %v4981 = vpop.f32.mrb[0].mxu0
        %v4982 = vpop.f32.mrb[0].mxu0
        %v4983 = vadd.f32 0.0, %v4982
        %v4984 = vpop.f32.mrb[0].mxu0
        %4985 = vmatprep.mubr.bf16.mxu0 0
        %4986 = vmatmul.mubr.bf16.gmra.mrb[0].mxu0 %v4782
        %v4987 = vpop.f32.mrb[0].mxu0
        %v4988 = vadd.f32 0.0, %v4987
        %v4989 = vpop.f32.mrb[0].mxu0
        %v4990 = vpop.f32.mrb[0].mxu0
        %v4991 = vadd.f32 0.0, %v4990
        %v4992 = vpop.f32.mrb[0].mxu0
        %4993 = vmatprep.mubr.bf16.mxu0 0
        %4994 = vmatmul.mubr.bf16.gmra.mrb[0].mxu0 %v4783
        %v4995 = vpop.f32.mrb[0].mxu0
        %v4996 = vadd.f32 0.0, %v4995
        %v4997 = vpop.f32.mrb[0].mxu0
        %v4998 = vpop.f32.mrb[0].mxu0
        %v4999 = vadd.f32 0.0, %v4998
        %v5000 = vpop.f32.mrb[0].mxu0
        %5001 = vmatprep.mubr.bf16.mxu0 0
        %5002 = vmatmul.mubr.bf16.gmra.mrb[0].mxu0 %v4784
        %v5003 = vpop.f32.mrb[0].mxu0
        %v5004 = vadd.f32 0.0, %v5003
        %v5005 = vpop.f32.mrb[0].mxu0
        %v5006 = vpop.f32.mrb[0].mxu0
        %v5007 = vadd.f32 0.0, %v5006
        %v5008 = vpop.f32.mrb[0].mxu0
        %5009 = vdwg.mxu0
        %v5010 = vadd.f32 %v4256, %v4884
        %v5011 = vadd.f32 %v4257, %v4887
        %v5012 = vadd.f32 %v4258, %v4892
        %v5013 = vadd.f32 %v4259, %v4895
        %v5014 = vadd.f32 %v4260, %v4900
        %v5015 = vadd.f32 %v4261, %v4903
        %v5016 = vadd.f32 %v4262, %v4908
        %v5017 = vadd.f32 %v4263, %v4911
        %v5018 = vadd.f32 %v4264, %v4916
        %v5019 = vadd.f32 %v4265, %v4919
        %v5020 = vadd.f32 %v4266, %v4924
        %v5021 = vadd.f32 %v4267, %v4927
        %v5022 = vadd.f32 %v4268, %v4932
        %v5023 = vadd.f32 %v4269, %v4935
        %v5024 = vadd.f32 %v4270, %v4940
        %v5025 = vadd.f32 %v4271, %v4943
        %v5026 = vadd.f32 %v4272, %v4948
        %v5027 = vadd.f32 %v4273, %v4951
        %v5028 = vadd.f32 %v4274, %v4956
        %v5029 = vadd.f32 %v4275, %v4959
        %v5030 = vadd.f32 %v4276, %v4964
        %v5031 = vadd.f32 %v4277, %v4967
        %v5032 = vadd.f32 %v4278, %v4972
        %v5033 = vadd.f32 %v4279, %v4975
        %v5034 = vadd.f32 %v4280, %v4980
        %v5035 = vadd.f32 %v4281, %v4983
        %v5036 = vadd.f32 %v4282, %v4988
        %v5037 = vadd.f32 %v4283, %v4991
        %v5038 = vadd.f32 %v4284, %v4996
        %v5039 = vadd.f32 %v4285, %v4999
        %v5040 = vadd.f32 %v4286, %v5004
        %v5041 = vadd.f32 %v4287, %v5007
        %v5042 = vld [vmem:[%s3901] sm:$0xe]
        %v5043 = vld [vmem:[%s3901 + $0xc] sm:$0xe]
        %v5044 = vld [vmem:[%s3901 + $0x18] sm:$0xe]
        %v5045 = vld [vmem:[%s3901 + $0x24] sm:$0xe]
        %v5046 = vld [vmem:[%s3901 + $0x30] sm:$0xe]
        %v5047 = vld [vmem:[%s3901 + $0x3c] sm:$0xe]
        %v5048 = vld [vmem:[%s3901 + $0x48] sm:$0xe]
        %v5049 = vld [vmem:[%s3901 + $0x54] sm:$0xe]
        %v5050 = vld [vmem:[%s3901 + $0x60] sm:$0xe]
        %v5051 = vld [vmem:[%s3901 + $0x6c] sm:$0xe]
        %v5052 = vld [vmem:[%s3901 + $0x78] sm:$0xe]
        %v5053 = vld [vmem:[%s3901 + $0x84] sm:$0xe]
        %v5054 = vld [vmem:[%s3901 + $0x90] sm:$0xe]
        %v5055 = vld [vmem:[%s3901 + $0x9c] sm:$0xe]
        %v5056 = vld [vmem:[%s3901 + $0xa8] sm:$0xe]
        %v5057 = vld [vmem:[%s3901 + $0xb4] sm:$0xe]
        %v5106 = vrot.slane %v5042, 5
        %v5107 = vrot.slane %v5106, 4
        %v5108 = vrot.slane %v4289, 5
        %v5109 = vsel %vm1828, %v5107, %v5108
        %v5110 = vrot.slane %v5108, 4
        %v5111 = vrot.slane %v4290, 5
        %v5112 = vsel %vm1828, %v5110, %v5111
        %v5113 = vrot.slane %v5043, 5
        %v5114 = vrot.slane %v5113, 4
        %v5115 = vrot.slane %v4292, 5
        %v5116 = vsel %vm1828, %v5114, %v5115
        %v5117 = vrot.slane %v5115, 4
        %v5118 = vrot.slane %v4293, 5
        %v5119 = vsel %vm1828, %v5117, %v5118
        %v5120 = vrot.slane %v5044, 5
        %v5121 = vrot.slane %v5120, 4
        %v5122 = vrot.slane %v4295, 5
        %v5123 = vsel %vm1828, %v5121, %v5122
        %v5124 = vrot.slane %v5122, 4
        %v5125 = vrot.slane %v4296, 5
        %v5126 = vsel %vm1828, %v5124, %v5125
        %v5127 = vrot.slane %v5045, 5
        %v5128 = vrot.slane %v5127, 4
        %v5129 = vrot.slane %v4298, 5
        %v5130 = vsel %vm1828, %v5128, %v5129
        %v5131 = vrot.slane %v5129, 4
        %v5132 = vrot.slane %v4299, 5
        %v5133 = vsel %vm1828, %v5131, %v5132
        %v5134 = vrot.slane %v5046, 5
        %v5135 = vrot.slane %v5134, 4
        %v5136 = vrot.slane %v4301, 5
        %v5137 = vsel %vm1828, %v5135, %v5136
        %v5138 = vrot.slane %v5136, 4
        %v5139 = vrot.slane %v4302, 5
        %v5140 = vsel %vm1828, %v5138, %v5139
        %v5141 = vrot.slane %v5047, 5
        %v5142 = vrot.slane %v5141, 4
        %v5143 = vrot.slane %v4304, 5
        %v5144 = vsel %vm1828, %v5142, %v5143
        %v5145 = vrot.slane %v5143, 4
        %v5146 = vrot.slane %v4305, 5
        %v5147 = vsel %vm1828, %v5145, %v5146
        %v5148 = vrot.slane %v5048, 5
        %v5149 = vrot.slane %v5148, 4
        %v5150 = vrot.slane %v4307, 5
        %v5151 = vsel %vm1828, %v5149, %v5150
        %v5152 = vrot.slane %v5150, 4
        %v5153 = vrot.slane %v4308, 5
        %v5154 = vsel %vm1828, %v5152, %v5153
        %v5155 = vrot.slane %v5049, 5
        %v5156 = vrot.slane %v5155, 4
        %v5157 = vrot.slane %v4310, 5
        %v5158 = vsel %vm1828, %v5156, %v5157
        %v5159 = vrot.slane %v5157, 4
        %v5160 = vrot.slane %v4311, 5
        %v5161 = vsel %vm1828, %v5159, %v5160
        %v5162 = vrot.slane %v5050, 5
        %v5163 = vrot.slane %v5162, 4
        %v5164 = vrot.slane %v4313, 5
        %v5165 = vsel %vm1828, %v5163, %v5164
        %v5166 = vrot.slane %v5164, 4
        %v5167 = vrot.slane %v4314, 5
        %v5168 = vsel %vm1828, %v5166, %v5167
        %v5169 = vrot.slane %v5051, 5
        %v5170 = vrot.slane %v5169, 4
        %v5171 = vrot.slane %v4316, 5
        %v5172 = vsel %vm1828, %v5170, %v5171
        %v5173 = vrot.slane %v5171, 4
        %v5174 = vrot.slane %v4317, 5
        %v5175 = vsel %vm1828, %v5173, %v5174
        %v5176 = vrot.slane %v5052, 5
        %v5177 = vrot.slane %v5176, 4
        %v5178 = vrot.slane %v4319, 5
        %v5179 = vsel %vm1828, %v5177, %v5178
        %v5180 = vrot.slane %v5178, 4
        %v5181 = vrot.slane %v4320, 5
        %v5182 = vsel %vm1828, %v5180, %v5181
        %v5183 = vrot.slane %v5053, 5
        %v5184 = vrot.slane %v5183, 4
        %v5185 = vrot.slane %v4322, 5
        %v5186 = vsel %vm1828, %v5184, %v5185
        %v5187 = vrot.slane %v5185, 4
        %v5188 = vrot.slane %v4323, 5
        %v5189 = vsel %vm1828, %v5187, %v5188
        %v5190 = vrot.slane %v5054, 5
        %v5191 = vrot.slane %v5190, 4
        %v5192 = vrot.slane %v4325, 5
        %v5193 = vsel %vm1828, %v5191, %v5192
        %v5194 = vrot.slane %v5192, 4
        %v5195 = vrot.slane %v4326, 5
        %v5196 = vsel %vm1828, %v5194, %v5195
        %v5197 = vrot.slane %v5055, 5
        %v5198 = vrot.slane %v5197, 4
        %v5199 = vrot.slane %v4328, 5
        %v5200 = vsel %vm1828, %v5198, %v5199
        %v5201 = vrot.slane %v5199, 4
        %v5202 = vrot.slane %v4329, 5
        %v5203 = vsel %vm1828, %v5201, %v5202
        %v5204 = vrot.slane %v5056, 5
        %v5205 = vrot.slane %v5204, 4
        %v5206 = vrot.slane %v4331, 5
        %v5207 = vsel %vm1828, %v5205, %v5206
        %v5208 = vrot.slane %v5206, 4
        %v5209 = vrot.slane %v4332, 5
        %v5210 = vsel %vm1828, %v5208, %v5209
        %v5211 = vrot.slane %v5057, 5
        %v5212 = vrot.slane %v5211, 4
        %v5213 = vrot.slane %v4334, 5
        %v5214 = vsel %vm1828, %v5212, %v5213
        %v5215 = vrot.slane %v5213, 4
        %v5216 = vrot.slane %v4335, 5
        %v5217 = vsel %vm1828, %v5215, %v5216
        %s5218 = scalar_lea.vmem [#allocation6], 512
        %v5219 = vld [vmem:[%s5218] sm:$0xf]
        %v5220 = vld [vmem:[%s5218 + $0x4] sm:$0xf]
        %v5221 = vld [vmem:[%s5218 + $0x8] sm:$0xf]
        %v5222 = vld [vmem:[%s5218 + $0xc] sm:$0xf]
        %v5223 = vld [vmem:[%s5218 + $0x10] sm:$0xf]
        %v5224 = vld [vmem:[%s5218 + $0x14] sm:$0xf]
        %v5225 = vld [vmem:[%s5218 + $0x18] sm:$0xf]
        %v5226 = vld [vmem:[%s5218 + $0x1c] sm:$0xf]
        %v5227 = vld [vmem:[%s5218 + $0x20] sm:$0xf]
        %v5228 = vld [vmem:[%s5218 + $0x24] sm:$0xf]
        %v5229 = vld [vmem:[%s5218 + $0x28] sm:$0xf]
        %v5230 = vld [vmem:[%s5218 + $0x2c] sm:$0xf]
        %v5231 = vld [vmem:[%s5218 + $0x30] sm:$0xf]
        %v5232 = vld [vmem:[%s5218 + $0x34] sm:$0xf]
        %v5233 = vld [vmem:[%s5218 + $0x38] sm:$0xf]
        %v5234 = vld [vmem:[%s5218 + $0x3c] sm:$0xf]
        %v5235 = vunpack.c.l.b16 %v5109
        %v5236 = vunpack.c.l.b16 %v5112
        %v5237 = vunpack.c.l.b16 %v5116
        %v5238 = vunpack.c.l.b16 %v5119
        %v5239 = vunpack.c.l.b16 %v5123
        %v5240 = vunpack.c.l.b16 %v5126
        %v5241 = vunpack.c.l.b16 %v5130
        %v5242 = vunpack.c.l.b16 %v5133
        %v5243 = vunpack.c.l.b16 %v5137
        %v5244 = vunpack.c.l.b16 %v5140
        %v5245 = vunpack.c.l.b16 %v5144
        %v5246 = vunpack.c.l.b16 %v5147
        %v5247 = vunpack.c.l.b16 %v5151
        %v5248 = vunpack.c.l.b16 %v5154
        %v5249 = vunpack.c.l.b16 %v5158
        %v5250 = vunpack.c.l.b16 %v5161
        %v5251 = vunpack.c.l.b16 %v5165
        %v5252 = vunpack.c.l.b16 %v5168
        %v5253 = vunpack.c.l.b16 %v5172
        %v5254 = vunpack.c.l.b16 %v5175
        %v5255 = vunpack.c.l.b16 %v5179
        %v5256 = vunpack.c.l.b16 %v5182
        %v5257 = vunpack.c.l.b16 %v5186
        %v5258 = vunpack.c.l.b16 %v5189
        %v5259 = vunpack.c.l.b16 %v5193
        %v5260 = vunpack.c.l.b16 %v5196
        %v5261 = vunpack.c.l.b16 %v5200
        %v5262 = vunpack.c.l.b16 %v5203
        %v5263 = vunpack.c.l.b16 %v5207
        %v5264 = vunpack.c.l.b16 %v5210
        %v5265 = vunpack.c.l.b16 %v5214
        %v5266 = vunpack.c.l.b16 %v5217
        %v5267 = vpack.c.b16 %v5236, %v5235
        %v5268 = vpack.c.b16 %v5238, %v5237
        %v5269 = vpack.c.b16 %v5240, %v5239
        %v5270 = vpack.c.b16 %v5242, %v5241
        %v5271 = vpack.c.b16 %v5244, %v5243
        %v5272 = vpack.c.b16 %v5246, %v5245
        %v5273 = vpack.c.b16 %v5248, %v5247
        %v5274 = vpack.c.b16 %v5250, %v5249
        %v5275 = vpack.c.b16 %v5252, %v5251
        %v5276 = vpack.c.b16 %v5254, %v5253
        %v5277 = vpack.c.b16 %v5256, %v5255
        %v5278 = vpack.c.b16 %v5258, %v5257
        %v5279 = vpack.c.b16 %v5260, %v5259
        %v5280 = vpack.c.b16 %v5262, %v5261
        %v5281 = vpack.c.b16 %v5264, %v5263
        %v5282 = vpack.c.b16 %v5266, %v5265
        %v5315 = vunpack.c.l.b16 %v5219
        %v5316 = vunpack.c.l.b16 %v5220
        %v5317 = vunpack.c.l.b16 %v5221
        %v5318 = vunpack.c.l.b16 %v5222
        %v5319 = vunpack.c.l.b16 %v5223
        %v5320 = vunpack.c.l.b16 %v5224
        %v5321 = vunpack.c.l.b16 %v5225
        %v5322 = vunpack.c.l.b16 %v5226
        %v5323 = vunpack.c.l.b16 %v5227
        %v5324 = vunpack.c.l.b16 %v5228
        %v5325 = vunpack.c.l.b16 %v5229
        %v5326 = vunpack.c.l.b16 %v5230
        %v5327 = vunpack.c.l.b16 %v5231
        %v5328 = vunpack.c.l.b16 %v5232
        %v5329 = vunpack.c.l.b16 %v5233
        %v5330 = vunpack.c.l.b16 %v5234
        %v5331 = vpack.c.b16 %v5316, %v5315
        %v5332 = vpack.c.b16 %v5318, %v5317
        %v5333 = vpack.c.b16 %v5320, %v5319
        %v5334 = vpack.c.b16 %v5322, %v5321
        %v5335 = vpack.c.b16 %v5324, %v5323
        %v5336 = vpack.c.b16 %v5326, %v5325
        %v5337 = vpack.c.b16 %v5328, %v5327
        %v5338 = vpack.c.b16 %v5330, %v5329
        %5347 = vmatprep.subr.bf16.mxu0 0
        %5348 = vmatpush1.bf16.msra.mxu0 %v5331
        %5349 = vmatprep.subr.bf16.mxu0 0
        %5350 = vmatpush1.bf16.msra.mxu0 %v5332
        %5351 = vmatprep.subr.bf16.mxu0 0
        %5352 = vmatpush1.bf16.msra.mxu0 %v5333
        %5353 = vmatprep.subr.bf16.mxu0 0
        %5354 = vmatpush1.bf16.msra.mxu0 %v5334
        %5355 = vmatprep.subr.bf16.mxu0 0
        %5356 = vmatpush1.bf16.msra.mxu0 %v5335
        %5357 = vmatprep.subr.bf16.mxu0 0
        %5358 = vmatpush1.bf16.msra.mxu0 %v5336
        %5359 = vmatprep.subr.bf16.mxu0 0
        %5360 = vmatpush1.bf16.msra.mxu0 %v5337
        %5361 = vmatprep.subr.bf16.mxu0 0
        %5362 = vmatpush1.bf16.msra.mxu0 %v5338
        %5363 = vmatprep.subr.bf16.mxu0 0
        %5364 = vmatpush1.bf16.msra.mxu0 0
        %5365 = vmatprep.subr.bf16.mxu0 0
        %5366 = vmatpush1.bf16.msra.mxu0 0
        %5367 = vmatprep.subr.bf16.mxu0 0
        %5368 = vmatpush1.bf16.msra.mxu0 0
        %5369 = vmatprep.subr.bf16.mxu0 0
        %5370 = vmatpush1.bf16.msra.mxu0 0
        %5371 = vmatprep.subr.bf16.mxu0 0
        %5372 = vmatpush1.bf16.msra.mxu0 0
        %5373 = vmatprep.subr.bf16.mxu0 0
        %5374 = vmatpush1.bf16.msra.mxu0 0
        %5375 = vmatprep.subr.bf16.mxu0 0
        %5376 = vmatpush1.bf16.msra.mxu0 0
        %5377 = vmatprep.subr.bf16.mxu0 0
        %5378 = vmatpush1.bf16.msra.mxu0 0
        %5379 = vmatprep.mubr.bf16.mxu0 0
        %5380 = vmatmul.mubr.bf16.gmra.mrb[0].mxu0 %v5267
        %v5381 = vpop.f32.mrb[0].mxu0
        %v5382 = vadd.f32 0.0, %v5381
        %v5383 = vpop.f32.mrb[0].mxu0
        %v5384 = vpop.f32.mrb[0].mxu0
        %v5385 = vadd.f32 0.0, %v5384
        %v5386 = vpop.f32.mrb[0].mxu0
        %5387 = vmatprep.mubr.bf16.mxu0 0
        %5388 = vmatmul.mubr.bf16.gmra.mrb[0].mxu0 %v5268
        %v5389 = vpop.f32.mrb[0].mxu0
        %v5390 = vadd.f32 0.0, %v5389
        %v5391 = vpop.f32.mrb[0].mxu0
        %v5392 = vpop.f32.mrb[0].mxu0
        %v5393 = vadd.f32 0.0, %v5392
        %v5394 = vpop.f32.mrb[0].mxu0
        %5395 = vmatprep.mubr.bf16.mxu0 0
        %5396 = vmatmul.mubr.bf16.gmra.mrb[0].mxu0 %v5269
        %v5397 = vpop.f32.mrb[0].mxu0
        %v5398 = vadd.f32 0.0, %v5397
        %v5399 = vpop.f32.mrb[0].mxu0
        %v5400 = vpop.f32.mrb[0].mxu0
        %v5401 = vadd.f32 0.0, %v5400
        %v5402 = vpop.f32.mrb[0].mxu0
        %5403 = vmatprep.mubr.bf16.mxu0 0
        %5404 = vmatmul.mubr.bf16.gmra.mrb[0].mxu0 %v5270
        %v5405 = vpop.f32.mrb[0].mxu0
        %v5406 = vadd.f32 0.0, %v5405
        %v5407 = vpop.f32.mrb[0].mxu0
        %v5408 = vpop.f32.mrb[0].mxu0
        %v5409 = vadd.f32 0.0, %v5408
        %v5410 = vpop.f32.mrb[0].mxu0
        %5411 = vmatprep.mubr.bf16.mxu0 0
        %5412 = vmatmul.mubr.bf16.gmra.mrb[0].mxu0 %v5271
        %v5413 = vpop.f32.mrb[0].mxu0
        %v5414 = vadd.f32 0.0, %v5413
        %v5415 = vpop.f32.mrb[0].mxu0
        %v5416 = vpop.f32.mrb[0].mxu0
        %v5417 = vadd.f32 0.0, %v5416
        %v5418 = vpop.f32.mrb[0].mxu0
        %5419 = vmatprep.mubr.bf16.mxu0 0
        %5420 = vmatmul.mubr.bf16.gmra.mrb[0].mxu0 %v5272
        %v5421 = vpop.f32.mrb[0].mxu0
        %v5422 = vadd.f32 0.0, %v5421
        %v5423 = vpop.f32.mrb[0].mxu0
        %v5424 = vpop.f32.mrb[0].mxu0
        %v5425 = vadd.f32 0.0, %v5424
        %v5426 = vpop.f32.mrb[0].mxu0
        %5427 = vmatprep.mubr.bf16.mxu0 0
        %5428 = vmatmul.mubr.bf16.gmra.mrb[0].mxu0 %v5273
        %v5429 = vpop.f32.mrb[0].mxu0
        %v5430 = vadd.f32 0.0, %v5429
        %v5431 = vpop.f32.mrb[0].mxu0
        %v5432 = vpop.f32.mrb[0].mxu0
        %v5433 = vadd.f32 0.0, %v5432
        %v5434 = vpop.f32.mrb[0].mxu0
        %5435 = vmatprep.mubr.bf16.mxu0 0
        %5436 = vmatmul.mubr.bf16.gmra.mrb[0].mxu0 %v5274
        %v5437 = vpop.f32.mrb[0].mxu0
        %v5438 = vadd.f32 0.0, %v5437
        %v5439 = vpop.f32.mrb[0].mxu0
        %v5440 = vpop.f32.mrb[0].mxu0
        %v5441 = vadd.f32 0.0, %v5440
        %v5442 = vpop.f32.mrb[0].mxu0
        %5443 = vmatprep.mubr.bf16.mxu0 0
        %5444 = vmatmul.mubr.bf16.gmra.mrb[0].mxu0 %v5275
        %v5445 = vpop.f32.mrb[0].mxu0
        %v5446 = vadd.f32 0.0, %v5445
        %v5447 = vpop.f32.mrb[0].mxu0
        %v5448 = vpop.f32.mrb[0].mxu0
        %v5449 = vadd.f32 0.0, %v5448
        %v5450 = vpop.f32.mrb[0].mxu0
        %5451 = vmatprep.mubr.bf16.mxu0 0
        %5452 = vmatmul.mubr.bf16.gmra.mrb[0].mxu0 %v5276
        %v5453 = vpop.f32.mrb[0].mxu0
        %v5454 = vadd.f32 0.0, %v5453
        %v5455 = vpop.f32.mrb[0].mxu0
        %v5456 = vpop.f32.mrb[0].mxu0
        %v5457 = vadd.f32 0.0, %v5456
        %v5458 = vpop.f32.mrb[0].mxu0
        %5459 = vmatprep.mubr.bf16.mxu0 0
        %5460 = vmatmul.mubr.bf16.gmra.mrb[0].mxu0 %v5277
        %v5461 = vpop.f32.mrb[0].mxu0
        %v5462 = vadd.f32 0.0, %v5461
        %v5463 = vpop.f32.mrb[0].mxu0
        %v5464 = vpop.f32.mrb[0].mxu0
        %v5465 = vadd.f32 0.0, %v5464
        %v5466 = vpop.f32.mrb[0].mxu0
        %5467 = vmatprep.mubr.bf16.mxu0 0
        %5468 = vmatmul.mubr.bf16.gmra.mrb[0].mxu0 %v5278
        %v5469 = vpop.f32.mrb[0].mxu0
        %v5470 = vadd.f32 0.0, %v5469
        %v5471 = vpop.f32.mrb[0].mxu0
        %v5472 = vpop.f32.mrb[0].mxu0
        %v5473 = vadd.f32 0.0, %v5472
        %v5474 = vpop.f32.mrb[0].mxu0
        %5475 = vmatprep.mubr.bf16.mxu0 0
        %5476 = vmatmul.mubr.bf16.gmra.mrb[0].mxu0 %v5279
        %v5477 = vpop.f32.mrb[0].mxu0
        %v5478 = vadd.f32 0.0, %v5477
        %v5479 = vpop.f32.mrb[0].mxu0
        %v5480 = vpop.f32.mrb[0].mxu0
        %v5481 = vadd.f32 0.0, %v5480
        %v5482 = vpop.f32.mrb[0].mxu0
        %5483 = vmatprep.mubr.bf16.mxu0 0
        %5484 = vmatmul.mubr.bf16.gmra.mrb[0].mxu0 %v5280
        %v5485 = vpop.f32.mrb[0].mxu0
        %v5486 = vadd.f32 0.0, %v5485
        %v5487 = vpop.f32.mrb[0].mxu0
        %v5488 = vpop.f32.mrb[0].mxu0
        %v5489 = vadd.f32 0.0, %v5488
        %v5490 = vpop.f32.mrb[0].mxu0
        %5491 = vmatprep.mubr.bf16.mxu0 0
        %5492 = vmatmul.mubr.bf16.gmra.mrb[0].mxu0 %v5281
        %v5493 = vpop.f32.mrb[0].mxu0
        %v5494 = vadd.f32 0.0, %v5493
        %v5495 = vpop.f32.mrb[0].mxu0
        %v5496 = vpop.f32.mrb[0].mxu0
        %v5497 = vadd.f32 0.0, %v5496
        %v5498 = vpop.f32.mrb[0].mxu0
        %5499 = vmatprep.mubr.bf16.mxu0 0
        %5500 = vmatmul.mubr.bf16.gmra.mrb[0].mxu0 %v5282
        %v5501 = vpop.f32.mrb[0].mxu0
        %v5502 = vadd.f32 0.0, %v5501
        %v5503 = vpop.f32.mrb[0].mxu0
        %v5504 = vpop.f32.mrb[0].mxu0
        %v5505 = vadd.f32 0.0, %v5504
        %v5506 = vpop.f32.mrb[0].mxu0
        %5507 = vdwg.mxu0
        %v5508 = vadd.f32 %v5010, %v5382
        %v5509 = vadd.f32 %v5011, %v5385
        %v5510 = vadd.f32 %v5012, %v5390
        %v5511 = vadd.f32 %v5013, %v5393
        %v5512 = vadd.f32 %v5014, %v5398
        %v5513 = vadd.f32 %v5015, %v5401
        %v5514 = vadd.f32 %v5016, %v5406
        %v5515 = vadd.f32 %v5017, %v5409
        %v5516 = vadd.f32 %v5018, %v5414
        %v5517 = vadd.f32 %v5019, %v5417
        %v5518 = vadd.f32 %v5020, %v5422
        %v5519 = vadd.f32 %v5021, %v5425
        %v5520 = vadd.f32 %v5022, %v5430
        %v5521 = vadd.f32 %v5023, %v5433
        %v5522 = vadd.f32 %v5024, %v5438
        %v5523 = vadd.f32 %v5025, %v5441
        %v5524 = vadd.f32 %v5026, %v5446
        %v5525 = vadd.f32 %v5027, %v5449
        %v5526 = vadd.f32 %v5028, %v5454
        %v5527 = vadd.f32 %v5029, %v5457
        %v5528 = vadd.f32 %v5030, %v5462
        %v5529 = vadd.f32 %v5031, %v5465
        %v5530 = vadd.f32 %v5032, %v5470
        %v5531 = vadd.f32 %v5033, %v5473
        %v5532 = vadd.f32 %v5034, %v5478
        %v5533 = vadd.f32 %v5035, %v5481
        %v5534 = vadd.f32 %v5036, %v5486
        %v5535 = vadd.f32 %v5037, %v5489
        %v5536 = vadd.f32 %v5038, %v5494
        %v5537 = vadd.f32 %v5039, %v5497
        %v5538 = vadd.f32 %v5040, %v5502
        %v5539 = vadd.f32 %v5041, %v5505
        %v5540 = vld [vmem:[%s2] sm:$0x1]
        %v5542 = vlaneseq
        %v5543 = vshrl.u32 %v5542, 7
        %v5544 = vsub.s32 0, %v5543
        %v5545 = vrot.slane %v5540, %v5544
        %v5547 = vadd.f32 %v5508, %v5545
        %v5548 = vadd.f32 %v5509, %v5545
        %v5549 = vadd.f32 %v5510, %v5545
        %v5550 = vadd.f32 %v5511, %v5545
        %v5551 = vadd.f32 %v5512, %v5545
        %v5552 = vadd.f32 %v5513, %v5545
        %v5553 = vadd.f32 %v5514, %v5545
        %v5554 = vadd.f32 %v5515, %v5545
        %v5555 = vadd.f32 %v5516, %v5545
        %v5556 = vadd.f32 %v5517, %v5545
        %v5557 = vadd.f32 %v5518, %v5545
        %v5558 = vadd.f32 %v5519, %v5545
        %v5559 = vadd.f32 %v5520, %v5545
        %v5560 = vadd.f32 %v5521, %v5545
        %v5561 = vadd.f32 %v5522, %v5545
        %v5562 = vadd.f32 %v5523, %v5545
        %v5563 = vadd.f32 %v5524, %v5545
        %v5564 = vadd.f32 %v5525, %v5545
        %v5565 = vadd.f32 %v5526, %v5545
        %v5566 = vadd.f32 %v5527, %v5545
        %v5567 = vadd.f32 %v5528, %v5545
        %v5568 = vadd.f32 %v5529, %v5545
        %v5569 = vadd.f32 %v5530, %v5545
        %v5570 = vadd.f32 %v5531, %v5545
        %v5571 = vadd.f32 %v5532, %v5545
        %v5572 = vadd.f32 %v5533, %v5545
        %v5573 = vadd.f32 %v5534, %v5545
        %v5574 = vadd.f32 %v5535, %v5545
        %v5575 = vadd.f32 %v5536, %v5545
        %v5576 = vadd.f32 %v5537, %v5545
        %v5577 = vadd.f32 %v5538, %v5545
        %v5578 = vadd.f32 %v5539, %v5545
        %v5579 = vmax.f32 %v5547, 0.0
        %v5580 = vmax.f32 %v5548, 0.0
        %v5581 = vmax.f32 %v5549, 0.0
        %v5582 = vmax.f32 %v5550, 0.0
        %v5583 = vmax.f32 %v5551, 0.0
        %v5584 = vmax.f32 %v5552, 0.0
        %v5585 = vmax.f32 %v5553, 0.0
        %v5586 = vmax.f32 %v5554, 0.0
        %v5587 = vmax.f32 %v5555, 0.0
        %v5588 = vmax.f32 %v5556, 0.0
        %v5589 = vmax.f32 %v5557, 0.0
        %v5590 = vmax.f32 %v5558, 0.0
        %v5591 = vmax.f32 %v5559, 0.0
        %v5592 = vmax.f32 %v5560, 0.0
        %v5593 = vmax.f32 %v5561, 0.0
        %v5594 = vmax.f32 %v5562, 0.0
        %v5595 = vmax.f32 %v5563, 0.0
        %v5596 = vmax.f32 %v5564, 0.0
        %v5597 = vmax.f32 %v5565, 0.0
        %v5598 = vmax.f32 %v5566, 0.0
        %v5599 = vmax.f32 %v5567, 0.0
        %v5600 = vmax.f32 %v5568, 0.0
        %v5601 = vmax.f32 %v5569, 0.0
        %v5602 = vmax.f32 %v5570, 0.0
        %v5603 = vmax.f32 %v5571, 0.0
        %v5604 = vmax.f32 %v5572, 0.0
        %v5605 = vmax.f32 %v5573, 0.0
        %v5606 = vmax.f32 %v5574, 0.0
        %v5607 = vmax.f32 %v5575, 0.0
        %v5608 = vmax.f32 %v5576, 0.0
        %v5609 = vmax.f32 %v5577, 0.0
        %v5610 = vmax.f32 %v5578, 0.0
        %v5611 = vpack.c.bf16 %v5580, %v5579
        %v5612 = vpack.c.bf16 %v5582, %v5581
        %v5613 = vpack.c.bf16 %v5584, %v5583
        %v5614 = vpack.c.bf16 %v5586, %v5585
        %v5615 = vpack.c.bf16 %v5588, %v5587
        %v5616 = vpack.c.bf16 %v5590, %v5589
        %v5617 = vpack.c.bf16 %v5592, %v5591
        %v5618 = vpack.c.bf16 %v5594, %v5593
        %v5619 = vpack.c.bf16 %v5596, %v5595
        %v5620 = vpack.c.bf16 %v5598, %v5597
        %v5621 = vpack.c.bf16 %v5600, %v5599
        %v5622 = vpack.c.bf16 %v5602, %v5601
        %v5623 = vpack.c.bf16 %v5604, %v5603
        %v5624 = vpack.c.bf16 %v5606, %v5605
        %v5625 = vpack.c.bf16 %v5608, %v5607
        %v5626 = vpack.c.bf16 %v5610, %v5609
        %v5643 = vunpack.c.l.b16 %v5611
        %v5644 = vunpack.c.h.b16 %v5611
        %v5645 = vunpack.c.l.b16 %v5612
        %v5646 = vunpack.c.h.b16 %v5612
        %v5647 = vunpack.c.l.b16 %v5613
        %v5648 = vunpack.c.h.b16 %v5613
        %v5649 = vunpack.c.l.b16 %v5614
        %v5650 = vunpack.c.h.b16 %v5614
        %v5651 = vunpack.c.l.b16 %v5615
        %v5652 = vunpack.c.h.b16 %v5615
        %v5653 = vunpack.c.l.b16 %v5616
        %v5654 = vunpack.c.h.b16 %v5616
        %v5655 = vunpack.c.l.b16 %v5617
        %v5656 = vunpack.c.h.b16 %v5617
        %v5657 = vunpack.c.l.b16 %v5618
        %v5658 = vunpack.c.h.b16 %v5618
        %v5659 = vunpack.c.l.b16 %v5619
        %v5660 = vunpack.c.h.b16 %v5619
        %v5661 = vunpack.c.l.b16 %v5620
        %v5662 = vunpack.c.h.b16 %v5620
        %v5663 = vunpack.c.l.b16 %v5621
        %v5664 = vunpack.c.h.b16 %v5621
        %v5665 = vunpack.c.l.b16 %v5622
        %v5666 = vunpack.c.h.b16 %v5622
        %v5667 = vunpack.c.l.b16 %v5623
        %v5668 = vunpack.c.h.b16 %v5623
        %v5669 = vunpack.c.l.b16 %v5624
        %v5670 = vunpack.c.h.b16 %v5624
        %v5671 = vunpack.c.l.b16 %v5625
        %v5672 = vunpack.c.h.b16 %v5625
        %v5673 = vunpack.c.l.b16 %v5626
        %v5674 = vunpack.c.h.b16 %v5626
        %v5675 = vpack.c.b16 %v5643, %v5643
        %v5676 = vpack.c.b16 %v5644, %v5644
        %v5677 = vpack.c.b16 %v5645, %v5645
        %v5678 = vpack.c.b16 %v5646, %v5646
        %v5679 = vpack.c.b16 %v5647, %v5647
        %v5680 = vpack.c.b16 %v5648, %v5648
        %v5681 = vpack.c.b16 %v5649, %v5649
        %v5682 = vpack.c.b16 %v5650, %v5650
        %v5683 = vpack.c.b16 %v5651, %v5651
        %v5684 = vpack.c.b16 %v5652, %v5652
        %v5685 = vpack.c.b16 %v5653, %v5653
        %v5686 = vpack.c.b16 %v5654, %v5654
        %v5687 = vpack.c.b16 %v5655, %v5655
        %v5688 = vpack.c.b16 %v5656, %v5656
        %v5689 = vpack.c.b16 %v5657, %v5657
        %v5690 = vpack.c.b16 %v5658, %v5658
        %v5691 = vpack.c.b16 %v5659, %v5659
        %v5692 = vpack.c.b16 %v5660, %v5660
        %v5693 = vpack.c.b16 %v5661, %v5661
        %v5694 = vpack.c.b16 %v5662, %v5662
        %v5695 = vpack.c.b16 %v5663, %v5663
        %v5696 = vpack.c.b16 %v5664, %v5664
        %v5697 = vpack.c.b16 %v5665, %v5665
        %v5698 = vpack.c.b16 %v5666, %v5666
        %v5699 = vpack.c.b16 %v5667, %v5667
        %v5700 = vpack.c.b16 %v5668, %v5668
        %v5701 = vpack.c.b16 %v5669, %v5669
        %v5702 = vpack.c.b16 %v5670, %v5670
        %v5703 = vpack.c.b16 %v5671, %v5671
        %v5704 = vpack.c.b16 %v5672, %v5672
        %v5705 = vpack.c.b16 %v5673, %v5673
        %v5706 = vpack.c.b16 %v5674, %v5674
        %5739 = vst [vmem:[%s203] sm:$0xf] %v5675
        %5740 = vst [vmem:[%s203 + $0x4] sm:$0xf] %v5676
        %5741 = vst [vmem:[%s203 + $0x8] sm:$0xf] %v5677
        %5742 = vst [vmem:[%s203 + $0xc] sm:$0xf] %v5678
        %5743 = vst [vmem:[%s203 + $0x10] sm:$0xf] %v5679
        %5744 = vst [vmem:[%s203 + $0x14] sm:$0xf] %v5680
        %5745 = vst [vmem:[%s203 + $0x18] sm:$0xf] %v5681
        %5746 = vst [vmem:[%s203 + $0x1c] sm:$0xf] %v5682
        %5747 = vst [vmem:[%s203 + $0x20] sm:$0xf] %v5683
        %5748 = vst [vmem:[%s203 + $0x24] sm:$0xf] %v5684
        %5749 = vst [vmem:[%s203 + $0x28] sm:$0xf] %v5685
        %5750 = vst [vmem:[%s203 + $0x2c] sm:$0xf] %v5686
        %5751 = vst [vmem:[%s203 + $0x30] sm:$0xf] %v5687
        %5752 = vst [vmem:[%s203 + $0x34] sm:$0xf] %v5688
        %5753 = vst [vmem:[%s203 + $0x38] sm:$0xf] %v5689
        %5754 = vst [vmem:[%s203 + $0x3c] sm:$0xf] %v5690
        %5755 = vst [vmem:[%s203 + $0x40] sm:$0xf] %v5691
        %5756 = vst [vmem:[%s203 + $0x44] sm:$0xf] %v5692
        %5757 = vst [vmem:[%s203 + $0x48] sm:$0xf] %v5693
        %5758 = vst [vmem:[%s203 + $0x4c] sm:$0xf] %v5694
        %5759 = vst [vmem:[%s203 + $0x50] sm:$0xf] %v5695
        %5760 = vst [vmem:[%s203 + $0x54] sm:$0xf] %v5696
        %5761 = vst [vmem:[%s203 + $0x58] sm:$0xf] %v5697
        %5762 = vst [vmem:[%s203 + $0x5c] sm:$0xf] %v5698
        %5763 = vst [vmem:[%s203 + $0x60] sm:$0xf] %v5699
        %5764 = vst [vmem:[%s203 + $0x64] sm:$0xf] %v5700
        %5765 = vst [vmem:[%s203 + $0x68] sm:$0xf] %v5701
        %5766 = vst [vmem:[%s203 + $0x6c] sm:$0xf] %v5702
        %5767 = vst [vmem:[%s203 + $0x70] sm:$0xf] %v5703
        %5768 = vst [vmem:[%s203 + $0x74] sm:$0xf] %v5704
        %5769 = vst [vmem:[%s203 + $0x78] sm:$0xf] %v5705
        %5770 = vst [vmem:[%s203 + $0x7c] sm:$0xf] %v5706
        %s5771 = sand.u32 %s97, 1
        %s5772 = scalar_lea.sflag [#allocation5], %s5771
        %s5773 = sand.u32 %s97, 1
        %s5774 = smul.addr %s5773, 128
        %s5775 = scalar_lea.vmem [#allocation8], %s5774
        // Predicated region
        $region41: #{tpu_custom_call.1} parent=31 // pred_check
          %p5776 = pneg %p107
        $region42: #{tpu_custom_call.1} parent=31 // pred_check_branch
          %5778 = sbr.rel (%p5776) target = $region44
        $region43: #{tpu_custom_call.1} parent=31 // pred_region
          %s5780 = ssub.s32 2048, 2048
          %5781 = vsyncadd %s5772, %s5780
          %s5782 = smul.addr %s21, 32
          %s5783 = smul.addr %s5782, 64
          %s5784 = scalar_lea.hbm %s3, %s5783
          %s5785 = sshll.u32 %s5775, 4
          %s5786 = int_to_ptr.vmem [resolvable:$true] %s5785
          %5791 = dma.vmem_to_hbm [thread:$0]  %s5786, 2048, %s5784, %s5772, 64, 64, 4
        $region44: #{tpu_custom_call.1} parent=31 // pred_fallthru
          _
      $region32: #{tpu_custom_call.1} parent=5 // pred_fallthru
        _
      %p5792 = scmp.le.s32.totalorder 2, %s16
      // Predicated region
      $region45: #{tpu_custom_call.1} parent=5 // pred_check
        %p5793 = pneg %p5792
      $region46: #{tpu_custom_call.1} parent=5 // pred_check_branch
        %5795 = sbr.rel (%p5793) target = $region48
      $region47: #{tpu_custom_call.1} parent=5 // pred_region
        %s5796 = ssub.s32 %s16, 2
        // Predicated region
        $region49: #{tpu_custom_call.1} parent=47 // pred_check
          %p5797 = pneg %p113
        $region50: #{tpu_custom_call.1} parent=47 // pred_check_branch
          %5799 = sbr.rel (%p5797) target = $region52
        $region51: #{tpu_custom_call.1} parent=47 // pred_region
          %s5800 = sand.u32 %s98, 1
          %s5801 = scalar_lea.sflag [#allocation5], %s5800
          %s5802 = sand.u32 %s98, 1
          %s5803 = smul.addr %s5802, 128
          %s5804 = scalar_lea.vmem [#allocation8], %s5803
          %5805 = dma.done %s5801, 2048
        $region52: #{tpu_custom_call.1} parent=47 // pred_fallthru
          _
      $region48: #{tpu_custom_call.1} parent=5 // pred_fallthru
        _
    $region6: #{tpu_custom_call.1} parent=1 // loop_footer
      %s20 = sadd.s32 1, %s16
    $region7: #{tpu_custom_call.1} parent=1 // loop_footer_branch
      %15 = sbr.rel target = $region3
    $region8: #{tpu_custom_call.1} parent=1 // loop_exit
      _
    %5806 = vsyncpa [#allocation4], 1
    %s5807 = scalar_lea.sflag [#allocation4], 1
    %5808 = vsyncpa %s5807, 1
    %5809 = vsyncpa [#allocation7], 1
    %5810 = vsyncpa [#allocation5], 1
    %s5811 = scalar_lea.sflag [#allocation5], 1
    %5812 = vsyncpa %s5811, 1

</llo_original>
